<compile_context>
chip_gen: v7x
topology: tpu7x:2x2x1
jax: 0.10.0
libtpu: 0.0.40
codegen_flags: <defaults>
</compile_context>

<pallas_src>
import jax
import jax.numpy as jnp
from jax import lax
from jax.experimental import pallas as pl
from jax.experimental.pallas import tpu as pltpu

_WINDOW = 16  # token window used by cls / last_token gathers (>= bf16 sublane tile)


def _round_up(x: int, m: int) -> int:
    return x + (-x) % m


# --------------------------- mean pooling + L2 norm ---------------------------

def _mean_pool_kernel(x_ref, m_ref, o_ref, acc_ref, cnt_ref):
    s = pl.program_id(1)

    @pl.when(s == 0)
    def _():
        acc_ref[...] = jnp.zeros_like(acc_ref)
        cnt_ref[...] = jnp.zeros_like(cnt_ref)

    x = x_ref[...].astype(jnp.float32)          # (tile_n, tile_s, H)
    m = m_ref[...].astype(jnp.float32)          # (tile_n, tile_s)
    acc_ref[...] += jnp.sum(x * m[:, :, None], axis=1)
    cnt_ref[...] += jnp.sum(m, axis=1, keepdims=True)

    @pl.when(s == pl.num_programs(1) - 1)
    def _():
        # per-row scale; any reciprocal error cancels under the L2 normalization
        inv_cnt = pl.reciprocal(jnp.maximum(cnt_ref[...], 1e-9), approx=True)
        mean = acc_ref[...] * inv_cnt                                  # (tile_n, H)
        sq = jnp.sum(mean * mean, axis=-1, keepdims=True)
        inv_norm = lax.rsqrt(jnp.maximum(sq, 1e-24))
        o_ref[...] = (mean * inv_norm).astype(o_ref.dtype)


def mean_pool_normalize(hidden, mask, *, tile_n=16):
    N, S, H = hidden.shape
    out_dtype = hidden.dtype

    Hp = _round_up(H, 128)
    Np = _round_up(N, tile_n)
    Sp = _round_up(S, 128)

    hidden_p = jnp.pad(hidden, ((0, Np - N), (0, Sp - S), (0, Hp - H)))
    mask_p = jnp.pad(mask.astype(jnp.float32), ((0, Np - N), (0, Sp - S)))

    # Largest S tile (multiple of 128) whose hidden block stays well under the scoped
    # VMEM budget with double buffering (re-derived automatically for any chip).
    itemsize = jnp.dtype(hidden.dtype).itemsize
    tile_s = 128
    for cand in (1024, 512, 256, 128):
        if Sp % cand == 0 and tile_n * cand * Hp * itemsize <= 4 * 1024 * 1024:
            tile_s = cand
            break

    grid = (Np // tile_n, Sp // tile_s)

    out = pl.pallas_call(
        _mean_pool_kernel,
        out_shape=jax.ShapeDtypeStruct((Np, Hp), out_dtype),
        grid=grid,
        in_specs=[
            pl.BlockSpec((tile_n, tile_s, Hp), lambda i, s: (i, s, 0)),
            pl.BlockSpec((tile_n, tile_s), lambda i, s: (i, s)),
        ],
        out_specs=pl.BlockSpec((tile_n, Hp), lambda i, s: (i, 0)),
        scratch_shapes=[
            pltpu.VMEM((tile_n, Hp), jnp.float32),   # masked sum accumulator
            pltpu.VMEM((tile_n, 1), jnp.float32),    # valid-token count
        ],
        compiler_params=pltpu.CompilerParams(
            dimension_semantics=("parallel", "arbitrary")),
    )(hidden_p, mask_p)
    return out[:N, :H]


# ----------------------------- cls pooling + L2 norm ---------------------------

def _cls_pool_kernel(x_ref, o_ref):
    x = x_ref[...][:, 0, :].astype(jnp.float32)       # token 0 of the window
    sq = jnp.sum(x * x, axis=-1, keepdims=True)
    o_ref[...] = (x * lax.rsqrt(jnp.maximum(sq, 1e-24))).astype(o_ref.dtype)


def cls_pool_normalize(hidden, *, tile_n=16):
    N, S, H = hidden.shape
    out_dtype = hidden.dtype

    Hp = _round_up(H, 128)
    Np = _round_up(N, tile_n)
    Sp = max(_WINDOW, _round_up(S, _WINDOW))

    hidden_p = jnp.pad(hidden, ((0, Np - N), (0, Sp - S), (0, Hp - H)))

    out = pl.pallas_call(
        _cls_pool_kernel,
        out_shape=jax.ShapeDtypeStruct((Np, Hp), out_dtype),
        grid=(Np // tile_n,),
        # Only a 16-token window at token 0 is DMA'd -> S/16 x less HBM traffic.
        in_specs=[pl.BlockSpec((tile_n, _WINDOW, Hp), lambda i: (i, 0, 0))],
        out_specs=pl.BlockSpec((tile_n, Hp), lambda i: (i, 0)),
        compiler_params=pltpu.CompilerParams(dimension_semantics=("parallel",)),
    )(hidden_p)
    return out[:N, :H]


# -------------------------- last-token pooling + L2 norm -----------------------

def _last_token_kernel(idx_ref, x_ref, o_ref):
    i = pl.program_id(0)
    off = idx_ref[i] % _WINDOW
    x = x_ref[...].astype(jnp.float32)                       # (1, WINDOW, H)
    sel = lax.broadcasted_iota(jnp.int32, x.shape, 1) == off
    v = jnp.sum(jnp.where(sel, x, 0.0), axis=1, keepdims=True)   # (1, 1, H)
    sq = jnp.sum(v * v, axis=-1, keepdims=True)
    o_ref[...] = (v * lax.rsqrt(jnp.maximum(sq, 1e-24))).astype(o_ref.dtype)


def last_token_pool_normalize(hidden, mask):
    N, S, H = hidden.shape
    out_dtype = hidden.dtype

    Hp = _round_up(H, 128)
    Sp = max(_WINDOW, _round_up(S, _WINDOW))

    hidden_p = jnp.pad(hidden, ((0, 0), (0, Sp - S), (0, Hp - H)))

    total = jnp.sum(mask.astype(jnp.int32), axis=-1)
    # matches torch semantics: index (sum-1); a fully-masked row wraps to S-1
    last_idx = jnp.where(total > 0, total - 1, S - 1).astype(jnp.int32)

    grid_spec = pltpu.PrefetchScalarGridSpec(
        num_scalar_prefetch=1,
        grid=(N,),
        # Data-dependent window: only the 16-token block containing the last valid
        # token of each row is DMA'd (scalar-prefetched index in the index_map).
        in_specs=[pl.BlockSpec((1, _WINDOW, Hp),
                               lambda i, idx_ref: (i, idx_ref[i] // _WINDOW, 0))],
        out_specs=pl.BlockSpec((1, 1, Hp), lambda i, idx_ref: (i, 0, 0)),
    )

    out = pl.pallas_call(
        _last_token_kernel,
        out_shape=jax.ShapeDtypeStruct((N, 1, Hp), out_dtype),
        grid_spec=grid_spec,
        compiler_params=pltpu.CompilerParams(dimension_semantics=("arbitrary",)),
    )(last_idx, hidden_p)
    return out[:, 0, :H]


# ----------------------------- Encoder-like wrapper ----------------------------

class PallasEncoderHead:
    """Pooling + L2-normalize head of `Encoder`.

    Unlike the torch module there is no host-side chunking of the batch into groups
    of 16: one pallas_call covers the whole batch and the grid tiles N.
    """

    def __init__(self, pooling: str = "mean"):
        self.pooling = pooling

    def __call__(self, last_hidden_state, attention_mask):
        if self.pooling == "mean":
            return mean_pool_normalize(last_hidden_state, attention_mask)
        if self.pooling == "cls":
            return cls_pool_normalize(last_hidden_state)
        if self.pooling == "last_token":
            return last_token_pool_normalize(last_hidden_state, attention_mask)
        raise ValueError(f"unknown pooling: {self.pooling}")


# ------------------------------------ test -------------------------------------

def _reference(hidden, mask, pooling):
    h = hidden.astype(jnp.float32)
    m = mask.astype(jnp.float32)
    if pooling == "mean":
        emb = jnp.sum(h * m[:, :, None], axis=1) / jnp.maximum(
            jnp.sum(m, axis=1, keepdims=True), 1e-9)
    elif pooling == "cls":
        emb = h[:, 0, :]
    else:  # last_token
        total = jnp.sum(mask.astype(jnp.int32), axis=-1)
        idx = jnp.where(total > 0, total - 1, h.shape[1] - 1)
        emb = h[jnp.arange(h.shape[0]), idx]
    norm = jnp.sqrt(jnp.sum(emb * emb, axis=-1, keepdims=True))
    return emb / jnp.maximum(norm, 1e-12)


if __name__ == "__main__":
    key = jax.random.PRNGKey(0)
    k_h, k_l = jax.random.split(key)

    N, S, H = 16, 256, 256
    # synthetic stand-in for encoder.last_hidden_state (bf16 in HBM, f32 accumulation)
    last_hidden_state = jax.random.normal(k_h, (N, S, H), dtype=jnp.float32).astype(
        jnp.bfloat16)
    lengths = jax.random.randint(k_l, (N,), 1, S + 1)
    attention_mask = (jnp.arange(S)[None, :] < lengths[:, None]).astype(jnp.int32)

    for pooling in ("mean", "cls", "last_token"):
        head = PallasEncoderHead(pooling)
        out = jax.block_until_ready(head(last_hidden_state, attention_mask))
        ref = _reference(last_hidden_state, attention_mask, pooling)
        err = float(jnp.max(jnp.abs(out.astype(jnp.float32) - ref)))
        assert err < 2e-2, f"{pooling}: max abs err {err}"

    print("KERNEL_OK")
</pallas_src>

<mosaic_0001>
module attributes {stable_mosaic.version = 11 : i64} {
  func.func @_mean_pool_kernel(%arg0: i32, %arg1: i32, %arg2: memref<16x256x256xbf16, #tpu.memory_space<vmem>>, %arg3: memref<16x256xf32, #tpu.memory_space<vmem>>, %arg4: memref<16x256xbf16, #tpu.memory_space<vmem>>, %arg5: memref<16x256xf32, #tpu.memory_space<vmem>>, %arg6: memref<16x1xf32, #tpu.memory_space<vmem>>) attributes {dimension_semantics = [#tpu.dimension_semantics<parallel>, #tpu.dimension_semantics<arbitrary>], iteration_bounds = array<i64: 1, 1>, scalar_prefetch = 0 : i64, scratch_operands = 2 : i64, tpu.core_type = #tpu.core_type<tc>, window_params = [{transform_indices = @transform_0, window_bounds = array<i64: 16, 256, 256>}, {transform_indices = @transform_1, window_bounds = array<i64: 16, 256>}, {transform_indices = @transform_2, window_bounds = array<i64: 16, 256>}]} {
    %c0_i32 = arith.constant 0 : i32
    %0 = arith.cmpi eq, %arg1, %c0_i32 : i32
    %1 = arith.extui %0 : i1 to i32
    %c0_i32_0 = arith.constant 0 : i32
    %2 = arith.cmpi ne, %1, %c0_i32_0 : i32
    scf.if %2 {
      %cst_16 = arith.constant 0.000000e+00 : f32
      %21 = vector.broadcast %cst_16 : f32 to vector<16x256xf32>
      %c0_17 = arith.constant 0 : index
      %c0_18 = arith.constant 0 : index
      %22 = vector.load %arg5[%c0_17, %c0_18] : memref<16x256xf32, #tpu.memory_space<vmem>>, vector<16x256xf32>
      tpu.vector_store %arg5[%c0_17, %c0_18], %21 {strides = array<i32>} : memref<16x256xf32, #tpu.memory_space<vmem>>, vector<16x256xf32>,
      %cst_19 = arith.constant 0.000000e+00 : f32
      %23 = vector.broadcast %cst_19 : f32 to vector<16x1xf32>
      %c0_20 = arith.constant 0 : index
      %c0_21 = arith.constant 0 : index
      %24 = vector.load %arg6[%c0_20, %c0_21] : memref<16x1xf32, #tpu.memory_space<vmem>>, vector<16x1xf32>
      tpu.vector_store %arg6[%c0_20, %c0_21], %23 {strides = array<i32>} : memref<16x1xf32, #tpu.memory_space<vmem>>, vector<16x1xf32>,
    } else {
    }
    %c0 = arith.constant 0 : index
    %c0_1 = arith.constant 0 : index
    %c0_2 = arith.constant 0 : index
    %3 = vector.load %arg2[%c0, %c0_1, %c0_2] : memref<16x256x256xbf16, #tpu.memory_space<vmem>>, vector<16x256x256xbf16>
    %4 = arith.extf %3 : vector<16x256x256xbf16> to vector<16x256x256xf32>
    %c0_3 = arith.constant 0 : index
    %c0_4 = arith.constant 0 : index
    %5 = vector.load %arg3[%c0_3, %c0_4] : memref<16x256xf32, #tpu.memory_space<vmem>>, vector<16x256xf32>
    %c0_5 = arith.constant 0 : index
    %c0_6 = arith.constant 0 : index
    %6 = vector.load %arg5[%c0_5, %c0_6] : memref<16x256xf32, #tpu.memory_space<vmem>>, vector<16x256xf32>
    %7 = vector.shape_cast %5 : vector<16x256xf32> to vector<16x256x1xf32>
    %8 = vector.broadcast %7 : vector<16x256x1xf32> to vector<16x256x256xf32>
    %9 = arith.mulf %4, %8 : vector<16x256x256xf32>
    %cst = arith.constant dense<0.000000e+00> : vector<16x256xf32>
    %10 = vector.multi_reduction <add>, %9, %cst [1] : vector<16x256x256xf32> to vector<16x256xf32>
    %11 = arith.addf %6, %10 : vector<16x256xf32>
    %c0_7 = arith.constant 0 : index
    %c0_8 = arith.constant 0 : index
    %12 = vector.load %arg5[%c0_7, %c0_8] : memref<16x256xf32, #tpu.memory_space<vmem>>, vector<16x256xf32>
    tpu.vector_store %arg5[%c0_7, %c0_8], %11 {strides = array<i32>} : memref<16x256xf32, #tpu.memory_space<vmem>>, vector<16x256xf32>,
    %c0_9 = arith.constant 0 : index
    %c0_10 = arith.constant 0 : index
    %13 = vector.load %arg6[%c0_9, %c0_10] : memref<16x1xf32, #tpu.memory_space<vmem>>, vector<16x1xf32>
    %cst_11 = arith.constant dense<0.000000e+00> : vector<16xf32>
    %14 = vector.multi_reduction <add>, %5, %cst_11 [1] : vector<16x256xf32> to vector<16xf32>
    %15 = vector.shape_cast %14 : vector<16xf32> to vector<16x1xf32>
    %16 = arith.addf %13, %15 : vector<16x1xf32>
    %c0_12 = arith.constant 0 : index
    %c0_13 = arith.constant 0 : index
    %17 = vector.load %arg6[%c0_12, %c0_13] : memref<16x1xf32, #tpu.memory_space<vmem>>, vector<16x1xf32>
    tpu.vector_store %arg6[%c0_12, %c0_13], %16 {strides = array<i32>} : memref<16x1xf32, #tpu.memory_space<vmem>>, vector<16x1xf32>,
    %c0_i32_14 = arith.constant 0 : i32
    %18 = arith.cmpi eq, %arg1, %c0_i32_14 : i32
    %19 = arith.extui %18 : i1 to i32
    %c0_i32_15 = arith.constant 0 : i32
    %20 = arith.cmpi ne, %19, %c0_i32_15 : i32
    scf.if %20 {
      %c0_16 = arith.constant 0 : index
      %c0_17 = arith.constant 0 : index
      %21 = vector.load %arg6[%c0_16, %c0_17] : memref<16x1xf32, #tpu.memory_space<vmem>>, vector<16x1xf32>
      %cst_18 = arith.constant 9.99999971E-10 : f32
      %22 = vector.broadcast %cst_18 : f32 to vector<16x1xf32>
      %23 = arith.maximumf %21, %22 : vector<16x1xf32>
      %24 = tpu.reciprocal %23 {approx = true} : vector<16x1xf32> -> vector<16x1xf32>
      %c0_19 = arith.constant 0 : index
      %c0_20 = arith.constant 0 : index
      %25 = vector.load %arg5[%c0_19, %c0_20] : memref<16x256xf32, #tpu.memory_space<vmem>>, vector<16x256xf32>
      %26 = vector.broadcast %24 : vector<16x1xf32> to vector<16x256xf32>
      %27 = arith.mulf %25, %26 : vector<16x256xf32>
      %28 = arith.mulf %27, %27 : vector<16x256xf32>
      %cst_21 = arith.constant dense<0.000000e+00> : vector<16xf32>
      %29 = vector.multi_reduction <add>, %28, %cst_21 [1] : vector<16x256xf32> to vector<16xf32>
      %30 = vector.shape_cast %29 : vector<16xf32> to vector<16x1xf32>
      %cst_22 = arith.constant 1.000000e-24 : f32
      %31 = vector.broadcast %cst_22 : f32 to vector<16x1xf32>
      %32 = arith.maximumf %30, %31 : vector<16x1xf32>
      %33 = math.rsqrt %32 : vector<16x1xf32>
      %34 = vector.broadcast %33 : vector<16x1xf32> to vector<16x256xf32>
      %35 = arith.mulf %27, %34 : vector<16x256xf32>
      %36 = arith.truncf %35 : vector<16x256xf32> to vector<16x256xbf16>
      %c0_23 = arith.constant 0 : index
      %c0_24 = arith.constant 0 : index
      %37 = vector.load %arg4[%c0_23, %c0_24] : memref<16x256xbf16, #tpu.memory_space<vmem>>, vector<16x256xbf16>
      tpu.vector_store %arg4[%c0_23, %c0_24], %36 {strides = array<i32>} : memref<16x256xbf16, #tpu.memory_space<vmem>>, vector<16x256xbf16>,
    } else {
    }
    return
  }
  func.func @transform_0(%arg0: i32, %arg1: i32) -> (i32, i32, i32) {
    %c0_i32 = arith.constant 0 : i32
    %c0_i32_0 = arith.constant 0 : i32
    return %arg0, %arg1, %c0_i32 : i32, i32, i32
  }
  func.func @transform_1(%arg0: i32, %arg1: i32) -> (i32, i32) {
    %c0_i32 = arith.constant 0 : i32
    return %arg0, %arg1 : i32, i32
  }
  func.func @transform_2(%arg0: i32, %arg1: i32) -> (i32, i32) {
    %c0_i32 = arith.constant 0 : i32
    %c0_i32_0 = arith.constant 0 : i32
    return %arg0, %c0_i32 : i32, i32
  }
}

</mosaic_0001>

<llo_original>
// kernel: tpu_custom_call.1
$region0: #{tpu_custom_call.1}
  #allocation0 [shape = 'u32[]', space=smem, size = 0x4, offset = 0x4, fixed_abs, tag = 'smem constant byte address 0x4 - core index']
  #allocation1 [shape = 'u32[144,128]{1,0:T(1,128)}', space=vmem, size = 0x12000, scoped, tag = 'internal scratch']
  #allocation2 [shape = 'f32[16,256]{1,0:T(8,128)}', space=vmem, size = 0x4000, scoped, tag = 'scratch operand']
  #allocation3 [shape = 'f32[16,1]{1,0:T(8,128)}', space=vmem, size = 0x2000, scoped, tag = 'scratch operand']
  %s0 = inlined_call_operand.hbm [shape: bf16[16,256,256], index: 0, kind: input, shape index: {}]
  %s1 = inlined_call_operand.hbm [shape: f32[16,256], index: 1, kind: input, shape index: {}]
  %s2 = inlined_call_operand.hbm [shape: bf16[16,256], index: 2, kind: output, shape index: {}]
  %s3 = sld [smem:[#allocation0]]
  $region34: #{tpu_custom_call.1} parent=0
    _
  %s5 = ssub.s32 1, %s3
  %s6 = scalar_select 0, %s5, %s3
  $region1: #{tpu_custom_call.1} parent=0
    #allocation4 [shape = 'u8[2097152]{0}', space=vmem, size = 0x200000, scoped, tag = 'input window, operand 0, single buffered']
    #allocation5 [shape = 's32[1]{0}', space=sflag, size = 0x4, scoped, tag = 'scoped memory for tpu_custom_call.1']
    #allocation6 [shape = 's32[1]{0}', space=sflag, size = 0x4, scoped, tag = 'scoped memory for tpu_custom_call.1']
    #allocation7 [shape = 'u8[16384]{0}', space=vmem, size = 0x4000, scoped, tag = 'input window, operand 1, single buffered']
    #allocation8 [shape = 's32[1]{0}', space=sflag, size = 0x4, scoped, tag = 'scoped memory for tpu_custom_call.1']
    #allocation9 [shape = 'u8[8192]{0}', space=vmem, size = 0x2000, scoped, tag = 'output window, operand 0, single buffered']
    %7 = vsyncpa [#allocation5], 0
    %8 = vsyncpa [#allocation8], 0
    %9 = vsyncpa [#allocation6], 0
    // Predicated region
    $region2: #{tpu_custom_call.1} parent=1 // pred_check
      _
    $region3: #{tpu_custom_call.1} parent=1 // pred_check_branch
      %11 = sbr.rel (0) target = $region5
    $region4: #{tpu_custom_call.1} parent=1 // pred_region
      %s13 = ssub.s32 65536, 65536
      %14 = vsyncadd [#allocation5], %s13
      %s15 = sshll.u32 [#allocation4], 4
      %s16 = int_to_ptr.vmem [resolvable:$true] %s15
      %21 = dma.hbm_to_vmem [thread:$0]  %s0, 65536, %s16, [#allocation5], 128, 128, 8
    $region5: #{tpu_custom_call.1} parent=1 // pred_fallthru
      _
    // Predicated region
    $region6: #{tpu_custom_call.1} parent=1 // pred_check
      _
    $region7: #{tpu_custom_call.1} parent=1 // pred_check_branch
      %23 = sbr.rel (0) target = $region9
    $region8: #{tpu_custom_call.1} parent=1 // pred_region
      %s25 = ssub.s32 512, 512
      %26 = vsyncadd [#allocation8], %s25
      %s27 = sshll.u32 [#allocation7], 4
      %s28 = int_to_ptr.vmem [resolvable:$true] %s27
      %33 = dma.hbm_to_vmem [thread:$0]  %s1, 512, %s28, [#allocation8], 256, 256, 16
    $region9: #{tpu_custom_call.1} parent=1 // pred_fallthru
      _
    // Predicated region
    $region10: #{tpu_custom_call.1} parent=1 // pred_check
      _
    $region11: #{tpu_custom_call.1} parent=1 // pred_check_branch
      %35 = sbr.rel (0) target = $region13
    $region12: #{tpu_custom_call.1} parent=1 // pred_region
      %36 = dma.done [#allocation5], 65536
    $region13: #{tpu_custom_call.1} parent=1 // pred_fallthru
      _
    // Predicated region
    $region14: #{tpu_custom_call.1} parent=1 // pred_check
      _
    $region15: #{tpu_custom_call.1} parent=1 // pred_check_branch
      %38 = sbr.rel (0) target = $region17
    $region16: #{tpu_custom_call.1} parent=1 // pred_region
      %39 = dma.done [#allocation8], 512
    $region17: #{tpu_custom_call.1} parent=1 // pred_fallthru
      _
    %p40 = scmp.eq.s32.totalorder 0, 0
    // Predicated region
    $region18: #{tpu_custom_call.1} parent=1 // pred_check
      %p41 = pneg %p40
    $region19: #{tpu_custom_call.1} parent=1 // pred_check_branch
      %43 = sbr.rel (%p41) target = $region21
    $region20: #{tpu_custom_call.1} parent=1 // pred_region
      %44 = vst [vmem:[#allocation2] sm:$0xff] 0.0
      %45 = vst [vmem:[#allocation2 + $0x8] sm:$0xff] 0.0
      %46 = vst [vmem:[#allocation2 + $0x10] sm:$0xff] 0.0
      %47 = vst [vmem:[#allocation2 + $0x18] sm:$0xff] 0.0
      %vm48 = vcmask 7168
      %49 = vst.msk [vmem:[#allocation3] sm:$0xff] %vm48, 0.0
      %50 = vst.msk [vmem:[#allocation3 + $0x8] sm:$0xff] %vm48, 0.0
    $region21: #{tpu_custom_call.1} parent=1 // pred_fallthru
      _
    %v51 = vld [vmem:[#allocation4] sm:$0xff]
    %v52 = vld [vmem:[#allocation4 + $0x8] sm:$0xff]
    %v53 = vld [vmem:[#allocation4 + $0x10] sm:$0xff]
    %v54 = vld [vmem:[#allocation4 + $0x18] sm:$0xff]
    %v55 = vld [vmem:[#allocation4 + $0x20] sm:$0xff]
    %v56 = vld [vmem:[#allocation4 + $0x28] sm:$0xff]
    %v57 = vld [vmem:[#allocation4 + $0x30] sm:$0xff]
    %v58 = vld [vmem:[#allocation4 + $0x38] sm:$0xff]
    %v59 = vld [vmem:[#allocation4 + $0x40] sm:$0xff]
    %v60 = vld [vmem:[#allocation4 + $0x48] sm:$0xff]
    %v61 = vld [vmem:[#allocation4 + $0x50] sm:$0xff]
    %v62 = vld [vmem:[#allocation4 + $0x58] sm:$0xff]
    %v63 = vld [vmem:[#allocation4 + $0x60] sm:$0xff]
    %v64 = vld [vmem:[#allocation4 + $0x68] sm:$0xff]
    %v65 = vld [vmem:[#allocation4 + $0x70] sm:$0xff]
    %v66 = vld [vmem:[#allocation4 + $0x78] sm:$0xff]
    %v67 = vld [vmem:[#allocation4 + $0x80] sm:$0xff]
    %v68 = vld [vmem:[#allocation4 + $0x88] sm:$0xff]
    %v69 = vld [vmem:[#allocation4 + $0x90] sm:$0xff]
    %v70 = vld [vmem:[#allocation4 + $0x98] sm:$0xff]
    %v71 = vld [vmem:[#allocation4 + $0xa0] sm:$0xff]
    %v72 = vld [vmem:[#allocation4 + $0xa8] sm:$0xff]
    %v73 = vld [vmem:[#allocation4 + $0xb0] sm:$0xff]
    %v74 = vld [vmem:[#allocation4 + $0xb8] sm:$0xff]
    %v75 = vld [vmem:[#allocation4 + $0xc0] sm:$0xff]
    %v76 = vld [vmem:[#allocation4 + $0xc8] sm:$0xff]
    %v77 = vld [vmem:[#allocation4 + $0xd0] sm:$0xff]
    %v78 = vld [vmem:[#allocation4 + $0xd8] sm:$0xff]
    %v79 = vld [vmem:[#allocation4 + $0xe0] sm:$0xff]
    %v80 = vld [vmem:[#allocation4 + $0xe8] sm:$0xff]
    %v81 = vld [vmem:[#allocation4 + $0xf0] sm:$0xff]
    %v82 = vld [vmem:[#allocation4 + $0xf8] sm:$0xff]
    %v83 = vld [vmem:[#allocation4 + $0x100] sm:$0xff]
    %v84 = vld [vmem:[#allocation4 + $0x108] sm:$0xff]
    %v85 = vld [vmem:[#allocation4 + $0x110] sm:$0xff]
    %v86 = vld [vmem:[#allocation4 + $0x118] sm:$0xff]
    %v87 = vld [vmem:[#allocation4 + $0x120] sm:$0xff]
    %v88 = vld [vmem:[#allocation4 + $0x128] sm:$0xff]
    %v89 = vld [vmem:[#allocation4 + $0x130] sm:$0xff]
    %v90 = vld [vmem:[#allocation4 + $0x138] sm:$0xff]
    %v91 = vld [vmem:[#allocation4 + $0x140] sm:$0xff]
    %v92 = vld [vmem:[#allocation4 + $0x148] sm:$0xff]
    %v93 = vld [vmem:[#allocation4 + $0x150] sm:$0xff]
    %v94 = vld [vmem:[#allocation4 + $0x158] sm:$0xff]
    %v95 = vld [vmem:[#allocation4 + $0x160] sm:$0xff]
    %v96 = vld [vmem:[#allocation4 + $0x168] sm:$0xff]
    %v97 = vld [vmem:[#allocation4 + $0x170] sm:$0xff]
    %v98 = vld [vmem:[#allocation4 + $0x178] sm:$0xff]
    %v99 = vld [vmem:[#allocation4 + $0x180] sm:$0xff]
    %v100 = vld [vmem:[#allocation4 + $0x188] sm:$0xff]
    %v101 = vld [vmem:[#allocation4 + $0x190] sm:$0xff]
    %v102 = vld [vmem:[#allocation4 + $0x198] sm:$0xff]
    %v103 = vld [vmem:[#allocation4 + $0x1a0] sm:$0xff]
    %v104 = vld [vmem:[#allocation4 + $0x1a8] sm:$0xff]
    %v105 = vld [vmem:[#allocation4 + $0x1b0] sm:$0xff]
    %v106 = vld [vmem:[#allocation4 + $0x1b8] sm:$0xff]
    %v107 = vld [vmem:[#allocation4 + $0x1c0] sm:$0xff]
    %v108 = vld [vmem:[#allocation4 + $0x1c8] sm:$0xff]
    %v109 = vld [vmem:[#allocation4 + $0x1d0] sm:$0xff]
    %v110 = vld [vmem:[#allocation4 + $0x1d8] sm:$0xff]
    %v111 = vld [vmem:[#allocation4 + $0x1e0] sm:$0xff]
    %v112 = vld [vmem:[#allocation4 + $0x1e8] sm:$0xff]
    %v113 = vld [vmem:[#allocation4 + $0x1f0] sm:$0xff]
    %v114 = vld [vmem:[#allocation4 + $0x1f8] sm:$0xff]
    %v115 = vld [vmem:[#allocation4 + $0x200] sm:$0xff]
    %v116 = vld [vmem:[#allocation4 + $0x208] sm:$0xff]
    %v117 = vld [vmem:[#allocation4 + $0x210] sm:$0xff]
    %v118 = vld [vmem:[#allocation4 + $0x218] sm:$0xff]
    %v119 = vld [vmem:[#allocation4 + $0x220] sm:$0xff]
    %v120 = vld [vmem:[#allocation4 + $0x228] sm:$0xff]
    %v121 = vld [vmem:[#allocation4 + $0x230] sm:$0xff]
    %v122 = vld [vmem:[#allocation4 + $0x238] sm:$0xff]
    %v123 = vld [vmem:[#allocation4 + $0x240] sm:$0xff]
    %v124 = vld [vmem:[#allocation4 + $0x248] sm:$0xff]
    %v125 = vld [vmem:[#allocation4 + $0x250] sm:$0xff]
    %v126 = vld [vmem:[#allocation4 + $0x258] sm:$0xff]
    %v127 = vld [vmem:[#allocation4 + $0x260] sm:$0xff]
    %v128 = vld [vmem:[#allocation4 + $0x268] sm:$0xff]
    %v129 = vld [vmem:[#allocation4 + $0x270] sm:$0xff]
    %v130 = vld [vmem:[#allocation4 + $0x278] sm:$0xff]
    %v131 = vld [vmem:[#allocation4 + $0x280] sm:$0xff]
    %v132 = vld [vmem:[#allocation4 + $0x288] sm:$0xff]
    %v133 = vld [vmem:[#allocation4 + $0x290] sm:$0xff]
    %v134 = vld [vmem:[#allocation4 + $0x298] sm:$0xff]
    %v135 = vld [vmem:[#allocation4 + $0x2a0] sm:$0xff]
    %v136 = vld [vmem:[#allocation4 + $0x2a8] sm:$0xff]
    %v137 = vld [vmem:[#allocation4 + $0x2b0] sm:$0xff]
    %v138 = vld [vmem:[#allocation4 + $0x2b8] sm:$0xff]
    %v139 = vld [vmem:[#allocation4 + $0x2c0] sm:$0xff]
    %v140 = vld [vmem:[#allocation4 + $0x2c8] sm:$0xff]
    %v141 = vld [vmem:[#allocation4 + $0x2d0] sm:$0xff]
    %v142 = vld [vmem:[#allocation4 + $0x2d8] sm:$0xff]
    %v143 = vld [vmem:[#allocation4 + $0x2e0] sm:$0xff]
    %v144 = vld [vmem:[#allocation4 + $0x2e8] sm:$0xff]
    %v145 = vld [vmem:[#allocation4 + $0x2f0] sm:$0xff]
    %v146 = vld [vmem:[#allocation4 + $0x2f8] sm:$0xff]
    %v147 = vld [vmem:[#allocation4 + $0x300] sm:$0xff]
    %v148 = vld [vmem:[#allocation4 + $0x308] sm:$0xff]
    %v149 = vld [vmem:[#allocation4 + $0x310] sm:$0xff]
    %v150 = vld [vmem:[#allocation4 + $0x318] sm:$0xff]
    %v151 = vld [vmem:[#allocation4 + $0x320] sm:$0xff]
    %v152 = vld [vmem:[#allocation4 + $0x328] sm:$0xff]
    %v153 = vld [vmem:[#allocation4 + $0x330] sm:$0xff]
    %v154 = vld [vmem:[#allocation4 + $0x338] sm:$0xff]
    %v155 = vld [vmem:[#allocation4 + $0x340] sm:$0xff]
    %v156 = vld [vmem:[#allocation4 + $0x348] sm:$0xff]
    %v157 = vld [vmem:[#allocation4 + $0x350] sm:$0xff]
    %v158 = vld [vmem:[#allocation4 + $0x358] sm:$0xff]
    %v159 = vld [vmem:[#allocation4 + $0x360] sm:$0xff]
    %v160 = vld [vmem:[#allocation4 + $0x368] sm:$0xff]
    %v161 = vld [vmem:[#allocation4 + $0x370] sm:$0xff]
    %v162 = vld [vmem:[#allocation4 + $0x378] sm:$0xff]
    %v163 = vld [vmem:[#allocation4 + $0x380] sm:$0xff]
    %v164 = vld [vmem:[#allocation4 + $0x388] sm:$0xff]
    %v165 = vld [vmem:[#allocation4 + $0x390] sm:$0xff]
    %v166 = vld [vmem:[#allocation4 + $0x398] sm:$0xff]
    %v167 = vld [vmem:[#allocation4 + $0x3a0] sm:$0xff]
    %v168 = vld [vmem:[#allocation4 + $0x3a8] sm:$0xff]
    %v169 = vld [vmem:[#allocation4 + $0x3b0] sm:$0xff]
    %v170 = vld [vmem:[#allocation4 + $0x3b8] sm:$0xff]
    %v171 = vld [vmem:[#allocation4 + $0x3c0] sm:$0xff]
    %v172 = vld [vmem:[#allocation4 + $0x3c8] sm:$0xff]
    %v173 = vld [vmem:[#allocation4 + $0x3d0] sm:$0xff]
    %v174 = vld [vmem:[#allocation4 + $0x3d8] sm:$0xff]
    %v175 = vld [vmem:[#allocation4 + $0x3e0] sm:$0xff]
    %v176 = vld [vmem:[#allocation4 + $0x3e8] sm:$0xff]
    %v177 = vld [vmem:[#allocation4 + $0x3f0] sm:$0xff]
    %v178 = vld [vmem:[#allocation4 + $0x3f8] sm:$0xff]
    %v179 = vld [vmem:[#allocation4 + $0x400] sm:$0xff]
    %v180 = vld [vmem:[#allocation4 + $0x408] sm:$0xff]
    %v181 = vld [vmem:[#allocation4 + $0x410] sm:$0xff]
    %v182 = vld [vmem:[#allocation4 + $0x418] sm:$0xff]
    %v183 = vld [vmem:[#allocation4 + $0x420] sm:$0xff]
    %v184 = vld [vmem:[#allocation4 + $0x428] sm:$0xff]
    %v185 = vld [vmem:[#allocation4 + $0x430] sm:$0xff]
    %v186 = vld [vmem:[#allocation4 + $0x438] sm:$0xff]
    %v187 = vld [vmem:[#allocation4 + $0x440] sm:$0xff]
    %v188 = vld [vmem:[#allocation4 + $0x448] sm:$0xff]
    %v189 = vld [vmem:[#allocation4 + $0x450] sm:$0xff]
    %v190 = vld [vmem:[#allocation4 + $0x458] sm:$0xff]
    %v191 = vld [vmem:[#allocation4 + $0x460] sm:$0xff]
    %v192 = vld [vmem:[#allocation4 + $0x468] sm:$0xff]
    %v193 = vld [vmem:[#allocation4 + $0x470] sm:$0xff]
    %v194 = vld [vmem:[#allocation4 + $0x478] sm:$0xff]
    %v195 = vld [vmem:[#allocation4 + $0x480] sm:$0xff]
    %v196 = vld [vmem:[#allocation4 + $0x488] sm:$0xff]
    %v197 = vld [vmem:[#allocation4 + $0x490] sm:$0xff]
    %v198 = vld [vmem:[#allocation4 + $0x498] sm:$0xff]
    %v199 = vld [vmem:[#allocation4 + $0x4a0] sm:$0xff]
    %v200 = vld [vmem:[#allocation4 + $0x4a8] sm:$0xff]
    %v201 = vld [vmem:[#allocation4 + $0x4b0] sm:$0xff]
    %v202 = vld [vmem:[#allocation4 + $0x4b8] sm:$0xff]
    %v203 = vld [vmem:[#allocation4 + $0x4c0] sm:$0xff]
    %v204 = vld [vmem:[#allocation4 + $0x4c8] sm:$0xff]
    %v205 = vld [vmem:[#allocation4 + $0x4d0] sm:$0xff]
    %v206 = vld [vmem:[#allocation4 + $0x4d8] sm:$0xff]
    %v207 = vld [vmem:[#allocation4 + $0x4e0] sm:$0xff]
    %v208 = vld [vmem:[#allocation4 + $0x4e8] sm:$0xff]
    %v209 = vld [vmem:[#allocation4 + $0x4f0] sm:$0xff]
    %v210 = vld [vmem:[#allocation4 + $0x4f8] sm:$0xff]
    %v211 = vld [vmem:[#allocation4 + $0x500] sm:$0xff]
    %v212 = vld [vmem:[#allocation4 + $0x508] sm:$0xff]
    %v213 = vld [vmem:[#allocation4 + $0x510] sm:$0xff]
    %v214 = vld [vmem:[#allocation4 + $0x518] sm:$0xff]
    %v215 = vld [vmem:[#allocation4 + $0x520] sm:$0xff]
    %v216 = vld [vmem:[#allocation4 + $0x528] sm:$0xff]
    %v217 = vld [vmem:[#allocation4 + $0x530] sm:$0xff]
    %v218 = vld [vmem:[#allocation4 + $0x538] sm:$0xff]
    %v219 = vld [vmem:[#allocation4 + $0x540] sm:$0xff]
    %v220 = vld [vmem:[#allocation4 + $0x548] sm:$0xff]
    %v221 = vld [vmem:[#allocation4 + $0x550] sm:$0xff]
    %v222 = vld [vmem:[#allocation4 + $0x558] sm:$0xff]
    %v223 = vld [vmem:[#allocation4 + $0x560] sm:$0xff]
    %v224 = vld [vmem:[#allocation4 + $0x568] sm:$0xff]
    %v225 = vld [vmem:[#allocation4 + $0x570] sm:$0xff]
    %v226 = vld [vmem:[#allocation4 + $0x578] sm:$0xff]
    %v227 = vld [vmem:[#allocation4 + $0x580] sm:$0xff]
    %v228 = vld [vmem:[#allocation4 + $0x588] sm:$0xff]
    %v229 = vld [vmem:[#allocation4 + $0x590] sm:$0xff]
    %v230 = vld [vmem:[#allocation4 + $0x598] sm:$0xff]
    %v231 = vld [vmem:[#allocation4 + $0x5a0] sm:$0xff]
    %v232 = vld [vmem:[#allocation4 + $0x5a8] sm:$0xff]
    %v233 = vld [vmem:[#allocation4 + $0x5b0] sm:$0xff]
    %v234 = vld [vmem:[#allocation4 + $0x5b8] sm:$0xff]
    %v235 = vld [vmem:[#allocation4 + $0x5c0] sm:$0xff]
    %v236 = vld [vmem:[#allocation4 + $0x5c8] sm:$0xff]
    %v237 = vld [vmem:[#allocation4 + $0x5d0] sm:$0xff]
    %v238 = vld [vmem:[#allocation4 + $0x5d8] sm:$0xff]
    %v239 = vld [vmem:[#allocation4 + $0x5e0] sm:$0xff]
    %v240 = vld [vmem:[#allocation4 + $0x5e8] sm:$0xff]
    %v241 = vld [vmem:[#allocation4 + $0x5f0] sm:$0xff]
    %v242 = vld [vmem:[#allocation4 + $0x5f8] sm:$0xff]
    %v243 = vld [vmem:[#allocation4 + $0x600] sm:$0xff]
    %v244 = vld [vmem:[#allocation4 + $0x608] sm:$0xff]
    %v245 = vld [vmem:[#allocation4 + $0x610] sm:$0xff]
    %v246 = vld [vmem:[#allocation4 + $0x618] sm:$0xff]
    %v247 = vld [vmem:[#allocation4 + $0x620] sm:$0xff]
    %v248 = vld [vmem:[#allocation4 + $0x628] sm:$0xff]
    %v249 = vld [vmem:[#allocation4 + $0x630] sm:$0xff]
    %v250 = vld [vmem:[#allocation4 + $0x638] sm:$0xff]
    %v251 = vld [vmem:[#allocation4 + $0x640] sm:$0xff]
    %v252 = vld [vmem:[#allocation4 + $0x648] sm:$0xff]
    %v253 = vld [vmem:[#allocation4 + $0x650] sm:$0xff]
    %v254 = vld [vmem:[#allocation4 + $0x658] sm:$0xff]
    %v255 = vld [vmem:[#allocation4 + $0x660] sm:$0xff]
    %v256 = vld [vmem:[#allocation4 + $0x668] sm:$0xff]
    %v257 = vld [vmem:[#allocation4 + $0x670] sm:$0xff]
    %v258 = vld [vmem:[#allocation4 + $0x678] sm:$0xff]
    %v259 = vld [vmem:[#allocation4 + $0x680] sm:$0xff]
    %v260 = vld [vmem:[#allocation4 + $0x688] sm:$0xff]
    %v261 = vld [vmem:[#allocation4 + $0x690] sm:$0xff]
    %v262 = vld [vmem:[#allocation4 + $0x698] sm:$0xff]
    %v263 = vld [vmem:[#allocation4 + $0x6a0] sm:$0xff]
    %v264 = vld [vmem:[#allocation4 + $0x6a8] sm:$0xff]
    %v265 = vld [vmem:[#allocation4 + $0x6b0] sm:$0xff]
    %v266 = vld [vmem:[#allocation4 + $0x6b8] sm:$0xff]
    %v267 = vld [vmem:[#allocation4 + $0x6c0] sm:$0xff]
    %v268 = vld [vmem:[#allocation4 + $0x6c8] sm:$0xff]
    %v269 = vld [vmem:[#allocation4 + $0x6d0] sm:$0xff]
    %v270 = vld [vmem:[#allocation4 + $0x6d8] sm:$0xff]
    %v271 = vld [vmem:[#allocation4 + $0x6e0] sm:$0xff]
    %v272 = vld [vmem:[#allocation4 + $0x6e8] sm:$0xff]
    %v273 = vld [vmem:[#allocation4 + $0x6f0] sm:$0xff]
    %v274 = vld [vmem:[#allocation4 + $0x6f8] sm:$0xff]
    %v275 = vld [vmem:[#allocation4 + $0x700] sm:$0xff]
    %v276 = vld [vmem:[#allocation4 + $0x708] sm:$0xff]
    %v277 = vld [vmem:[#allocation4 + $0x710] sm:$0xff]
    %v278 = vld [vmem:[#allocation4 + $0x718] sm:$0xff]
    %v279 = vld [vmem:[#allocation4 + $0x720] sm:$0xff]
    %v280 = vld [vmem:[#allocation4 + $0x728] sm:$0xff]
    %v281 = vld [vmem:[#allocation4 + $0x730] sm:$0xff]
    %v282 = vld [vmem:[#allocation4 + $0x738] sm:$0xff]
    %v283 = vld [vmem:[#allocation4 + $0x740] sm:$0xff]
    %v284 = vld [vmem:[#allocation4 + $0x748] sm:$0xff]
    %v285 = vld [vmem:[#allocation4 + $0x750] sm:$0xff]
    %v286 = vld [vmem:[#allocation4 + $0x758] sm:$0xff]
    %v287 = vld [vmem:[#allocation4 + $0x760] sm:$0xff]
    %v288 = vld [vmem:[#allocation4 + $0x768] sm:$0xff]
    %v289 = vld [vmem:[#allocation4 + $0x770] sm:$0xff]
    %v290 = vld [vmem:[#allocation4 + $0x778] sm:$0xff]
    %v291 = vld [vmem:[#allocation4 + $0x780] sm:$0xff]
    %v292 = vld [vmem:[#allocation4 + $0x788] sm:$0xff]
    %v293 = vld [vmem:[#allocation4 + $0x790] sm:$0xff]
    %v294 = vld [vmem:[#allocation4 + $0x798] sm:$0xff]
    %v295 = vld [vmem:[#allocation4 + $0x7a0] sm:$0xff]
    %v296 = vld [vmem:[#allocation4 + $0x7a8] sm:$0xff]
    %v297 = vld [vmem:[#allocation4 + $0x7b0] sm:$0xff]
    %v298 = vld [vmem:[#allocation4 + $0x7b8] sm:$0xff]
    %v299 = vld [vmem:[#allocation4 + $0x7c0] sm:$0xff]
    %v300 = vld [vmem:[#allocation4 + $0x7c8] sm:$0xff]
    %v301 = vld [vmem:[#allocation4 + $0x7d0] sm:$0xff]
    %v302 = vld [vmem:[#allocation4 + $0x7d8] sm:$0xff]
    %v303 = vld [vmem:[#allocation4 + $0x7e0] sm:$0xff]
    %v304 = vld [vmem:[#allocation4 + $0x7e8] sm:$0xff]
    %v305 = vld [vmem:[#allocation4 + $0x7f0] sm:$0xff]
    %v306 = vld [vmem:[#allocation4 + $0x7f8] sm:$0xff]
    %v307 = vld [vmem:[#allocation4 + $0x800] sm:$0xff]
    %v308 = vld [vmem:[#allocation4 + $0x808] sm:$0xff]
    %v309 = vld [vmem:[#allocation4 + $0x810] sm:$0xff]
    %v310 = vld [vmem:[#allocation4 + $0x818] sm:$0xff]
    %v311 = vld [vmem:[#allocation4 + $0x820] sm:$0xff]
    %v312 = vld [vmem:[#allocation4 + $0x828] sm:$0xff]
    %v313 = vld [vmem:[#allocation4 + $0x830] sm:$0xff]
    %v314 = vld [vmem:[#allocation4 + $0x838] sm:$0xff]
    %v315 = vld [vmem:[#allocation4 + $0x840] sm:$0xff]
    %v316 = vld [vmem:[#allocation4 + $0x848] sm:$0xff]
    %v317 = vld [vmem:[#allocation4 + $0x850] sm:$0xff]
    %v318 = vld [vmem:[#allocation4 + $0x858] sm:$0xff]
    %v319 = vld [vmem:[#allocation4 + $0x860] sm:$0xff]
    %v320 = vld [vmem:[#allocation4 + $0x868] sm:$0xff]
    %v321 = vld [vmem:[#allocation4 + $0x870] sm:$0xff]
    %v322 = vld [vmem:[#allocation4 + $0x878] sm:$0xff]
    %v323 = vld [vmem:[#allocation4 + $0x880] sm:$0xff]
    %v324 = vld [vmem:[#allocation4 + $0x888] sm:$0xff]
    %v325 = vld [vmem:[#allocation4 + $0x890] sm:$0xff]
    %v326 = vld [vmem:[#allocation4 + $0x898] sm:$0xff]
    %v327 = vld [vmem:[#allocation4 + $0x8a0] sm:$0xff]
    %v328 = vld [vmem:[#allocation4 + $0x8a8] sm:$0xff]
    %v329 = vld [vmem:[#allocation4 + $0x8b0] sm:$0xff]
    %v330 = vld [vmem:[#allocation4 + $0x8b8] sm:$0xff]
    %v331 = vld [vmem:[#allocation4 + $0x8c0] sm:$0xff]
    %v332 = vld [vmem:[#allocation4 + $0x8c8] sm:$0xff]
    %v333 = vld [vmem:[#allocation4 + $0x8d0] sm:$0xff]
    %v334 = vld [vmem:[#allocation4 + $0x8d8] sm:$0xff]
    %v335 = vld [vmem:[#allocation4 + $0x8e0] sm:$0xff]
    %v336 = vld [vmem:[#allocation4 + $0x8e8] sm:$0xff]
    %v337 = vld [vmem:[#allocation4 + $0x8f0] sm:$0xff]
    %v338 = vld [vmem:[#allocation4 + $0x8f8] sm:$0xff]
    %v339 = vld [vmem:[#allocation4 + $0x900] sm:$0xff]
    %v340 = vld [vmem:[#allocation4 + $0x908] sm:$0xff]
    %v341 = vld [vmem:[#allocation4 + $0x910] sm:$0xff]
    %v342 = vld [vmem:[#allocation4 + $0x918] sm:$0xff]
    %v343 = vld [vmem:[#allocation4 + $0x920] sm:$0xff]
    %v344 = vld [vmem:[#allocation4 + $0x928] sm:$0xff]
    %v345 = vld [vmem:[#allocation4 + $0x930] sm:$0xff]
    %v346 = vld [vmem:[#allocation4 + $0x938] sm:$0xff]
    %v347 = vld [vmem:[#allocation4 + $0x940] sm:$0xff]
    %v348 = vld [vmem:[#allocation4 + $0x948] sm:$0xff]
    %v349 = vld [vmem:[#allocation4 + $0x950] sm:$0xff]
    %v350 = vld [vmem:[#allocation4 + $0x958] sm:$0xff]
    %v351 = vld [vmem:[#allocation4 + $0x960] sm:$0xff]
    %v352 = vld [vmem:[#allocation4 + $0x968] sm:$0xff]
    %v353 = vld [vmem:[#allocation4 + $0x970] sm:$0xff]
    %v354 = vld [vmem:[#allocation4 + $0x978] sm:$0xff]
    %v355 = vld [vmem:[#allocation4 + $0x980] sm:$0xff]
    %v356 = vld [vmem:[#allocation4 + $0x988] sm:$0xff]
    %v357 = vld [vmem:[#allocation4 + $0x990] sm:$0xff]
    %v358 = vld [vmem:[#allocation4 + $0x998] sm:$0xff]
    %v359 = vld [vmem:[#allocation4 + $0x9a0] sm:$0xff]
    %v360 = vld [vmem:[#allocation4 + $0x9a8] sm:$0xff]
    %v361 = vld [vmem:[#allocation4 + $0x9b0] sm:$0xff]
    %v362 = vld [vmem:[#allocation4 + $0x9b8] sm:$0xff]
    %v363 = vld [vmem:[#allocation4 + $0x9c0] sm:$0xff]
    %v364 = vld [vmem:[#allocation4 + $0x9c8] sm:$0xff]
    %v365 = vld [vmem:[#allocation4 + $0x9d0] sm:$0xff]
    %v366 = vld [vmem:[#allocation4 + $0x9d8] sm:$0xff]
    %v367 = vld [vmem:[#allocation4 + $0x9e0] sm:$0xff]
    %v368 = vld [vmem:[#allocation4 + $0x9e8] sm:$0xff]
    %v369 = vld [vmem:[#allocation4 + $0x9f0] sm:$0xff]
    %v370 = vld [vmem:[#allocation4 + $0x9f8] sm:$0xff]
    %v371 = vld [vmem:[#allocation4 + $0xa00] sm:$0xff]
    %v372 = vld [vmem:[#allocation4 + $0xa08] sm:$0xff]
    %v373 = vld [vmem:[#allocation4 + $0xa10] sm:$0xff]
    %v374 = vld [vmem:[#allocation4 + $0xa18] sm:$0xff]
    %v375 = vld [vmem:[#allocation4 + $0xa20] sm:$0xff]
    %v376 = vld [vmem:[#allocation4 + $0xa28] sm:$0xff]
    %v377 = vld [vmem:[#allocation4 + $0xa30] sm:$0xff]
    %v378 = vld [vmem:[#allocation4 + $0xa38] sm:$0xff]
    %v379 = vld [vmem:[#allocation4 + $0xa40] sm:$0xff]
    %v380 = vld [vmem:[#allocation4 + $0xa48] sm:$0xff]
    %v381 = vld [vmem:[#allocation4 + $0xa50] sm:$0xff]
    %v382 = vld [vmem:[#allocation4 + $0xa58] sm:$0xff]
    %v383 = vld [vmem:[#allocation4 + $0xa60] sm:$0xff]
    %v384 = vld [vmem:[#allocation4 + $0xa68] sm:$0xff]
    %v385 = vld [vmem:[#allocation4 + $0xa70] sm:$0xff]
    %v386 = vld [vmem:[#allocation4 + $0xa78] sm:$0xff]
    %v387 = vld [vmem:[#allocation4 + $0xa80] sm:$0xff]
    %v388 = vld [vmem:[#allocation4 + $0xa88] sm:$0xff]
    %v389 = vld [vmem:[#allocation4 + $0xa90] sm:$0xff]
    %v390 = vld [vmem:[#allocation4 + $0xa98] sm:$0xff]
    %v391 = vld [vmem:[#allocation4 + $0xaa0] sm:$0xff]
    %v392 = vld [vmem:[#allocation4 + $0xaa8] sm:$0xff]
    %v393 = vld [vmem:[#allocation4 + $0xab0] sm:$0xff]
    %v394 = vld [vmem:[#allocation4 + $0xab8] sm:$0xff]
    %v395 = vld [vmem:[#allocation4 + $0xac0] sm:$0xff]
    %v396 = vld [vmem:[#allocation4 + $0xac8] sm:$0xff]
    %v397 = vld [vmem:[#allocation4 + $0xad0] sm:$0xff]
    %v398 = vld [vmem:[#allocation4 + $0xad8] sm:$0xff]
    %v399 = vld [vmem:[#allocation4 + $0xae0] sm:$0xff]
    %v400 = vld [vmem:[#allocation4 + $0xae8] sm:$0xff]
    %v401 = vld [vmem:[#allocation4 + $0xaf0] sm:$0xff]
    %v402 = vld [vmem:[#allocation4 + $0xaf8] sm:$0xff]
    %v403 = vld [vmem:[#allocation4 + $0xb00] sm:$0xff]
    %v404 = vld [vmem:[#allocation4 + $0xb08] sm:$0xff]
    %v405 = vld [vmem:[#allocation4 + $0xb10] sm:$0xff]
    %v406 = vld [vmem:[#allocation4 + $0xb18] sm:$0xff]
    %v407 = vld [vmem:[#allocation4 + $0xb20] sm:$0xff]
    %v408 = vld [vmem:[#allocation4 + $0xb28] sm:$0xff]
    %v409 = vld [vmem:[#allocation4 + $0xb30] sm:$0xff]
    %v410 = vld [vmem:[#allocation4 + $0xb38] sm:$0xff]
    %v411 = vld [vmem:[#allocation4 + $0xb40] sm:$0xff]
    %v412 = vld [vmem:[#allocation4 + $0xb48] sm:$0xff]
    %v413 = vld [vmem:[#allocation4 + $0xb50] sm:$0xff]
    %v414 = vld [vmem:[#allocation4 + $0xb58] sm:$0xff]
    %v415 = vld [vmem:[#allocation4 + $0xb60] sm:$0xff]
    %v416 = vld [vmem:[#allocation4 + $0xb68] sm:$0xff]
    %v417 = vld [vmem:[#allocation4 + $0xb70] sm:$0xff]
    %v418 = vld [vmem:[#allocation4 + $0xb78] sm:$0xff]
    %v419 = vld [vmem:[#allocation4 + $0xb80] sm:$0xff]
    %v420 = vld [vmem:[#allocation4 + $0xb88] sm:$0xff]
    %v421 = vld [vmem:[#allocation4 + $0xb90] sm:$0xff]
    %v422 = vld [vmem:[#allocation4 + $0xb98] sm:$0xff]
    %v423 = vld [vmem:[#allocation4 + $0xba0] sm:$0xff]
    %v424 = vld [vmem:[#allocation4 + $0xba8] sm:$0xff]
    %v425 = vld [vmem:[#allocation4 + $0xbb0] sm:$0xff]
    %v426 = vld [vmem:[#allocation4 + $0xbb8] sm:$0xff]
    %v427 = vld [vmem:[#allocation4 + $0xbc0] sm:$0xff]
    %v428 = vld [vmem:[#allocation4 + $0xbc8] sm:$0xff]
    %v429 = vld [vmem:[#allocation4 + $0xbd0] sm:$0xff]
    %v430 = vld [vmem:[#allocation4 + $0xbd8] sm:$0xff]
    %v431 = vld [vmem:[#allocation4 + $0xbe0] sm:$0xff]
    %v432 = vld [vmem:[#allocation4 + $0xbe8] sm:$0xff]
    %v433 = vld [vmem:[#allocation4 + $0xbf0] sm:$0xff]
    %v434 = vld [vmem:[#allocation4 + $0xbf8] sm:$0xff]
    %v435 = vld [vmem:[#allocation4 + $0xc00] sm:$0xff]
    %v436 = vld [vmem:[#allocation4 + $0xc08] sm:$0xff]
    %v437 = vld [vmem:[#allocation4 + $0xc10] sm:$0xff]
    %v438 = vld [vmem:[#allocation4 + $0xc18] sm:$0xff]
    %v439 = vld [vmem:[#allocation4 + $0xc20] sm:$0xff]
    %v440 = vld [vmem:[#allocation4 + $0xc28] sm:$0xff]
    %v441 = vld [vmem:[#allocation4 + $0xc30] sm:$0xff]
    %v442 = vld [vmem:[#allocation4 + $0xc38] sm:$0xff]
    %v443 = vld [vmem:[#allocation4 + $0xc40] sm:$0xff]
    %v444 = vld [vmem:[#allocation4 + $0xc48] sm:$0xff]
    %v445 = vld [vmem:[#allocation4 + $0xc50] sm:$0xff]
    %v446 = vld [vmem:[#allocation4 + $0xc58] sm:$0xff]
    %v447 = vld [vmem:[#allocation4 + $0xc60] sm:$0xff]
    %v448 = vld [vmem:[#allocation4 + $0xc68] sm:$0xff]
    %v449 = vld [vmem:[#allocation4 + $0xc70] sm:$0xff]
    %v450 = vld [vmem:[#allocation4 + $0xc78] sm:$0xff]
    %v451 = vld [vmem:[#allocation4 + $0xc80] sm:$0xff]
    %v452 = vld [vmem:[#allocation4 + $0xc88] sm:$0xff]
    %v453 = vld [vmem:[#allocation4 + $0xc90] sm:$0xff]
    %v454 = vld [vmem:[#allocation4 + $0xc98] sm:$0xff]
    %v455 = vld [vmem:[#allocation4 + $0xca0] sm:$0xff]
    %v456 = vld [vmem:[#allocation4 + $0xca8] sm:$0xff]
    %v457 = vld [vmem:[#allocation4 + $0xcb0] sm:$0xff]
    %v458 = vld [vmem:[#allocation4 + $0xcb8] sm:$0xff]
    %v459 = vld [vmem:[#allocation4 + $0xcc0] sm:$0xff]
    %v460 = vld [vmem:[#allocation4 + $0xcc8] sm:$0xff]
    %v461 = vld [vmem:[#allocation4 + $0xcd0] sm:$0xff]
    %v462 = vld [vmem:[#allocation4 + $0xcd8] sm:$0xff]
    %v463 = vld [vmem:[#allocation4 + $0xce0] sm:$0xff]
    %v464 = vld [vmem:[#allocation4 + $0xce8] sm:$0xff]
    %v465 = vld [vmem:[#allocation4 + $0xcf0] sm:$0xff]
    %v466 = vld [vmem:[#allocation4 + $0xcf8] sm:$0xff]
    %v467 = vld [vmem:[#allocation4 + $0xd00] sm:$0xff]
    %v468 = vld [vmem:[#allocation4 + $0xd08] sm:$0xff]
    %v469 = vld [vmem:[#allocation4 + $0xd10] sm:$0xff]
    %v470 = vld [vmem:[#allocation4 + $0xd18] sm:$0xff]
    %v471 = vld [vmem:[#allocation4 + $0xd20] sm:$0xff]
    %v472 = vld [vmem:[#allocation4 + $0xd28] sm:$0xff]
    %v473 = vld [vmem:[#allocation4 + $0xd30] sm:$0xff]
    %v474 = vld [vmem:[#allocation4 + $0xd38] sm:$0xff]
    %v475 = vld [vmem:[#allocation4 + $0xd40] sm:$0xff]
    %v476 = vld [vmem:[#allocation4 + $0xd48] sm:$0xff]
    %v477 = vld [vmem:[#allocation4 + $0xd50] sm:$0xff]
    %v478 = vld [vmem:[#allocation4 + $0xd58] sm:$0xff]
    %v479 = vld [vmem:[#allocation4 + $0xd60] sm:$0xff]
    %v480 = vld [vmem:[#allocation4 + $0xd68] sm:$0xff]
    %v481 = vld [vmem:[#allocation4 + $0xd70] sm:$0xff]
    %v482 = vld [vmem:[#allocation4 + $0xd78] sm:$0xff]
    %v483 = vld [vmem:[#allocation4 + $0xd80] sm:$0xff]
    %v484 = vld [vmem:[#allocation4 + $0xd88] sm:$0xff]
    %v485 = vld [vmem:[#allocation4 + $0xd90] sm:$0xff]
    %v486 = vld [vmem:[#allocation4 + $0xd98] sm:$0xff]
    %v487 = vld [vmem:[#allocation4 + $0xda0] sm:$0xff]
    %v488 = vld [vmem:[#allocation4 + $0xda8] sm:$0xff]
    %v489 = vld [vmem:[#allocation4 + $0xdb0] sm:$0xff]
    %v490 = vld [vmem:[#allocation4 + $0xdb8] sm:$0xff]
    %v491 = vld [vmem:[#allocation4 + $0xdc0] sm:$0xff]
    %v492 = vld [vmem:[#allocation4 + $0xdc8] sm:$0xff]
    %v493 = vld [vmem:[#allocation4 + $0xdd0] sm:$0xff]
    %v494 = vld [vmem:[#allocation4 + $0xdd8] sm:$0xff]
    %v495 = vld [vmem:[#allocation4 + $0xde0] sm:$0xff]
    %v496 = vld [vmem:[#allocation4 + $0xde8] sm:$0xff]
    %v497 = vld [vmem:[#allocation4 + $0xdf0] sm:$0xff]
    %v498 = vld [vmem:[#allocation4 + $0xdf8] sm:$0xff]
    %v499 = vld [vmem:[#allocation4 + $0xe00] sm:$0xff]
    %v500 = vld [vmem:[#allocation4 + $0xe08] sm:$0xff]
    %v501 = vld [vmem:[#allocation4 + $0xe10] sm:$0xff]
    %v502 = vld [vmem:[#allocation4 + $0xe18] sm:$0xff]
    %v503 = vld [vmem:[#allocation4 + $0xe20] sm:$0xff]
    %v504 = vld [vmem:[#allocation4 + $0xe28] sm:$0xff]
    %v505 = vld [vmem:[#allocation4 + $0xe30] sm:$0xff]
    %v506 = vld [vmem:[#allocation4 + $0xe38] sm:$0xff]
    %v507 = vld [vmem:[#allocation4 + $0xe40] sm:$0xff]
    %v508 = vld [vmem:[#allocation4 + $0xe48] sm:$0xff]
    %v509 = vld [vmem:[#allocation4 + $0xe50] sm:$0xff]
    %v510 = vld [vmem:[#allocation4 + $0xe58] sm:$0xff]
    %v511 = vld [vmem:[#allocation4 + $0xe60] sm:$0xff]
    %v512 = vld [vmem:[#allocation4 + $0xe68] sm:$0xff]
    %v513 = vld [vmem:[#allocation4 + $0xe70] sm:$0xff]
    %v514 = vld [vmem:[#allocation4 + $0xe78] sm:$0xff]
    %v515 = vld [vmem:[#allocation4 + $0xe80] sm:$0xff]
    %v516 = vld [vmem:[#allocation4 + $0xe88] sm:$0xff]
    %v517 = vld [vmem:[#allocation4 + $0xe90] sm:$0xff]
    %v518 = vld [vmem:[#allocation4 + $0xe98] sm:$0xff]
    %v519 = vld [vmem:[#allocation4 + $0xea0] sm:$0xff]
    %v520 = vld [vmem:[#allocation4 + $0xea8] sm:$0xff]
    %v521 = vld [vmem:[#allocation4 + $0xeb0] sm:$0xff]
    %v522 = vld [vmem:[#allocation4 + $0xeb8] sm:$0xff]
    %v523 = vld [vmem:[#allocation4 + $0xec0] sm:$0xff]
    %v524 = vld [vmem:[#allocation4 + $0xec8] sm:$0xff]
    %v525 = vld [vmem:[#allocation4 + $0xed0] sm:$0xff]
    %v526 = vld [vmem:[#allocation4 + $0xed8] sm:$0xff]
    %v527 = vld [vmem:[#allocation4 + $0xee0] sm:$0xff]
    %v528 = vld [vmem:[#allocation4 + $0xee8] sm:$0xff]
    %v529 = vld [vmem:[#allocation4 + $0xef0] sm:$0xff]
    %v530 = vld [vmem:[#allocation4 + $0xef8] sm:$0xff]
    %v531 = vld [vmem:[#allocation4 + $0xf00] sm:$0xff]
    %v532 = vld [vmem:[#allocation4 + $0xf08] sm:$0xff]
    %v533 = vld [vmem:[#allocation4 + $0xf10] sm:$0xff]
    %v534 = vld [vmem:[#allocation4 + $0xf18] sm:$0xff]
    %v535 = vld [vmem:[#allocation4 + $0xf20] sm:$0xff]
    %v536 = vld [vmem:[#allocation4 + $0xf28] sm:$0xff]
    %v537 = vld [vmem:[#allocation4 + $0xf30] sm:$0xff]
    %v538 = vld [vmem:[#allocation4 + $0xf38] sm:$0xff]
    %v539 = vld [vmem:[#allocation4 + $0xf40] sm:$0xff]
    %v540 = vld [vmem:[#allocation4 + $0xf48] sm:$0xff]
    %v541 = vld [vmem:[#allocation4 + $0xf50] sm:$0xff]
    %v542 = vld [vmem:[#allocation4 + $0xf58] sm:$0xff]
    %v543 = vld [vmem:[#allocation4 + $0xf60] sm:$0xff]
    %v544 = vld [vmem:[#allocation4 + $0xf68] sm:$0xff]
    %v545 = vld [vmem:[#allocation4 + $0xf70] sm:$0xff]
    %v546 = vld [vmem:[#allocation4 + $0xf78] sm:$0xff]
    %v547 = vld [vmem:[#allocation4 + $0xf80] sm:$0xff]
    %v548 = vld [vmem:[#allocation4 + $0xf88] sm:$0xff]
    %v549 = vld [vmem:[#allocation4 + $0xf90] sm:$0xff]
    %v550 = vld [vmem:[#allocation4 + $0xf98] sm:$0xff]
    %v551 = vld [vmem:[#allocation4 + $0xfa0] sm:$0xff]
    %v552 = vld [vmem:[#allocation4 + $0xfa8] sm:$0xff]
    %v553 = vld [vmem:[#allocation4 + $0xfb0] sm:$0xff]
    %v554 = vld [vmem:[#allocation4 + $0xfb8] sm:$0xff]
    %v555 = vld [vmem:[#allocation4 + $0xfc0] sm:$0xff]
    %v556 = vld [vmem:[#allocation4 + $0xfc8] sm:$0xff]
    %v557 = vld [vmem:[#allocation4 + $0xfd0] sm:$0xff]
    %v558 = vld [vmem:[#allocation4 + $0xfd8] sm:$0xff]
    %v559 = vld [vmem:[#allocation4 + $0xfe0] sm:$0xff]
    %v560 = vld [vmem:[#allocation4 + $0xfe8] sm:$0xff]
    %v561 = vld [vmem:[#allocation4 + $0xff0] sm:$0xff]
    %v562 = vld [vmem:[#allocation4 + $0xff8] sm:$0xff]
    %v563 = vunpack.c.l.bf16 %v51
    %v564 = vunpack.c.h.bf16 %v51
    %v565 = vunpack.c.l.bf16 %v52
    %v566 = vunpack.c.h.bf16 %v52
    %v567 = vunpack.c.l.bf16 %v53
    %v568 = vunpack.c.h.bf16 %v53
    %v569 = vunpack.c.l.bf16 %v54
    %v570 = vunpack.c.h.bf16 %v54
    %v571 = vunpack.c.l.bf16 %v55
    %v572 = vunpack.c.h.bf16 %v55
    %v573 = vunpack.c.l.bf16 %v56
    %v574 = vunpack.c.h.bf16 %v56
    %v575 = vunpack.c.l.bf16 %v57
    %v576 = vunpack.c.h.bf16 %v57
    %v577 = vunpack.c.l.bf16 %v58
    %v578 = vunpack.c.h.bf16 %v58
    %v579 = vunpack.c.l.bf16 %v59
    %v580 = vunpack.c.h.bf16 %v59
    %v581 = vunpack.c.l.bf16 %v60
    %v582 = vunpack.c.h.bf16 %v60
    %v583 = vunpack.c.l.bf16 %v61
    %v584 = vunpack.c.h.bf16 %v61
    %v585 = vunpack.c.l.bf16 %v62
    %v586 = vunpack.c.h.bf16 %v62
    %v587 = vunpack.c.l.bf16 %v63
    %v588 = vunpack.c.h.bf16 %v63
    %v589 = vunpack.c.l.bf16 %v64
    %v590 = vunpack.c.h.bf16 %v64
    %v591 = vunpack.c.l.bf16 %v65
    %v592 = vunpack.c.h.bf16 %v65
    %v593 = vunpack.c.l.bf16 %v66
    %v594 = vunpack.c.h.bf16 %v66
    %v595 = vunpack.c.l.bf16 %v67
    %v596 = vunpack.c.h.bf16 %v67
    %v597 = vunpack.c.l.bf16 %v68
    %v598 = vunpack.c.h.bf16 %v68
    %v599 = vunpack.c.l.bf16 %v69
    %v600 = vunpack.c.h.bf16 %v69
    %v601 = vunpack.c.l.bf16 %v70
    %v602 = vunpack.c.h.bf16 %v70
    %v603 = vunpack.c.l.bf16 %v71
    %v604 = vunpack.c.h.bf16 %v71
    %v605 = vunpack.c.l.bf16 %v72
    %v606 = vunpack.c.h.bf16 %v72
    %v607 = vunpack.c.l.bf16 %v73
    %v608 = vunpack.c.h.bf16 %v73
    %v609 = vunpack.c.l.bf16 %v74
    %v610 = vunpack.c.h.bf16 %v74
    %v611 = vunpack.c.l.bf16 %v75
    %v612 = vunpack.c.h.bf16 %v75
    %v613 = vunpack.c.l.bf16 %v76
    %v614 = vunpack.c.h.bf16 %v76
    %v615 = vunpack.c.l.bf16 %v77
    %v616 = vunpack.c.h.bf16 %v77
    %v617 = vunpack.c.l.bf16 %v78
    %v618 = vunpack.c.h.bf16 %v78
    %v619 = vunpack.c.l.bf16 %v79
    %v620 = vunpack.c.h.bf16 %v79
    %v621 = vunpack.c.l.bf16 %v80
    %v622 = vunpack.c.h.bf16 %v80
    %v623 = vunpack.c.l.bf16 %v81
    %v624 = vunpack.c.h.bf16 %v81
    %v625 = vunpack.c.l.bf16 %v82
    %v626 = vunpack.c.h.bf16 %v82
    %v627 = vunpack.c.l.bf16 %v83
    %v628 = vunpack.c.h.bf16 %v83
    %v629 = vunpack.c.l.bf16 %v84
    %v630 = vunpack.c.h.bf16 %v84
    %v631 = vunpack.c.l.bf16 %v85
    %v632 = vunpack.c.h.bf16 %v85
    %v633 = vunpack.c.l.bf16 %v86
    %v634 = vunpack.c.h.bf16 %v86
    %v635 = vunpack.c.l.bf16 %v87
    %v636 = vunpack.c.h.bf16 %v87
    %v637 = vunpack.c.l.bf16 %v88
    %v638 = vunpack.c.h.bf16 %v88
    %v639 = vunpack.c.l.bf16 %v89
    %v640 = vunpack.c.h.bf16 %v89
    %v641 = vunpack.c.l.bf16 %v90
    %v642 = vunpack.c.h.bf16 %v90
    %v643 = vunpack.c.l.bf16 %v91
    %v644 = vunpack.c.h.bf16 %v91
    %v645 = vunpack.c.l.bf16 %v92
    %v646 = vunpack.c.h.bf16 %v92
    %v647 = vunpack.c.l.bf16 %v93
    %v648 = vunpack.c.h.bf16 %v93
    %v649 = vunpack.c.l.bf16 %v94
    %v650 = vunpack.c.h.bf16 %v94
    %v651 = vunpack.c.l.bf16 %v95
    %v652 = vunpack.c.h.bf16 %v95
    %v653 = vunpack.c.l.bf16 %v96
    %v654 = vunpack.c.h.bf16 %v96
    %v655 = vunpack.c.l.bf16 %v97
    %v656 = vunpack.c.h.bf16 %v97
    %v657 = vunpack.c.l.bf16 %v98
    %v658 = vunpack.c.h.bf16 %v98
    %v659 = vunpack.c.l.bf16 %v99
    %v660 = vunpack.c.h.bf16 %v99
    %v661 = vunpack.c.l.bf16 %v100
    %v662 = vunpack.c.h.bf16 %v100
    %v663 = vunpack.c.l.bf16 %v101
    %v664 = vunpack.c.h.bf16 %v101
    %v665 = vunpack.c.l.bf16 %v102
    %v666 = vunpack.c.h.bf16 %v102
    %v667 = vunpack.c.l.bf16 %v103
    %v668 = vunpack.c.h.bf16 %v103
    %v669 = vunpack.c.l.bf16 %v104
    %v670 = vunpack.c.h.bf16 %v104
    %v671 = vunpack.c.l.bf16 %v105
    %v672 = vunpack.c.h.bf16 %v105
    %v673 = vunpack.c.l.bf16 %v106
    %v674 = vunpack.c.h.bf16 %v106
    %v675 = vunpack.c.l.bf16 %v107
    %v676 = vunpack.c.h.bf16 %v107
    %v677 = vunpack.c.l.bf16 %v108
    %v678 = vunpack.c.h.bf16 %v108
    %v679 = vunpack.c.l.bf16 %v109
    %v680 = vunpack.c.h.bf16 %v109
    %v681 = vunpack.c.l.bf16 %v110
    %v682 = vunpack.c.h.bf16 %v110
    %v683 = vunpack.c.l.bf16 %v111
    %v684 = vunpack.c.h.bf16 %v111
    %v685 = vunpack.c.l.bf16 %v112
    %v686 = vunpack.c.h.bf16 %v112
    %v687 = vunpack.c.l.bf16 %v113
    %v688 = vunpack.c.h.bf16 %v113
    %v689 = vunpack.c.l.bf16 %v114
    %v690 = vunpack.c.h.bf16 %v114
    %v691 = vunpack.c.l.bf16 %v115
    %v692 = vunpack.c.h.bf16 %v115
    %v693 = vunpack.c.l.bf16 %v116
    %v694 = vunpack.c.h.bf16 %v116
    %v695 = vunpack.c.l.bf16 %v117
    %v696 = vunpack.c.h.bf16 %v117
    %v697 = vunpack.c.l.bf16 %v118
    %v698 = vunpack.c.h.bf16 %v118
    %v699 = vunpack.c.l.bf16 %v119
    %v700 = vunpack.c.h.bf16 %v119
    %v701 = vunpack.c.l.bf16 %v120
    %v702 = vunpack.c.h.bf16 %v120
    %v703 = vunpack.c.l.bf16 %v121
    %v704 = vunpack.c.h.bf16 %v121
    %v705 = vunpack.c.l.bf16 %v122
    %v706 = vunpack.c.h.bf16 %v122
    %v707 = vunpack.c.l.bf16 %v123
    %v708 = vunpack.c.h.bf16 %v123
    %v709 = vunpack.c.l.bf16 %v124
    %v710 = vunpack.c.h.bf16 %v124
    %v711 = vunpack.c.l.bf16 %v125
    %v712 = vunpack.c.h.bf16 %v125
    %v713 = vunpack.c.l.bf16 %v126
    %v714 = vunpack.c.h.bf16 %v126
    %v715 = vunpack.c.l.bf16 %v127
    %v716 = vunpack.c.h.bf16 %v127
    %v717 = vunpack.c.l.bf16 %v128
    %v718 = vunpack.c.h.bf16 %v128
    %v719 = vunpack.c.l.bf16 %v129
    %v720 = vunpack.c.h.bf16 %v129
    %v721 = vunpack.c.l.bf16 %v130
    %v722 = vunpack.c.h.bf16 %v130
    %v723 = vunpack.c.l.bf16 %v131
    %v724 = vunpack.c.h.bf16 %v131
    %v725 = vunpack.c.l.bf16 %v132
    %v726 = vunpack.c.h.bf16 %v132
    %v727 = vunpack.c.l.bf16 %v133
    %v728 = vunpack.c.h.bf16 %v133
    %v729 = vunpack.c.l.bf16 %v134
    %v730 = vunpack.c.h.bf16 %v134
    %v731 = vunpack.c.l.bf16 %v135
    %v732 = vunpack.c.h.bf16 %v135
    %v733 = vunpack.c.l.bf16 %v136
    %v734 = vunpack.c.h.bf16 %v136
    %v735 = vunpack.c.l.bf16 %v137
    %v736 = vunpack.c.h.bf16 %v137
    %v737 = vunpack.c.l.bf16 %v138
    %v738 = vunpack.c.h.bf16 %v138
    %v739 = vunpack.c.l.bf16 %v139
    %v740 = vunpack.c.h.bf16 %v139
    %v741 = vunpack.c.l.bf16 %v140
    %v742 = vunpack.c.h.bf16 %v140
    %v743 = vunpack.c.l.bf16 %v141
    %v744 = vunpack.c.h.bf16 %v141
    %v745 = vunpack.c.l.bf16 %v142
    %v746 = vunpack.c.h.bf16 %v142
    %v747 = vunpack.c.l.bf16 %v143
    %v748 = vunpack.c.h.bf16 %v143
    %v749 = vunpack.c.l.bf16 %v144
    %v750 = vunpack.c.h.bf16 %v144
    %v751 = vunpack.c.l.bf16 %v145
    %v752 = vunpack.c.h.bf16 %v145
    %v753 = vunpack.c.l.bf16 %v146
    %v754 = vunpack.c.h.bf16 %v146
    %v755 = vunpack.c.l.bf16 %v147
    %v756 = vunpack.c.h.bf16 %v147
    %v757 = vunpack.c.l.bf16 %v148
    %v758 = vunpack.c.h.bf16 %v148
    %v759 = vunpack.c.l.bf16 %v149
    %v760 = vunpack.c.h.bf16 %v149
    %v761 = vunpack.c.l.bf16 %v150
    %v762 = vunpack.c.h.bf16 %v150
    %v763 = vunpack.c.l.bf16 %v151
    %v764 = vunpack.c.h.bf16 %v151
    %v765 = vunpack.c.l.bf16 %v152
    %v766 = vunpack.c.h.bf16 %v152
    %v767 = vunpack.c.l.bf16 %v153
    %v768 = vunpack.c.h.bf16 %v153
    %v769 = vunpack.c.l.bf16 %v154
    %v770 = vunpack.c.h.bf16 %v154
    %v771 = vunpack.c.l.bf16 %v155
    %v772 = vunpack.c.h.bf16 %v155
    %v773 = vunpack.c.l.bf16 %v156
    %v774 = vunpack.c.h.bf16 %v156
    %v775 = vunpack.c.l.bf16 %v157
    %v776 = vunpack.c.h.bf16 %v157
    %v777 = vunpack.c.l.bf16 %v158
    %v778 = vunpack.c.h.bf16 %v158
    %v779 = vunpack.c.l.bf16 %v159
    %v780 = vunpack.c.h.bf16 %v159
    %v781 = vunpack.c.l.bf16 %v160
    %v782 = vunpack.c.h.bf16 %v160
    %v783 = vunpack.c.l.bf16 %v161
    %v784 = vunpack.c.h.bf16 %v161
    %v785 = vunpack.c.l.bf16 %v162
    %v786 = vunpack.c.h.bf16 %v162
    %v787 = vunpack.c.l.bf16 %v163
    %v788 = vunpack.c.h.bf16 %v163
    %v789 = vunpack.c.l.bf16 %v164
    %v790 = vunpack.c.h.bf16 %v164
    %v791 = vunpack.c.l.bf16 %v165
    %v792 = vunpack.c.h.bf16 %v165
    %v793 = vunpack.c.l.bf16 %v166
    %v794 = vunpack.c.h.bf16 %v166
    %v795 = vunpack.c.l.bf16 %v167
    %v796 = vunpack.c.h.bf16 %v167
    %v797 = vunpack.c.l.bf16 %v168
    %v798 = vunpack.c.h.bf16 %v168
    %v799 = vunpack.c.l.bf16 %v169
    %v800 = vunpack.c.h.bf16 %v169
    %v801 = vunpack.c.l.bf16 %v170
    %v802 = vunpack.c.h.bf16 %v170
    %v803 = vunpack.c.l.bf16 %v171
    %v804 = vunpack.c.h.bf16 %v171
    %v805 = vunpack.c.l.bf16 %v172
    %v806 = vunpack.c.h.bf16 %v172
    %v807 = vunpack.c.l.bf16 %v173
    %v808 = vunpack.c.h.bf16 %v173
    %v809 = vunpack.c.l.bf16 %v174
    %v810 = vunpack.c.h.bf16 %v174
    %v811 = vunpack.c.l.bf16 %v175
    %v812 = vunpack.c.h.bf16 %v175
    %v813 = vunpack.c.l.bf16 %v176
    %v814 = vunpack.c.h.bf16 %v176
    %v815 = vunpack.c.l.bf16 %v177
    %v816 = vunpack.c.h.bf16 %v177
    %v817 = vunpack.c.l.bf16 %v178
    %v818 = vunpack.c.h.bf16 %v178
    %v819 = vunpack.c.l.bf16 %v179
    %v820 = vunpack.c.h.bf16 %v179
    %v821 = vunpack.c.l.bf16 %v180
    %v822 = vunpack.c.h.bf16 %v180
    %v823 = vunpack.c.l.bf16 %v181
    %v824 = vunpack.c.h.bf16 %v181
    %v825 = vunpack.c.l.bf16 %v182
    %v826 = vunpack.c.h.bf16 %v182
    %v827 = vunpack.c.l.bf16 %v183
    %v828 = vunpack.c.h.bf16 %v183
    %v829 = vunpack.c.l.bf16 %v184
    %v830 = vunpack.c.h.bf16 %v184
    %v831 = vunpack.c.l.bf16 %v185
    %v832 = vunpack.c.h.bf16 %v185
    %v833 = vunpack.c.l.bf16 %v186
    %v834 = vunpack.c.h.bf16 %v186
    %v835 = vunpack.c.l.bf16 %v187
    %v836 = vunpack.c.h.bf16 %v187
    %v837 = vunpack.c.l.bf16 %v188
    %v838 = vunpack.c.h.bf16 %v188
    %v839 = vunpack.c.l.bf16 %v189
    %v840 = vunpack.c.h.bf16 %v189
    %v841 = vunpack.c.l.bf16 %v190
    %v842 = vunpack.c.h.bf16 %v190
    %v843 = vunpack.c.l.bf16 %v191
    %v844 = vunpack.c.h.bf16 %v191
    %v845 = vunpack.c.l.bf16 %v192
    %v846 = vunpack.c.h.bf16 %v192
    %v847 = vunpack.c.l.bf16 %v193
    %v848 = vunpack.c.h.bf16 %v193
    %v849 = vunpack.c.l.bf16 %v194
    %v850 = vunpack.c.h.bf16 %v194
    %v851 = vunpack.c.l.bf16 %v195
    %v852 = vunpack.c.h.bf16 %v195
    %v853 = vunpack.c.l.bf16 %v196
    %v854 = vunpack.c.h.bf16 %v196
    %v855 = vunpack.c.l.bf16 %v197
    %v856 = vunpack.c.h.bf16 %v197
    %v857 = vunpack.c.l.bf16 %v198
    %v858 = vunpack.c.h.bf16 %v198
    %v859 = vunpack.c.l.bf16 %v199
    %v860 = vunpack.c.h.bf16 %v199
    %v861 = vunpack.c.l.bf16 %v200
    %v862 = vunpack.c.h.bf16 %v200
    %v863 = vunpack.c.l.bf16 %v201
    %v864 = vunpack.c.h.bf16 %v201
    %v865 = vunpack.c.l.bf16 %v202
    %v866 = vunpack.c.h.bf16 %v202
    %v867 = vunpack.c.l.bf16 %v203
    %v868 = vunpack.c.h.bf16 %v203
    %v869 = vunpack.c.l.bf16 %v204
    %v870 = vunpack.c.h.bf16 %v204
    %v871 = vunpack.c.l.bf16 %v205
    %v872 = vunpack.c.h.bf16 %v205
    %v873 = vunpack.c.l.bf16 %v206
    %v874 = vunpack.c.h.bf16 %v206
    %v875 = vunpack.c.l.bf16 %v207
    %v876 = vunpack.c.h.bf16 %v207
    %v877 = vunpack.c.l.bf16 %v208
    %v878 = vunpack.c.h.bf16 %v208
    %v879 = vunpack.c.l.bf16 %v209
    %v880 = vunpack.c.h.bf16 %v209
    %v881 = vunpack.c.l.bf16 %v210
    %v882 = vunpack.c.h.bf16 %v210
    %v883 = vunpack.c.l.bf16 %v211
    %v884 = vunpack.c.h.bf16 %v211
    %v885 = vunpack.c.l.bf16 %v212
    %v886 = vunpack.c.h.bf16 %v212
    %v887 = vunpack.c.l.bf16 %v213
    %v888 = vunpack.c.h.bf16 %v213
    %v889 = vunpack.c.l.bf16 %v214
    %v890 = vunpack.c.h.bf16 %v214
    %v891 = vunpack.c.l.bf16 %v215
    %v892 = vunpack.c.h.bf16 %v215
    %v893 = vunpack.c.l.bf16 %v216
    %v894 = vunpack.c.h.bf16 %v216
    %v895 = vunpack.c.l.bf16 %v217
    %v896 = vunpack.c.h.bf16 %v217
    %v897 = vunpack.c.l.bf16 %v218
    %v898 = vunpack.c.h.bf16 %v218
    %v899 = vunpack.c.l.bf16 %v219
    %v900 = vunpack.c.h.bf16 %v219
    %v901 = vunpack.c.l.bf16 %v220
    %v902 = vunpack.c.h.bf16 %v220
    %v903 = vunpack.c.l.bf16 %v221
    %v904 = vunpack.c.h.bf16 %v221
    %v905 = vunpack.c.l.bf16 %v222
    %v906 = vunpack.c.h.bf16 %v222
    %v907 = vunpack.c.l.bf16 %v223
    %v908 = vunpack.c.h.bf16 %v223
    %v909 = vunpack.c.l.bf16 %v224
    %v910 = vunpack.c.h.bf16 %v224
    %v911 = vunpack.c.l.bf16 %v225
    %v912 = vunpack.c.h.bf16 %v225
    %v913 = vunpack.c.l.bf16 %v226
    %v914 = vunpack.c.h.bf16 %v226
    %v915 = vunpack.c.l.bf16 %v227
    %v916 = vunpack.c.h.bf16 %v227
    %v917 = vunpack.c.l.bf16 %v228
    %v918 = vunpack.c.h.bf16 %v228
    %v919 = vunpack.c.l.bf16 %v229
    %v920 = vunpack.c.h.bf16 %v229
    %v921 = vunpack.c.l.bf16 %v230
    %v922 = vunpack.c.h.bf16 %v230
    %v923 = vunpack.c.l.bf16 %v231
    %v924 = vunpack.c.h.bf16 %v231
    %v925 = vunpack.c.l.bf16 %v232
    %v926 = vunpack.c.h.bf16 %v232
    %v927 = vunpack.c.l.bf16 %v233
    %v928 = vunpack.c.h.bf16 %v233
    %v929 = vunpack.c.l.bf16 %v234
    %v930 = vunpack.c.h.bf16 %v234
    %v931 = vunpack.c.l.bf16 %v235
    %v932 = vunpack.c.h.bf16 %v235
    %v933 = vunpack.c.l.bf16 %v236
    %v934 = vunpack.c.h.bf16 %v236
    %v935 = vunpack.c.l.bf16 %v237
    %v936 = vunpack.c.h.bf16 %v237
    %v937 = vunpack.c.l.bf16 %v238
    %v938 = vunpack.c.h.bf16 %v238
    %v939 = vunpack.c.l.bf16 %v239
    %v940 = vunpack.c.h.bf16 %v239
    %v941 = vunpack.c.l.bf16 %v240
    %v942 = vunpack.c.h.bf16 %v240
    %v943 = vunpack.c.l.bf16 %v241
    %v944 = vunpack.c.h.bf16 %v241
    %v945 = vunpack.c.l.bf16 %v242
    %v946 = vunpack.c.h.bf16 %v242
    %v947 = vunpack.c.l.bf16 %v243
    %v948 = vunpack.c.h.bf16 %v243
    %v949 = vunpack.c.l.bf16 %v244
    %v950 = vunpack.c.h.bf16 %v244
    %v951 = vunpack.c.l.bf16 %v245
    %v952 = vunpack.c.h.bf16 %v245
    %v953 = vunpack.c.l.bf16 %v246
    %v954 = vunpack.c.h.bf16 %v246
    %v955 = vunpack.c.l.bf16 %v247
    %v956 = vunpack.c.h.bf16 %v247
    %v957 = vunpack.c.l.bf16 %v248
    %v958 = vunpack.c.h.bf16 %v248
    %v959 = vunpack.c.l.bf16 %v249
    %v960 = vunpack.c.h.bf16 %v249
    %v961 = vunpack.c.l.bf16 %v250
    %v962 = vunpack.c.h.bf16 %v250
    %v963 = vunpack.c.l.bf16 %v251
    %v964 = vunpack.c.h.bf16 %v251
    %v965 = vunpack.c.l.bf16 %v252
    %v966 = vunpack.c.h.bf16 %v252
    %v967 = vunpack.c.l.bf16 %v253
    %v968 = vunpack.c.h.bf16 %v253
    %v969 = vunpack.c.l.bf16 %v254
    %v970 = vunpack.c.h.bf16 %v254
    %v971 = vunpack.c.l.bf16 %v255
    %v972 = vunpack.c.h.bf16 %v255
    %v973 = vunpack.c.l.bf16 %v256
    %v974 = vunpack.c.h.bf16 %v256
    %v975 = vunpack.c.l.bf16 %v257
    %v976 = vunpack.c.h.bf16 %v257
    %v977 = vunpack.c.l.bf16 %v258
    %v978 = vunpack.c.h.bf16 %v258
    %v979 = vunpack.c.l.bf16 %v259
    %v980 = vunpack.c.h.bf16 %v259
    %v981 = vunpack.c.l.bf16 %v260
    %v982 = vunpack.c.h.bf16 %v260
    %v983 = vunpack.c.l.bf16 %v261
    %v984 = vunpack.c.h.bf16 %v261
    %v985 = vunpack.c.l.bf16 %v262
    %v986 = vunpack.c.h.bf16 %v262
    %v987 = vunpack.c.l.bf16 %v263
    %v988 = vunpack.c.h.bf16 %v263
    %v989 = vunpack.c.l.bf16 %v264
    %v990 = vunpack.c.h.bf16 %v264
    %v991 = vunpack.c.l.bf16 %v265
    %v992 = vunpack.c.h.bf16 %v265
    %v993 = vunpack.c.l.bf16 %v266
    %v994 = vunpack.c.h.bf16 %v266
    %v995 = vunpack.c.l.bf16 %v267
    %v996 = vunpack.c.h.bf16 %v267
    %v997 = vunpack.c.l.bf16 %v268
    %v998 = vunpack.c.h.bf16 %v268
    %v999 = vunpack.c.l.bf16 %v269
    %v1000 = vunpack.c.h.bf16 %v269
    %v1001 = vunpack.c.l.bf16 %v270
    %v1002 = vunpack.c.h.bf16 %v270
    %v1003 = vunpack.c.l.bf16 %v271
    %v1004 = vunpack.c.h.bf16 %v271
    %v1005 = vunpack.c.l.bf16 %v272
    %v1006 = vunpack.c.h.bf16 %v272
    %v1007 = vunpack.c.l.bf16 %v273
    %v1008 = vunpack.c.h.bf16 %v273
    %v1009 = vunpack.c.l.bf16 %v274
    %v1010 = vunpack.c.h.bf16 %v274
    %v1011 = vunpack.c.l.bf16 %v275
    %v1012 = vunpack.c.h.bf16 %v275
    %v1013 = vunpack.c.l.bf16 %v276
    %v1014 = vunpack.c.h.bf16 %v276
    %v1015 = vunpack.c.l.bf16 %v277
    %v1016 = vunpack.c.h.bf16 %v277
    %v1017 = vunpack.c.l.bf16 %v278
    %v1018 = vunpack.c.h.bf16 %v278
    %v1019 = vunpack.c.l.bf16 %v279
    %v1020 = vunpack.c.h.bf16 %v279
    %v1021 = vunpack.c.l.bf16 %v280
    %v1022 = vunpack.c.h.bf16 %v280
    %v1023 = vunpack.c.l.bf16 %v281
    %v1024 = vunpack.c.h.bf16 %v281
    %v1025 = vunpack.c.l.bf16 %v282
    %v1026 = vunpack.c.h.bf16 %v282
    %v1027 = vunpack.c.l.bf16 %v283
    %v1028 = vunpack.c.h.bf16 %v283
    %v1029 = vunpack.c.l.bf16 %v284
    %v1030 = vunpack.c.h.bf16 %v284
    %v1031 = vunpack.c.l.bf16 %v285
    %v1032 = vunpack.c.h.bf16 %v285
    %v1033 = vunpack.c.l.bf16 %v286
    %v1034 = vunpack.c.h.bf16 %v286
    %v1035 = vunpack.c.l.bf16 %v287
    %v1036 = vunpack.c.h.bf16 %v287
    %v1037 = vunpack.c.l.bf16 %v288
    %v1038 = vunpack.c.h.bf16 %v288
    %v1039 = vunpack.c.l.bf16 %v289
    %v1040 = vunpack.c.h.bf16 %v289
    %v1041 = vunpack.c.l.bf16 %v290
    %v1042 = vunpack.c.h.bf16 %v290
    %v1043 = vunpack.c.l.bf16 %v291
    %v1044 = vunpack.c.h.bf16 %v291
    %v1045 = vunpack.c.l.bf16 %v292
    %v1046 = vunpack.c.h.bf16 %v292
    %v1047 = vunpack.c.l.bf16 %v293
    %v1048 = vunpack.c.h.bf16 %v293
    %v1049 = vunpack.c.l.bf16 %v294
    %v1050 = vunpack.c.h.bf16 %v294
    %v1051 = vunpack.c.l.bf16 %v295
    %v1052 = vunpack.c.h.bf16 %v295
    %v1053 = vunpack.c.l.bf16 %v296
    %v1054 = vunpack.c.h.bf16 %v296
    %v1055 = vunpack.c.l.bf16 %v297
    %v1056 = vunpack.c.h.bf16 %v297
    %v1057 = vunpack.c.l.bf16 %v298
    %v1058 = vunpack.c.h.bf16 %v298
    %v1059 = vunpack.c.l.bf16 %v299
    %v1060 = vunpack.c.h.bf16 %v299
    %v1061 = vunpack.c.l.bf16 %v300
    %v1062 = vunpack.c.h.bf16 %v300
    %v1063 = vunpack.c.l.bf16 %v301
    %v1064 = vunpack.c.h.bf16 %v301
    %v1065 = vunpack.c.l.bf16 %v302
    %v1066 = vunpack.c.h.bf16 %v302
    %v1067 = vunpack.c.l.bf16 %v303
    %v1068 = vunpack.c.h.bf16 %v303
    %v1069 = vunpack.c.l.bf16 %v304
    %v1070 = vunpack.c.h.bf16 %v304
    %v1071 = vunpack.c.l.bf16 %v305
    %v1072 = vunpack.c.h.bf16 %v305
    %v1073 = vunpack.c.l.bf16 %v306
    %v1074 = vunpack.c.h.bf16 %v306
    %v1075 = vunpack.c.l.bf16 %v307
    %v1076 = vunpack.c.h.bf16 %v307
    %v1077 = vunpack.c.l.bf16 %v308
    %v1078 = vunpack.c.h.bf16 %v308
    %v1079 = vunpack.c.l.bf16 %v309
    %v1080 = vunpack.c.h.bf16 %v309
    %v1081 = vunpack.c.l.bf16 %v310
    %v1082 = vunpack.c.h.bf16 %v310
    %v1083 = vunpack.c.l.bf16 %v311
    %v1084 = vunpack.c.h.bf16 %v311
    %v1085 = vunpack.c.l.bf16 %v312
    %v1086 = vunpack.c.h.bf16 %v312
    %v1087 = vunpack.c.l.bf16 %v313
    %v1088 = vunpack.c.h.bf16 %v313
    %v1089 = vunpack.c.l.bf16 %v314
    %v1090 = vunpack.c.h.bf16 %v314
    %v1091 = vunpack.c.l.bf16 %v315
    %v1092 = vunpack.c.h.bf16 %v315
    %v1093 = vunpack.c.l.bf16 %v316
    %v1094 = vunpack.c.h.bf16 %v316
    %v1095 = vunpack.c.l.bf16 %v317
    %v1096 = vunpack.c.h.bf16 %v317
    %v1097 = vunpack.c.l.bf16 %v318
    %v1098 = vunpack.c.h.bf16 %v318
    %v1099 = vunpack.c.l.bf16 %v319
    %v1100 = vunpack.c.h.bf16 %v319
    %v1101 = vunpack.c.l.bf16 %v320
    %v1102 = vunpack.c.h.bf16 %v320
    %v1103 = vunpack.c.l.bf16 %v321
    %v1104 = vunpack.c.h.bf16 %v321
    %v1105 = vunpack.c.l.bf16 %v322
    %v1106 = vunpack.c.h.bf16 %v322
    %v1107 = vunpack.c.l.bf16 %v323
    %v1108 = vunpack.c.h.bf16 %v323
    %v1109 = vunpack.c.l.bf16 %v324
    %v1110 = vunpack.c.h.bf16 %v324
    %v1111 = vunpack.c.l.bf16 %v325
    %v1112 = vunpack.c.h.bf16 %v325
    %v1113 = vunpack.c.l.bf16 %v326
    %v1114 = vunpack.c.h.bf16 %v326
    %v1115 = vunpack.c.l.bf16 %v327
    %v1116 = vunpack.c.h.bf16 %v327
    %v1117 = vunpack.c.l.bf16 %v328
    %v1118 = vunpack.c.h.bf16 %v328
    %v1119 = vunpack.c.l.bf16 %v329
    %v1120 = vunpack.c.h.bf16 %v329
    %v1121 = vunpack.c.l.bf16 %v330
    %v1122 = vunpack.c.h.bf16 %v330
    %v1123 = vunpack.c.l.bf16 %v331
    %v1124 = vunpack.c.h.bf16 %v331
    %v1125 = vunpack.c.l.bf16 %v332
    %v1126 = vunpack.c.h.bf16 %v332
    %v1127 = vunpack.c.l.bf16 %v333
    %v1128 = vunpack.c.h.bf16 %v333
    %v1129 = vunpack.c.l.bf16 %v334
    %v1130 = vunpack.c.h.bf16 %v334
    %v1131 = vunpack.c.l.bf16 %v335
    %v1132 = vunpack.c.h.bf16 %v335
    %v1133 = vunpack.c.l.bf16 %v336
    %v1134 = vunpack.c.h.bf16 %v336
    %v1135 = vunpack.c.l.bf16 %v337
    %v1136 = vunpack.c.h.bf16 %v337
    %v1137 = vunpack.c.l.bf16 %v338
    %v1138 = vunpack.c.h.bf16 %v338
    %v1139 = vunpack.c.l.bf16 %v339
    %v1140 = vunpack.c.h.bf16 %v339
    %v1141 = vunpack.c.l.bf16 %v340
    %v1142 = vunpack.c.h.bf16 %v340
    %v1143 = vunpack.c.l.bf16 %v341
    %v1144 = vunpack.c.h.bf16 %v341
    %v1145 = vunpack.c.l.bf16 %v342
    %v1146 = vunpack.c.h.bf16 %v342
    %v1147 = vunpack.c.l.bf16 %v343
    %v1148 = vunpack.c.h.bf16 %v343
    %v1149 = vunpack.c.l.bf16 %v344
    %v1150 = vunpack.c.h.bf16 %v344
    %v1151 = vunpack.c.l.bf16 %v345
    %v1152 = vunpack.c.h.bf16 %v345
    %v1153 = vunpack.c.l.bf16 %v346
    %v1154 = vunpack.c.h.bf16 %v346
    %v1155 = vunpack.c.l.bf16 %v347
    %v1156 = vunpack.c.h.bf16 %v347
    %v1157 = vunpack.c.l.bf16 %v348
    %v1158 = vunpack.c.h.bf16 %v348
    %v1159 = vunpack.c.l.bf16 %v349
    %v1160 = vunpack.c.h.bf16 %v349
    %v1161 = vunpack.c.l.bf16 %v350
    %v1162 = vunpack.c.h.bf16 %v350
    %v1163 = vunpack.c.l.bf16 %v351
    %v1164 = vunpack.c.h.bf16 %v351
    %v1165 = vunpack.c.l.bf16 %v352
    %v1166 = vunpack.c.h.bf16 %v352
    %v1167 = vunpack.c.l.bf16 %v353
    %v1168 = vunpack.c.h.bf16 %v353
    %v1169 = vunpack.c.l.bf16 %v354
    %v1170 = vunpack.c.h.bf16 %v354
    %v1171 = vunpack.c.l.bf16 %v355
    %v1172 = vunpack.c.h.bf16 %v355
    %v1173 = vunpack.c.l.bf16 %v356
    %v1174 = vunpack.c.h.bf16 %v356
    %v1175 = vunpack.c.l.bf16 %v357
    %v1176 = vunpack.c.h.bf16 %v357
    %v1177 = vunpack.c.l.bf16 %v358
    %v1178 = vunpack.c.h.bf16 %v358
    %v1179 = vunpack.c.l.bf16 %v359
    %v1180 = vunpack.c.h.bf16 %v359
    %v1181 = vunpack.c.l.bf16 %v360
    %v1182 = vunpack.c.h.bf16 %v360
    %v1183 = vunpack.c.l.bf16 %v361
    %v1184 = vunpack.c.h.bf16 %v361
    %v1185 = vunpack.c.l.bf16 %v362
    %v1186 = vunpack.c.h.bf16 %v362
    %v1187 = vunpack.c.l.bf16 %v363
    %v1188 = vunpack.c.h.bf16 %v363
    %v1189 = vunpack.c.l.bf16 %v364
    %v1190 = vunpack.c.h.bf16 %v364
    %v1191 = vunpack.c.l.bf16 %v365
    %v1192 = vunpack.c.h.bf16 %v365
    %v1193 = vunpack.c.l.bf16 %v366
    %v1194 = vunpack.c.h.bf16 %v366
    %v1195 = vunpack.c.l.bf16 %v367
    %v1196 = vunpack.c.h.bf16 %v367
    %v1197 = vunpack.c.l.bf16 %v368
    %v1198 = vunpack.c.h.bf16 %v368
    %v1199 = vunpack.c.l.bf16 %v369
    %v1200 = vunpack.c.h.bf16 %v369
    %v1201 = vunpack.c.l.bf16 %v370
    %v1202 = vunpack.c.h.bf16 %v370
    %v1203 = vunpack.c.l.bf16 %v371
    %v1204 = vunpack.c.h.bf16 %v371
    %v1205 = vunpack.c.l.bf16 %v372
    %v1206 = vunpack.c.h.bf16 %v372
    %v1207 = vunpack.c.l.bf16 %v373
    %v1208 = vunpack.c.h.bf16 %v373
    %v1209 = vunpack.c.l.bf16 %v374
    %v1210 = vunpack.c.h.bf16 %v374
    %v1211 = vunpack.c.l.bf16 %v375
    %v1212 = vunpack.c.h.bf16 %v375
    %v1213 = vunpack.c.l.bf16 %v376
    %v1214 = vunpack.c.h.bf16 %v376
    %v1215 = vunpack.c.l.bf16 %v377
    %v1216 = vunpack.c.h.bf16 %v377
    %v1217 = vunpack.c.l.bf16 %v378
    %v1218 = vunpack.c.h.bf16 %v378
    %v1219 = vunpack.c.l.bf16 %v379
    %v1220 = vunpack.c.h.bf16 %v379
    %v1221 = vunpack.c.l.bf16 %v380
    %v1222 = vunpack.c.h.bf16 %v380
    %v1223 = vunpack.c.l.bf16 %v381
    %v1224 = vunpack.c.h.bf16 %v381
    %v1225 = vunpack.c.l.bf16 %v382
    %v1226 = vunpack.c.h.bf16 %v382
    %v1227 = vunpack.c.l.bf16 %v383
    %v1228 = vunpack.c.h.bf16 %v383
    %v1229 = vunpack.c.l.bf16 %v384
    %v1230 = vunpack.c.h.bf16 %v384
    %v1231 = vunpack.c.l.bf16 %v385
    %v1232 = vunpack.c.h.bf16 %v385
    %v1233 = vunpack.c.l.bf16 %v386
    %v1234 = vunpack.c.h.bf16 %v386
    %v1235 = vunpack.c.l.bf16 %v387
    %v1236 = vunpack.c.h.bf16 %v387
    %v1237 = vunpack.c.l.bf16 %v388
    %v1238 = vunpack.c.h.bf16 %v388
    %v1239 = vunpack.c.l.bf16 %v389
    %v1240 = vunpack.c.h.bf16 %v389
    %v1241 = vunpack.c.l.bf16 %v390
    %v1242 = vunpack.c.h.bf16 %v390
    %v1243 = vunpack.c.l.bf16 %v391
    %v1244 = vunpack.c.h.bf16 %v391
    %v1245 = vunpack.c.l.bf16 %v392
    %v1246 = vunpack.c.h.bf16 %v392
    %v1247 = vunpack.c.l.bf16 %v393
    %v1248 = vunpack.c.h.bf16 %v393
    %v1249 = vunpack.c.l.bf16 %v394
    %v1250 = vunpack.c.h.bf16 %v394
    %v1251 = vunpack.c.l.bf16 %v395
    %v1252 = vunpack.c.h.bf16 %v395
    %v1253 = vunpack.c.l.bf16 %v396
    %v1254 = vunpack.c.h.bf16 %v396
    %v1255 = vunpack.c.l.bf16 %v397
    %v1256 = vunpack.c.h.bf16 %v397
    %v1257 = vunpack.c.l.bf16 %v398
    %v1258 = vunpack.c.h.bf16 %v398
    %v1259 = vunpack.c.l.bf16 %v399
    %v1260 = vunpack.c.h.bf16 %v399
    %v1261 = vunpack.c.l.bf16 %v400
    %v1262 = vunpack.c.h.bf16 %v400
    %v1263 = vunpack.c.l.bf16 %v401
    %v1264 = vunpack.c.h.bf16 %v401
    %v1265 = vunpack.c.l.bf16 %v402
    %v1266 = vunpack.c.h.bf16 %v402
    %v1267 = vunpack.c.l.bf16 %v403
    %v1268 = vunpack.c.h.bf16 %v403
    %v1269 = vunpack.c.l.bf16 %v404
    %v1270 = vunpack.c.h.bf16 %v404
    %v1271 = vunpack.c.l.bf16 %v405
    %v1272 = vunpack.c.h.bf16 %v405
    %v1273 = vunpack.c.l.bf16 %v406
    %v1274 = vunpack.c.h.bf16 %v406
    %v1275 = vunpack.c.l.bf16 %v407
    %v1276 = vunpack.c.h.bf16 %v407
    %v1277 = vunpack.c.l.bf16 %v408
    %v1278 = vunpack.c.h.bf16 %v408
    %v1279 = vunpack.c.l.bf16 %v409
    %v1280 = vunpack.c.h.bf16 %v409
    %v1281 = vunpack.c.l.bf16 %v410
    %v1282 = vunpack.c.h.bf16 %v410
    %v1283 = vunpack.c.l.bf16 %v411
    %v1284 = vunpack.c.h.bf16 %v411
    %v1285 = vunpack.c.l.bf16 %v412
    %v1286 = vunpack.c.h.bf16 %v412
    %v1287 = vunpack.c.l.bf16 %v413
    %v1288 = vunpack.c.h.bf16 %v413
    %v1289 = vunpack.c.l.bf16 %v414
    %v1290 = vunpack.c.h.bf16 %v414
    %v1291 = vunpack.c.l.bf16 %v415
    %v1292 = vunpack.c.h.bf16 %v415
    %v1293 = vunpack.c.l.bf16 %v416
    %v1294 = vunpack.c.h.bf16 %v416
    %v1295 = vunpack.c.l.bf16 %v417
    %v1296 = vunpack.c.h.bf16 %v417
    %v1297 = vunpack.c.l.bf16 %v418
    %v1298 = vunpack.c.h.bf16 %v418
    %v1299 = vunpack.c.l.bf16 %v419
    %v1300 = vunpack.c.h.bf16 %v419
    %v1301 = vunpack.c.l.bf16 %v420
    %v1302 = vunpack.c.h.bf16 %v420
    %v1303 = vunpack.c.l.bf16 %v421
    %v1304 = vunpack.c.h.bf16 %v421
    %v1305 = vunpack.c.l.bf16 %v422
    %v1306 = vunpack.c.h.bf16 %v422
    %v1307 = vunpack.c.l.bf16 %v423
    %v1308 = vunpack.c.h.bf16 %v423
    %v1309 = vunpack.c.l.bf16 %v424
    %v1310 = vunpack.c.h.bf16 %v424
    %v1311 = vunpack.c.l.bf16 %v425
    %v1312 = vunpack.c.h.bf16 %v425
    %v1313 = vunpack.c.l.bf16 %v426
    %v1314 = vunpack.c.h.bf16 %v426
    %v1315 = vunpack.c.l.bf16 %v427
    %v1316 = vunpack.c.h.bf16 %v427
    %v1317 = vunpack.c.l.bf16 %v428
    %v1318 = vunpack.c.h.bf16 %v428
    %v1319 = vunpack.c.l.bf16 %v429
    %v1320 = vunpack.c.h.bf16 %v429
    %v1321 = vunpack.c.l.bf16 %v430
    %v1322 = vunpack.c.h.bf16 %v430
    %v1323 = vunpack.c.l.bf16 %v431
    %v1324 = vunpack.c.h.bf16 %v431
    %v1325 = vunpack.c.l.bf16 %v432
    %v1326 = vunpack.c.h.bf16 %v432
    %v1327 = vunpack.c.l.bf16 %v433
    %v1328 = vunpack.c.h.bf16 %v433
    %v1329 = vunpack.c.l.bf16 %v434
    %v1330 = vunpack.c.h.bf16 %v434
    %v1331 = vunpack.c.l.bf16 %v435
    %v1332 = vunpack.c.h.bf16 %v435
    %v1333 = vunpack.c.l.bf16 %v436
    %v1334 = vunpack.c.h.bf16 %v436
    %v1335 = vunpack.c.l.bf16 %v437
    %v1336 = vunpack.c.h.bf16 %v437
    %v1337 = vunpack.c.l.bf16 %v438
    %v1338 = vunpack.c.h.bf16 %v438
    %v1339 = vunpack.c.l.bf16 %v439
    %v1340 = vunpack.c.h.bf16 %v439
    %v1341 = vunpack.c.l.bf16 %v440
    %v1342 = vunpack.c.h.bf16 %v440
    %v1343 = vunpack.c.l.bf16 %v441
    %v1344 = vunpack.c.h.bf16 %v441
    %v1345 = vunpack.c.l.bf16 %v442
    %v1346 = vunpack.c.h.bf16 %v442
    %v1347 = vunpack.c.l.bf16 %v443
    %v1348 = vunpack.c.h.bf16 %v443
    %v1349 = vunpack.c.l.bf16 %v444
    %v1350 = vunpack.c.h.bf16 %v444
    %v1351 = vunpack.c.l.bf16 %v445
    %v1352 = vunpack.c.h.bf16 %v445
    %v1353 = vunpack.c.l.bf16 %v446
    %v1354 = vunpack.c.h.bf16 %v446
    %v1355 = vunpack.c.l.bf16 %v447
    %v1356 = vunpack.c.h.bf16 %v447
    %v1357 = vunpack.c.l.bf16 %v448
    %v1358 = vunpack.c.h.bf16 %v448
    %v1359 = vunpack.c.l.bf16 %v449
    %v1360 = vunpack.c.h.bf16 %v449
    %v1361 = vunpack.c.l.bf16 %v450
    %v1362 = vunpack.c.h.bf16 %v450
    %v1363 = vunpack.c.l.bf16 %v451
    %v1364 = vunpack.c.h.bf16 %v451
    %v1365 = vunpack.c.l.bf16 %v452
    %v1366 = vunpack.c.h.bf16 %v452
    %v1367 = vunpack.c.l.bf16 %v453
    %v1368 = vunpack.c.h.bf16 %v453
    %v1369 = vunpack.c.l.bf16 %v454
    %v1370 = vunpack.c.h.bf16 %v454
    %v1371 = vunpack.c.l.bf16 %v455
    %v1372 = vunpack.c.h.bf16 %v455
    %v1373 = vunpack.c.l.bf16 %v456
    %v1374 = vunpack.c.h.bf16 %v456
    %v1375 = vunpack.c.l.bf16 %v457
    %v1376 = vunpack.c.h.bf16 %v457
    %v1377 = vunpack.c.l.bf16 %v458
    %v1378 = vunpack.c.h.bf16 %v458
    %v1379 = vunpack.c.l.bf16 %v459
    %v1380 = vunpack.c.h.bf16 %v459
    %v1381 = vunpack.c.l.bf16 %v460
    %v1382 = vunpack.c.h.bf16 %v460
    %v1383 = vunpack.c.l.bf16 %v461
    %v1384 = vunpack.c.h.bf16 %v461
    %v1385 = vunpack.c.l.bf16 %v462
    %v1386 = vunpack.c.h.bf16 %v462
    %v1387 = vunpack.c.l.bf16 %v463
    %v1388 = vunpack.c.h.bf16 %v463
    %v1389 = vunpack.c.l.bf16 %v464
    %v1390 = vunpack.c.h.bf16 %v464
    %v1391 = vunpack.c.l.bf16 %v465
    %v1392 = vunpack.c.h.bf16 %v465
    %v1393 = vunpack.c.l.bf16 %v466
    %v1394 = vunpack.c.h.bf16 %v466
    %v1395 = vunpack.c.l.bf16 %v467
    %v1396 = vunpack.c.h.bf16 %v467
    %v1397 = vunpack.c.l.bf16 %v468
    %v1398 = vunpack.c.h.bf16 %v468
    %v1399 = vunpack.c.l.bf16 %v469
    %v1400 = vunpack.c.h.bf16 %v469
    %v1401 = vunpack.c.l.bf16 %v470
    %v1402 = vunpack.c.h.bf16 %v470
    %v1403 = vunpack.c.l.bf16 %v471
    %v1404 = vunpack.c.h.bf16 %v471
    %v1405 = vunpack.c.l.bf16 %v472
    %v1406 = vunpack.c.h.bf16 %v472
    %v1407 = vunpack.c.l.bf16 %v473
    %v1408 = vunpack.c.h.bf16 %v473
    %v1409 = vunpack.c.l.bf16 %v474
    %v1410 = vunpack.c.h.bf16 %v474
    %v1411 = vunpack.c.l.bf16 %v475
    %v1412 = vunpack.c.h.bf16 %v475
    %v1413 = vunpack.c.l.bf16 %v476
    %v1414 = vunpack.c.h.bf16 %v476
    %v1415 = vunpack.c.l.bf16 %v477
    %v1416 = vunpack.c.h.bf16 %v477
    %v1417 = vunpack.c.l.bf16 %v478
    %v1418 = vunpack.c.h.bf16 %v478
    %v1419 = vunpack.c.l.bf16 %v479
    %v1420 = vunpack.c.h.bf16 %v479
    %v1421 = vunpack.c.l.bf16 %v480
    %v1422 = vunpack.c.h.bf16 %v480
    %v1423 = vunpack.c.l.bf16 %v481
    %v1424 = vunpack.c.h.bf16 %v481
    %v1425 = vunpack.c.l.bf16 %v482
    %v1426 = vunpack.c.h.bf16 %v482
    %v1427 = vunpack.c.l.bf16 %v483
    %v1428 = vunpack.c.h.bf16 %v483
    %v1429 = vunpack.c.l.bf16 %v484
    %v1430 = vunpack.c.h.bf16 %v484
    %v1431 = vunpack.c.l.bf16 %v485
    %v1432 = vunpack.c.h.bf16 %v485
    %v1433 = vunpack.c.l.bf16 %v486
    %v1434 = vunpack.c.h.bf16 %v486
    %v1435 = vunpack.c.l.bf16 %v487
    %v1436 = vunpack.c.h.bf16 %v487
    %v1437 = vunpack.c.l.bf16 %v488
    %v1438 = vunpack.c.h.bf16 %v488
    %v1439 = vunpack.c.l.bf16 %v489
    %v1440 = vunpack.c.h.bf16 %v489
    %v1441 = vunpack.c.l.bf16 %v490
    %v1442 = vunpack.c.h.bf16 %v490
    %v1443 = vunpack.c.l.bf16 %v491
    %v1444 = vunpack.c.h.bf16 %v491
    %v1445 = vunpack.c.l.bf16 %v492
    %v1446 = vunpack.c.h.bf16 %v492
    %v1447 = vunpack.c.l.bf16 %v493
    %v1448 = vunpack.c.h.bf16 %v493
    %v1449 = vunpack.c.l.bf16 %v494
    %v1450 = vunpack.c.h.bf16 %v494
    %v1451 = vunpack.c.l.bf16 %v495
    %v1452 = vunpack.c.h.bf16 %v495
    %v1453 = vunpack.c.l.bf16 %v496
    %v1454 = vunpack.c.h.bf16 %v496
    %v1455 = vunpack.c.l.bf16 %v497
    %v1456 = vunpack.c.h.bf16 %v497
    %v1457 = vunpack.c.l.bf16 %v498
    %v1458 = vunpack.c.h.bf16 %v498
    %v1459 = vunpack.c.l.bf16 %v499
    %v1460 = vunpack.c.h.bf16 %v499
    %v1461 = vunpack.c.l.bf16 %v500
    %v1462 = vunpack.c.h.bf16 %v500
    %v1463 = vunpack.c.l.bf16 %v501
    %v1464 = vunpack.c.h.bf16 %v501
    %v1465 = vunpack.c.l.bf16 %v502
    %v1466 = vunpack.c.h.bf16 %v502
    %v1467 = vunpack.c.l.bf16 %v503
    %v1468 = vunpack.c.h.bf16 %v503
    %v1469 = vunpack.c.l.bf16 %v504
    %v1470 = vunpack.c.h.bf16 %v504
    %v1471 = vunpack.c.l.bf16 %v505
    %v1472 = vunpack.c.h.bf16 %v505
    %v1473 = vunpack.c.l.bf16 %v506
    %v1474 = vunpack.c.h.bf16 %v506
    %v1475 = vunpack.c.l.bf16 %v507
    %v1476 = vunpack.c.h.bf16 %v507
    %v1477 = vunpack.c.l.bf16 %v508
    %v1478 = vunpack.c.h.bf16 %v508
    %v1479 = vunpack.c.l.bf16 %v509
    %v1480 = vunpack.c.h.bf16 %v509
    %v1481 = vunpack.c.l.bf16 %v510
    %v1482 = vunpack.c.h.bf16 %v510
    %v1483 = vunpack.c.l.bf16 %v511
    %v1484 = vunpack.c.h.bf16 %v511
    %v1485 = vunpack.c.l.bf16 %v512
    %v1486 = vunpack.c.h.bf16 %v512
    %v1487 = vunpack.c.l.bf16 %v513
    %v1488 = vunpack.c.h.bf16 %v513
    %v1489 = vunpack.c.l.bf16 %v514
    %v1490 = vunpack.c.h.bf16 %v514
    %v1491 = vunpack.c.l.bf16 %v515
    %v1492 = vunpack.c.h.bf16 %v515
    %v1493 = vunpack.c.l.bf16 %v516
    %v1494 = vunpack.c.h.bf16 %v516
    %v1495 = vunpack.c.l.bf16 %v517
    %v1496 = vunpack.c.h.bf16 %v517
    %v1497 = vunpack.c.l.bf16 %v518
    %v1498 = vunpack.c.h.bf16 %v518
    %v1499 = vunpack.c.l.bf16 %v519
    %v1500 = vunpack.c.h.bf16 %v519
    %v1501 = vunpack.c.l.bf16 %v520
    %v1502 = vunpack.c.h.bf16 %v520
    %v1503 = vunpack.c.l.bf16 %v521
    %v1504 = vunpack.c.h.bf16 %v521
    %v1505 = vunpack.c.l.bf16 %v522
    %v1506 = vunpack.c.h.bf16 %v522
    %v1507 = vunpack.c.l.bf16 %v523
    %v1508 = vunpack.c.h.bf16 %v523
    %v1509 = vunpack.c.l.bf16 %v524
    %v1510 = vunpack.c.h.bf16 %v524
    %v1511 = vunpack.c.l.bf16 %v525
    %v1512 = vunpack.c.h.bf16 %v525
    %v1513 = vunpack.c.l.bf16 %v526
    %v1514 = vunpack.c.h.bf16 %v526
    %v1515 = vunpack.c.l.bf16 %v527
    %v1516 = vunpack.c.h.bf16 %v527
    %v1517 = vunpack.c.l.bf16 %v528
    %v1518 = vunpack.c.h.bf16 %v528
    %v1519 = vunpack.c.l.bf16 %v529
    %v1520 = vunpack.c.h.bf16 %v529
    %v1521 = vunpack.c.l.bf16 %v530
    %v1522 = vunpack.c.h.bf16 %v530
    %v1523 = vunpack.c.l.bf16 %v531
    %v1524 = vunpack.c.h.bf16 %v531
    %v1525 = vunpack.c.l.bf16 %v532
    %v1526 = vunpack.c.h.bf16 %v532
    %v1527 = vunpack.c.l.bf16 %v533
    %v1528 = vunpack.c.h.bf16 %v533
    %v1529 = vunpack.c.l.bf16 %v534
    %v1530 = vunpack.c.h.bf16 %v534
    %v1531 = vunpack.c.l.bf16 %v535
    %v1532 = vunpack.c.h.bf16 %v535
    %v1533 = vunpack.c.l.bf16 %v536
    %v1534 = vunpack.c.h.bf16 %v536
    %v1535 = vunpack.c.l.bf16 %v537
    %v1536 = vunpack.c.h.bf16 %v537
    %v1537 = vunpack.c.l.bf16 %v538
    %v1538 = vunpack.c.h.bf16 %v538
    %v1539 = vunpack.c.l.bf16 %v539
    %v1540 = vunpack.c.h.bf16 %v539
    %v1541 = vunpack.c.l.bf16 %v540
    %v1542 = vunpack.c.h.bf16 %v540
    %v1543 = vunpack.c.l.bf16 %v541
    %v1544 = vunpack.c.h.bf16 %v541
    %v1545 = vunpack.c.l.bf16 %v542
    %v1546 = vunpack.c.h.bf16 %v542
    %v1547 = vunpack.c.l.bf16 %v543
    %v1548 = vunpack.c.h.bf16 %v543
    %v1549 = vunpack.c.l.bf16 %v544
    %v1550 = vunpack.c.h.bf16 %v544
    %v1551 = vunpack.c.l.bf16 %v545
    %v1552 = vunpack.c.h.bf16 %v545
    %v1553 = vunpack.c.l.bf16 %v546
    %v1554 = vunpack.c.h.bf16 %v546
    %v1555 = vunpack.c.l.bf16 %v547
    %v1556 = vunpack.c.h.bf16 %v547
    %v1557 = vunpack.c.l.bf16 %v548
    %v1558 = vunpack.c.h.bf16 %v548
    %v1559 = vunpack.c.l.bf16 %v549
    %v1560 = vunpack.c.h.bf16 %v549
    %v1561 = vunpack.c.l.bf16 %v550
    %v1562 = vunpack.c.h.bf16 %v550
    %v1563 = vunpack.c.l.bf16 %v551
    %v1564 = vunpack.c.h.bf16 %v551
    %v1565 = vunpack.c.l.bf16 %v552
    %v1566 = vunpack.c.h.bf16 %v552
    %v1567 = vunpack.c.l.bf16 %v553
    %v1568 = vunpack.c.h.bf16 %v553
    %v1569 = vunpack.c.l.bf16 %v554
    %v1570 = vunpack.c.h.bf16 %v554
    %v1571 = vunpack.c.l.bf16 %v555
    %v1572 = vunpack.c.h.bf16 %v555
    %v1573 = vunpack.c.l.bf16 %v556
    %v1574 = vunpack.c.h.bf16 %v556
    %v1575 = vunpack.c.l.bf16 %v557
    %v1576 = vunpack.c.h.bf16 %v557
    %v1577 = vunpack.c.l.bf16 %v558
    %v1578 = vunpack.c.h.bf16 %v558
    %v1579 = vunpack.c.l.bf16 %v559
    %v1580 = vunpack.c.h.bf16 %v559
    %v1581 = vunpack.c.l.bf16 %v560
    %v1582 = vunpack.c.h.bf16 %v560
    %v1583 = vunpack.c.l.bf16 %v561
    %v1584 = vunpack.c.h.bf16 %v561
    %v1585 = vunpack.c.l.bf16 %v562
    %v1586 = vunpack.c.h.bf16 %v562
    %v1587 = vld [vmem:[#allocation7] sm:$0xff]
    %v1588 = vld [vmem:[#allocation7 + $0x8] sm:$0xff]
    %v1589 = vld [vmem:[#allocation7 + $0x10] sm:$0xff]
    %v1590 = vld [vmem:[#allocation7 + $0x18] sm:$0xff]
    %v1591 = vld [vmem:[#allocation2] sm:$0xff]
    %v1592 = vld [vmem:[#allocation2 + $0x8] sm:$0xff]
    %v1593 = vld [vmem:[#allocation2 + $0x10] sm:$0xff]
    %v1594 = vld [vmem:[#allocation2 + $0x18] sm:$0xff]
    %v1595 = vlaneseq
    %v1596 = vshrl.u32 %v1595, 7
    %v1597 = vsub.s32 0, %v1596
    %v1598 = vrot.slane %v1587, %v1597
    %1600 = vbcast.lane.b32.xlu0 %v1598, 256
    %v1601 = vpop.permute.xlu0 %1600
    %s1603 = sor.u32 256, 8
    %1604 = vbcast.lane.b32.xlu0 %v1598, %s1603
    %v1605 = vpop.permute.xlu0 %1604
    %s1607 = sor.u32 256, 16
    %1608 = vbcast.lane.b32.xlu0 %v1598, %s1607
    %v1609 = vpop.permute.xlu0 %1608
    %s1611 = sor.u32 256, 24
    %1612 = vbcast.lane.b32.xlu0 %v1598, %s1611
    %v1613 = vpop.permute.xlu0 %1612
    %s1615 = sor.u32 256, 32
    %1616 = vbcast.lane.b32.xlu0 %v1598, %s1615
    %v1617 = vpop.permute.xlu0 %1616
    %s1619 = sor.u32 256, 40
    %1620 = vbcast.lane.b32.xlu0 %v1598, %s1619
    %v1621 = vpop.permute.xlu0 %1620
    %s1623 = sor.u32 256, 48
    %1624 = vbcast.lane.b32.xlu0 %v1598, %s1623
    %v1625 = vpop.permute.xlu0 %1624
    %s1627 = sor.u32 256, 56
    %1628 = vbcast.lane.b32.xlu0 %v1598, %s1627
    %v1629 = vpop.permute.xlu0 %1628
    %s1631 = sor.u32 256, 64
    %1632 = vbcast.lane.b32.xlu0 %v1598, %s1631
    %v1633 = vpop.permute.xlu0 %1632
    %s1635 = sor.u32 256, 72
    %1636 = vbcast.lane.b32.xlu0 %v1598, %s1635
    %v1637 = vpop.permute.xlu0 %1636
    %s1639 = sor.u32 256, 80
    %1640 = vbcast.lane.b32.xlu0 %v1598, %s1639
    %v1641 = vpop.permute.xlu0 %1640
    %s1643 = sor.u32 256, 88
    %1644 = vbcast.lane.b32.xlu0 %v1598, %s1643
    %v1645 = vpop.permute.xlu0 %1644
    %s1647 = sor.u32 256, 96
    %1648 = vbcast.lane.b32.xlu0 %v1598, %s1647
    %v1649 = vpop.permute.xlu0 %1648
    %s1651 = sor.u32 256, 104
    %1652 = vbcast.lane.b32.xlu0 %v1598, %s1651
    %v1653 = vpop.permute.xlu0 %1652
    %s1655 = sor.u32 256, 112
    %1656 = vbcast.lane.b32.xlu0 %v1598, %s1655
    %v1657 = vpop.permute.xlu0 %1656
    %s1659 = sor.u32 256, 120
    %1660 = vbcast.lane.b32.xlu0 %v1598, %s1659
    %v1661 = vpop.permute.xlu0 %1660
    %v1662 = vlaneseq
    %v1663 = vshrl.u32 %v1662, 7
    %v1664 = vsub.s32 0, %v1663
    %v1665 = vrot.slane %v1588, %v1664
    %1667 = vbcast.lane.b32.xlu0 %v1665, 256
    %v1668 = vpop.permute.xlu0 %1667
    %s1670 = sor.u32 256, 8
    %1671 = vbcast.lane.b32.xlu0 %v1665, %s1670
    %v1672 = vpop.permute.xlu0 %1671
    %s1674 = sor.u32 256, 16
    %1675 = vbcast.lane.b32.xlu0 %v1665, %s1674
    %v1676 = vpop.permute.xlu0 %1675
    %s1678 = sor.u32 256, 24
    %1679 = vbcast.lane.b32.xlu0 %v1665, %s1678
    %v1680 = vpop.permute.xlu0 %1679
    %s1682 = sor.u32 256, 32
    %1683 = vbcast.lane.b32.xlu0 %v1665, %s1682
    %v1684 = vpop.permute.xlu0 %1683
    %s1686 = sor.u32 256, 40
    %1687 = vbcast.lane.b32.xlu0 %v1665, %s1686
    %v1688 = vpop.permute.xlu0 %1687
    %s1690 = sor.u32 256, 48
    %1691 = vbcast.lane.b32.xlu0 %v1665, %s1690
    %v1692 = vpop.permute.xlu0 %1691
    %s1694 = sor.u32 256, 56
    %1695 = vbcast.lane.b32.xlu0 %v1665, %s1694
    %v1696 = vpop.permute.xlu0 %1695
    %s1698 = sor.u32 256, 64
    %1699 = vbcast.lane.b32.xlu0 %v1665, %s1698
    %v1700 = vpop.permute.xlu0 %1699
    %s1702 = sor.u32 256, 72
    %1703 = vbcast.lane.b32.xlu0 %v1665, %s1702
    %v1704 = vpop.permute.xlu0 %1703
    %s1706 = sor.u32 256, 80
    %1707 = vbcast.lane.b32.xlu0 %v1665, %s1706
    %v1708 = vpop.permute.xlu0 %1707
    %s1710 = sor.u32 256, 88
    %1711 = vbcast.lane.b32.xlu0 %v1665, %s1710
    %v1712 = vpop.permute.xlu0 %1711
    %s1714 = sor.u32 256, 96
    %1715 = vbcast.lane.b32.xlu0 %v1665, %s1714
    %v1716 = vpop.permute.xlu0 %1715
    %s1718 = sor.u32 256, 104
    %1719 = vbcast.lane.b32.xlu0 %v1665, %s1718
    %v1720 = vpop.permute.xlu0 %1719
    %s1722 = sor.u32 256, 112
    %1723 = vbcast.lane.b32.xlu0 %v1665, %s1722
    %v1724 = vpop.permute.xlu0 %1723
    %s1726 = sor.u32 256, 120
    %1727 = vbcast.lane.b32.xlu0 %v1665, %s1726
    %v1728 = vpop.permute.xlu0 %1727
    %v1729 = vlaneseq
    %v1730 = vshrl.u32 %v1729, 7
    %v1731 = vsub.s32 1, %v1730
    %v1732 = vrot.slane %v1587, %v1731
    %1734 = vbcast.lane.b32.xlu0 %v1732, 256
    %v1735 = vpop.permute.xlu0 %1734
    %s1737 = sor.u32 256, 8
    %1738 = vbcast.lane.b32.xlu0 %v1732, %s1737
    %v1739 = vpop.permute.xlu0 %1738
    %s1741 = sor.u32 256, 16
    %1742 = vbcast.lane.b32.xlu0 %v1732, %s1741
    %v1743 = vpop.permute.xlu0 %1742
    %s1745 = sor.u32 256, 24
    %1746 = vbcast.lane.b32.xlu0 %v1732, %s1745
    %v1747 = vpop.permute.xlu0 %1746
    %s1749 = sor.u32 256, 32
    %1750 = vbcast.lane.b32.xlu0 %v1732, %s1749
    %v1751 = vpop.permute.xlu0 %1750
    %s1753 = sor.u32 256, 40
    %1754 = vbcast.lane.b32.xlu0 %v1732, %s1753
    %v1755 = vpop.permute.xlu0 %1754
    %s1757 = sor.u32 256, 48
    %1758 = vbcast.lane.b32.xlu0 %v1732, %s1757
    %v1759 = vpop.permute.xlu0 %1758
    %s1761 = sor.u32 256, 56
    %1762 = vbcast.lane.b32.xlu0 %v1732, %s1761
    %v1763 = vpop.permute.xlu0 %1762
    %s1765 = sor.u32 256, 64
    %1766 = vbcast.lane.b32.xlu0 %v1732, %s1765
    %v1767 = vpop.permute.xlu0 %1766
    %s1769 = sor.u32 256, 72
    %1770 = vbcast.lane.b32.xlu0 %v1732, %s1769
    %v1771 = vpop.permute.xlu0 %1770
    %s1773 = sor.u32 256, 80
    %1774 = vbcast.lane.b32.xlu0 %v1732, %s1773
    %v1775 = vpop.permute.xlu0 %1774
    %s1777 = sor.u32 256, 88
    %1778 = vbcast.lane.b32.xlu0 %v1732, %s1777
    %v1779 = vpop.permute.xlu0 %1778
    %s1781 = sor.u32 256, 96
    %1782 = vbcast.lane.b32.xlu0 %v1732, %s1781
    %v1783 = vpop.permute.xlu0 %1782
    %s1785 = sor.u32 256, 104
    %1786 = vbcast.lane.b32.xlu0 %v1732, %s1785
    %v1787 = vpop.permute.xlu0 %1786
    %s1789 = sor.u32 256, 112
    %1790 = vbcast.lane.b32.xlu0 %v1732, %s1789
    %v1791 = vpop.permute.xlu0 %1790
    %s1793 = sor.u32 256, 120
    %1794 = vbcast.lane.b32.xlu0 %v1732, %s1793
    %v1795 = vpop.permute.xlu0 %1794
    %v1796 = vlaneseq
    %v1797 = vshrl.u32 %v1796, 7
    %v1798 = vsub.s32 1, %v1797
    %v1799 = vrot.slane %v1588, %v1798
    %1801 = vbcast.lane.b32.xlu0 %v1799, 256
    %v1802 = vpop.permute.xlu0 %1801
    %s1804 = sor.u32 256, 8
    %1805 = vbcast.lane.b32.xlu0 %v1799, %s1804
    %v1806 = vpop.permute.xlu0 %1805
    %s1808 = sor.u32 256, 16
    %1809 = vbcast.lane.b32.xlu0 %v1799, %s1808
    %v1810 = vpop.permute.xlu0 %1809
    %s1812 = sor.u32 256, 24
    %1813 = vbcast.lane.b32.xlu0 %v1799, %s1812
    %v1814 = vpop.permute.xlu0 %1813
    %s1816 = sor.u32 256, 32
    %1817 = vbcast.lane.b32.xlu0 %v1799, %s1816
    %v1818 = vpop.permute.xlu0 %1817
    %s1820 = sor.u32 256, 40
    %1821 = vbcast.lane.b32.xlu0 %v1799, %s1820
    %v1822 = vpop.permute.xlu0 %1821
    %s1824 = sor.u32 256, 48
    %1825 = vbcast.lane.b32.xlu0 %v1799, %s1824
    %v1826 = vpop.permute.xlu0 %1825
    %s1828 = sor.u32 256, 56
    %1829 = vbcast.lane.b32.xlu0 %v1799, %s1828
    %v1830 = vpop.permute.xlu0 %1829
    %s1832 = sor.u32 256, 64
    %1833 = vbcast.lane.b32.xlu0 %v1799, %s1832
    %v1834 = vpop.permute.xlu0 %1833
    %s1836 = sor.u32 256, 72
    %1837 = vbcast.lane.b32.xlu0 %v1799, %s1836
    %v1838 = vpop.permute.xlu0 %1837
    %s1840 = sor.u32 256, 80
    %1841 = vbcast.lane.b32.xlu0 %v1799, %s1840
    %v1842 = vpop.permute.xlu0 %1841
    %s1844 = sor.u32 256, 88
    %1845 = vbcast.lane.b32.xlu0 %v1799, %s1844
    %v1846 = vpop.permute.xlu0 %1845
    %s1848 = sor.u32 256, 96
    %1849 = vbcast.lane.b32.xlu0 %v1799, %s1848
    %v1850 = vpop.permute.xlu0 %1849
    %s1852 = sor.u32 256, 104
    %1853 = vbcast.lane.b32.xlu0 %v1799, %s1852
    %v1854 = vpop.permute.xlu0 %1853
    %s1856 = sor.u32 256, 112
    %1857 = vbcast.lane.b32.xlu0 %v1799, %s1856
    %v1858 = vpop.permute.xlu0 %1857
    %s1860 = sor.u32 256, 120
    %1861 = vbcast.lane.b32.xlu0 %v1799, %s1860
    %v1862 = vpop.permute.xlu0 %1861
    %v1863 = vlaneseq
    %v1864 = vshrl.u32 %v1863, 7
    %v1865 = vsub.s32 2, %v1864
    %v1866 = vrot.slane %v1587, %v1865
    %1868 = vbcast.lane.b32.xlu0 %v1866, 256
    %v1869 = vpop.permute.xlu0 %1868
    %s1871 = sor.u32 256, 8
    %1872 = vbcast.lane.b32.xlu0 %v1866, %s1871
    %v1873 = vpop.permute.xlu0 %1872
    %s1875 = sor.u32 256, 16
    %1876 = vbcast.lane.b32.xlu0 %v1866, %s1875
    %v1877 = vpop.permute.xlu0 %1876
    %s1879 = sor.u32 256, 24
    %1880 = vbcast.lane.b32.xlu0 %v1866, %s1879
    %v1881 = vpop.permute.xlu0 %1880
    %s1883 = sor.u32 256, 32
    %1884 = vbcast.lane.b32.xlu0 %v1866, %s1883
    %v1885 = vpop.permute.xlu0 %1884
    %s1887 = sor.u32 256, 40
    %1888 = vbcast.lane.b32.xlu0 %v1866, %s1887
    %v1889 = vpop.permute.xlu0 %1888
    %s1891 = sor.u32 256, 48
    %1892 = vbcast.lane.b32.xlu0 %v1866, %s1891
    %v1893 = vpop.permute.xlu0 %1892
    %s1895 = sor.u32 256, 56
    %1896 = vbcast.lane.b32.xlu0 %v1866, %s1895
    %v1897 = vpop.permute.xlu0 %1896
    %s1899 = sor.u32 256, 64
    %1900 = vbcast.lane.b32.xlu0 %v1866, %s1899
    %v1901 = vpop.permute.xlu0 %1900
    %s1903 = sor.u32 256, 72
    %1904 = vbcast.lane.b32.xlu0 %v1866, %s1903
    %v1905 = vpop.permute.xlu0 %1904
    %s1907 = sor.u32 256, 80
    %1908 = vbcast.lane.b32.xlu0 %v1866, %s1907
    %v1909 = vpop.permute.xlu0 %1908
    %s1911 = sor.u32 256, 88
    %1912 = vbcast.lane.b32.xlu0 %v1866, %s1911
    %v1913 = vpop.permute.xlu0 %1912
    %s1915 = sor.u32 256, 96
    %1916 = vbcast.lane.b32.xlu0 %v1866, %s1915
    %v1917 = vpop.permute.xlu0 %1916
    %s1919 = sor.u32 256, 104
    %1920 = vbcast.lane.b32.xlu0 %v1866, %s1919
    %v1921 = vpop.permute.xlu0 %1920
    %s1923 = sor.u32 256, 112
    %1924 = vbcast.lane.b32.xlu0 %v1866, %s1923
    %v1925 = vpop.permute.xlu0 %1924
    %s1927 = sor.u32 256, 120
    %1928 = vbcast.lane.b32.xlu0 %v1866, %s1927
    %v1929 = vpop.permute.xlu0 %1928
    %v1930 = vlaneseq
    %v1931 = vshrl.u32 %v1930, 7
    %v1932 = vsub.s32 2, %v1931
    %v1933 = vrot.slane %v1588, %v1932
    %1935 = vbcast.lane.b32.xlu0 %v1933, 256
    %v1936 = vpop.permute.xlu0 %1935
    %s1938 = sor.u32 256, 8
    %1939 = vbcast.lane.b32.xlu0 %v1933, %s1938
    %v1940 = vpop.permute.xlu0 %1939
    %s1942 = sor.u32 256, 16
    %1943 = vbcast.lane.b32.xlu0 %v1933, %s1942
    %v1944 = vpop.permute.xlu0 %1943
    %s1946 = sor.u32 256, 24
    %1947 = vbcast.lane.b32.xlu0 %v1933, %s1946
    %v1948 = vpop.permute.xlu0 %1947
    %s1950 = sor.u32 256, 32
    %1951 = vbcast.lane.b32.xlu0 %v1933, %s1950
    %v1952 = vpop.permute.xlu0 %1951
    %s1954 = sor.u32 256, 40
    %1955 = vbcast.lane.b32.xlu0 %v1933, %s1954
    %v1956 = vpop.permute.xlu0 %1955
    %s1958 = sor.u32 256, 48
    %1959 = vbcast.lane.b32.xlu0 %v1933, %s1958
    %v1960 = vpop.permute.xlu0 %1959
    %s1962 = sor.u32 256, 56
    %1963 = vbcast.lane.b32.xlu0 %v1933, %s1962
    %v1964 = vpop.permute.xlu0 %1963
    %s1966 = sor.u32 256, 64
    %1967 = vbcast.lane.b32.xlu0 %v1933, %s1966
    %v1968 = vpop.permute.xlu0 %1967
    %s1970 = sor.u32 256, 72
    %1971 = vbcast.lane.b32.xlu0 %v1933, %s1970
    %v1972 = vpop.permute.xlu0 %1971
    %s1974 = sor.u32 256, 80
    %1975 = vbcast.lane.b32.xlu0 %v1933, %s1974
    %v1976 = vpop.permute.xlu0 %1975
    %s1978 = sor.u32 256, 88
    %1979 = vbcast.lane.b32.xlu0 %v1933, %s1978
    %v1980 = vpop.permute.xlu0 %1979
    %s1982 = sor.u32 256, 96
    %1983 = vbcast.lane.b32.xlu0 %v1933, %s1982
    %v1984 = vpop.permute.xlu0 %1983
    %s1986 = sor.u32 256, 104
    %1987 = vbcast.lane.b32.xlu0 %v1933, %s1986
    %v1988 = vpop.permute.xlu0 %1987
    %s1990 = sor.u32 256, 112
    %1991 = vbcast.lane.b32.xlu0 %v1933, %s1990
    %v1992 = vpop.permute.xlu0 %1991
    %s1994 = sor.u32 256, 120
    %1995 = vbcast.lane.b32.xlu0 %v1933, %s1994
    %v1996 = vpop.permute.xlu0 %1995
    %v1997 = vlaneseq
    %v1998 = vshrl.u32 %v1997, 7
    %v1999 = vsub.s32 3, %v1998
    %v2000 = vrot.slane %v1587, %v1999
    %2002 = vbcast.lane.b32.xlu0 %v2000, 256
    %v2003 = vpop.permute.xlu0 %2002
    %s2005 = sor.u32 256, 8
    %2006 = vbcast.lane.b32.xlu0 %v2000, %s2005
    %v2007 = vpop.permute.xlu0 %2006
    %s2009 = sor.u32 256, 16
    %2010 = vbcast.lane.b32.xlu0 %v2000, %s2009
    %v2011 = vpop.permute.xlu0 %2010
    %s2013 = sor.u32 256, 24
    %2014 = vbcast.lane.b32.xlu0 %v2000, %s2013
    %v2015 = vpop.permute.xlu0 %2014
    %s2017 = sor.u32 256, 32
    %2018 = vbcast.lane.b32.xlu0 %v2000, %s2017
    %v2019 = vpop.permute.xlu0 %2018
    %s2021 = sor.u32 256, 40
    %2022 = vbcast.lane.b32.xlu0 %v2000, %s2021
    %v2023 = vpop.permute.xlu0 %2022
    %s2025 = sor.u32 256, 48
    %2026 = vbcast.lane.b32.xlu0 %v2000, %s2025
    %v2027 = vpop.permute.xlu0 %2026
    %s2029 = sor.u32 256, 56
    %2030 = vbcast.lane.b32.xlu0 %v2000, %s2029
    %v2031 = vpop.permute.xlu0 %2030
    %s2033 = sor.u32 256, 64
    %2034 = vbcast.lane.b32.xlu0 %v2000, %s2033
    %v2035 = vpop.permute.xlu0 %2034
    %s2037 = sor.u32 256, 72
    %2038 = vbcast.lane.b32.xlu0 %v2000, %s2037
    %v2039 = vpop.permute.xlu0 %2038
    %s2041 = sor.u32 256, 80
    %2042 = vbcast.lane.b32.xlu0 %v2000, %s2041
    %v2043 = vpop.permute.xlu0 %2042
    %s2045 = sor.u32 256, 88
    %2046 = vbcast.lane.b32.xlu0 %v2000, %s2045
    %v2047 = vpop.permute.xlu0 %2046
    %s2049 = sor.u32 256, 96
    %2050 = vbcast.lane.b32.xlu0 %v2000, %s2049
    %v2051 = vpop.permute.xlu0 %2050
    %s2053 = sor.u32 256, 104
    %2054 = vbcast.lane.b32.xlu0 %v2000, %s2053
    %v2055 = vpop.permute.xlu0 %2054
    %s2057 = sor.u32 256, 112
    %2058 = vbcast.lane.b32.xlu0 %v2000, %s2057
    %v2059 = vpop.permute.xlu0 %2058
    %s2061 = sor.u32 256, 120
    %2062 = vbcast.lane.b32.xlu0 %v2000, %s2061
    %v2063 = vpop.permute.xlu0 %2062
    %v2064 = vlaneseq
    %v2065 = vshrl.u32 %v2064, 7
    %v2066 = vsub.s32 3, %v2065
    %v2067 = vrot.slane %v1588, %v2066
    %2069 = vbcast.lane.b32.xlu0 %v2067, 256
    %v2070 = vpop.permute.xlu0 %2069
    %s2072 = sor.u32 256, 8
    %2073 = vbcast.lane.b32.xlu0 %v2067, %s2072
    %v2074 = vpop.permute.xlu0 %2073
    %s2076 = sor.u32 256, 16
    %2077 = vbcast.lane.b32.xlu0 %v2067, %s2076
    %v2078 = vpop.permute.xlu0 %2077
    %s2080 = sor.u32 256, 24
    %2081 = vbcast.lane.b32.xlu0 %v2067, %s2080
    %v2082 = vpop.permute.xlu0 %2081
    %s2084 = sor.u32 256, 32
    %2085 = vbcast.lane.b32.xlu0 %v2067, %s2084
    %v2086 = vpop.permute.xlu0 %2085
    %s2088 = sor.u32 256, 40
    %2089 = vbcast.lane.b32.xlu0 %v2067, %s2088
    %v2090 = vpop.permute.xlu0 %2089
    %s2092 = sor.u32 256, 48
    %2093 = vbcast.lane.b32.xlu0 %v2067, %s2092
    %v2094 = vpop.permute.xlu0 %2093
    %s2096 = sor.u32 256, 56
    %2097 = vbcast.lane.b32.xlu0 %v2067, %s2096
    %v2098 = vpop.permute.xlu0 %2097
    %s2100 = sor.u32 256, 64
    %2101 = vbcast.lane.b32.xlu0 %v2067, %s2100
    %v2102 = vpop.permute.xlu0 %2101
    %s2104 = sor.u32 256, 72
    %2105 = vbcast.lane.b32.xlu0 %v2067, %s2104
    %v2106 = vpop.permute.xlu0 %2105
    %s2108 = sor.u32 256, 80
    %2109 = vbcast.lane.b32.xlu0 %v2067, %s2108
    %v2110 = vpop.permute.xlu0 %2109
    %s2112 = sor.u32 256, 88
    %2113 = vbcast.lane.b32.xlu0 %v2067, %s2112
    %v2114 = vpop.permute.xlu0 %2113
    %s2116 = sor.u32 256, 96
    %2117 = vbcast.lane.b32.xlu0 %v2067, %s2116
    %v2118 = vpop.permute.xlu0 %2117
    %s2120 = sor.u32 256, 104
    %2121 = vbcast.lane.b32.xlu0 %v2067, %s2120
    %v2122 = vpop.permute.xlu0 %2121
    %s2124 = sor.u32 256, 112
    %2125 = vbcast.lane.b32.xlu0 %v2067, %s2124
    %v2126 = vpop.permute.xlu0 %2125
    %s2128 = sor.u32 256, 120
    %2129 = vbcast.lane.b32.xlu0 %v2067, %s2128
    %v2130 = vpop.permute.xlu0 %2129
    %v2131 = vlaneseq
    %v2132 = vshrl.u32 %v2131, 7
    %v2133 = vsub.s32 4, %v2132
    %v2134 = vrot.slane %v1587, %v2133
    %2136 = vbcast.lane.b32.xlu0 %v2134, 256
    %v2137 = vpop.permute.xlu0 %2136
    %s2139 = sor.u32 256, 8
    %2140 = vbcast.lane.b32.xlu0 %v2134, %s2139
    %v2141 = vpop.permute.xlu0 %2140
    %s2143 = sor.u32 256, 16
    %2144 = vbcast.lane.b32.xlu0 %v2134, %s2143
    %v2145 = vpop.permute.xlu0 %2144
    %s2147 = sor.u32 256, 24
    %2148 = vbcast.lane.b32.xlu0 %v2134, %s2147
    %v2149 = vpop.permute.xlu0 %2148
    %s2151 = sor.u32 256, 32
    %2152 = vbcast.lane.b32.xlu0 %v2134, %s2151
    %v2153 = vpop.permute.xlu0 %2152
    %s2155 = sor.u32 256, 40
    %2156 = vbcast.lane.b32.xlu0 %v2134, %s2155
    %v2157 = vpop.permute.xlu0 %2156
    %s2159 = sor.u32 256, 48
    %2160 = vbcast.lane.b32.xlu0 %v2134, %s2159
    %v2161 = vpop.permute.xlu0 %2160
    %s2163 = sor.u32 256, 56
    %2164 = vbcast.lane.b32.xlu0 %v2134, %s2163
    %v2165 = vpop.permute.xlu0 %2164
    %s2167 = sor.u32 256, 64
    %2168 = vbcast.lane.b32.xlu0 %v2134, %s2167
    %v2169 = vpop.permute.xlu0 %2168
    %s2171 = sor.u32 256, 72
    %2172 = vbcast.lane.b32.xlu0 %v2134, %s2171
    %v2173 = vpop.permute.xlu0 %2172
    %s2175 = sor.u32 256, 80
    %2176 = vbcast.lane.b32.xlu0 %v2134, %s2175
    %v2177 = vpop.permute.xlu0 %2176
    %s2179 = sor.u32 256, 88
    %2180 = vbcast.lane.b32.xlu0 %v2134, %s2179
    %v2181 = vpop.permute.xlu0 %2180
    %s2183 = sor.u32 256, 96
    %2184 = vbcast.lane.b32.xlu0 %v2134, %s2183
    %v2185 = vpop.permute.xlu0 %2184
    %s2187 = sor.u32 256, 104
    %2188 = vbcast.lane.b32.xlu0 %v2134, %s2187
    %v2189 = vpop.permute.xlu0 %2188
    %s2191 = sor.u32 256, 112
    %2192 = vbcast.lane.b32.xlu0 %v2134, %s2191
    %v2193 = vpop.permute.xlu0 %2192
    %s2195 = sor.u32 256, 120
    %2196 = vbcast.lane.b32.xlu0 %v2134, %s2195
    %v2197 = vpop.permute.xlu0 %2196
    %v2198 = vlaneseq
    %v2199 = vshrl.u32 %v2198, 7
    %v2200 = vsub.s32 4, %v2199
    %v2201 = vrot.slane %v1588, %v2200
    %2203 = vbcast.lane.b32.xlu0 %v2201, 256
    %v2204 = vpop.permute.xlu0 %2203
    %s2206 = sor.u32 256, 8
    %2207 = vbcast.lane.b32.xlu0 %v2201, %s2206
    %v2208 = vpop.permute.xlu0 %2207
    %s2210 = sor.u32 256, 16
    %2211 = vbcast.lane.b32.xlu0 %v2201, %s2210
    %v2212 = vpop.permute.xlu0 %2211
    %s2214 = sor.u32 256, 24
    %2215 = vbcast.lane.b32.xlu0 %v2201, %s2214
    %v2216 = vpop.permute.xlu0 %2215
    %s2218 = sor.u32 256, 32
    %2219 = vbcast.lane.b32.xlu0 %v2201, %s2218
    %v2220 = vpop.permute.xlu0 %2219
    %s2222 = sor.u32 256, 40
    %2223 = vbcast.lane.b32.xlu0 %v2201, %s2222
    %v2224 = vpop.permute.xlu0 %2223
    %s2226 = sor.u32 256, 48
    %2227 = vbcast.lane.b32.xlu0 %v2201, %s2226
    %v2228 = vpop.permute.xlu0 %2227
    %s2230 = sor.u32 256, 56
    %2231 = vbcast.lane.b32.xlu0 %v2201, %s2230
    %v2232 = vpop.permute.xlu0 %2231
    %s2234 = sor.u32 256, 64
    %2235 = vbcast.lane.b32.xlu0 %v2201, %s2234
    %v2236 = vpop.permute.xlu0 %2235
    %s2238 = sor.u32 256, 72
    %2239 = vbcast.lane.b32.xlu0 %v2201, %s2238
    %v2240 = vpop.permute.xlu0 %2239
    %s2242 = sor.u32 256, 80
    %2243 = vbcast.lane.b32.xlu0 %v2201, %s2242
    %v2244 = vpop.permute.xlu0 %2243
    %s2246 = sor.u32 256, 88
    %2247 = vbcast.lane.b32.xlu0 %v2201, %s2246
    %v2248 = vpop.permute.xlu0 %2247
    %s2250 = sor.u32 256, 96
    %2251 = vbcast.lane.b32.xlu0 %v2201, %s2250
    %v2252 = vpop.permute.xlu0 %2251
    %s2254 = sor.u32 256, 104
    %2255 = vbcast.lane.b32.xlu0 %v2201, %s2254
    %v2256 = vpop.permute.xlu0 %2255
    %s2258 = sor.u32 256, 112
    %2259 = vbcast.lane.b32.xlu0 %v2201, %s2258
    %v2260 = vpop.permute.xlu0 %2259
    %s2262 = sor.u32 256, 120
    %2263 = vbcast.lane.b32.xlu0 %v2201, %s2262
    %v2264 = vpop.permute.xlu0 %2263
    %v2265 = vlaneseq
    %v2266 = vshrl.u32 %v2265, 7
    %v2267 = vsub.s32 5, %v2266
    %v2268 = vrot.slane %v1587, %v2267
    %2270 = vbcast.lane.b32.xlu0 %v2268, 256
    %v2271 = vpop.permute.xlu0 %2270
    %s2273 = sor.u32 256, 8
    %2274 = vbcast.lane.b32.xlu0 %v2268, %s2273
    %v2275 = vpop.permute.xlu0 %2274
    %s2277 = sor.u32 256, 16
    %2278 = vbcast.lane.b32.xlu0 %v2268, %s2277
    %v2279 = vpop.permute.xlu0 %2278
    %s2281 = sor.u32 256, 24
    %2282 = vbcast.lane.b32.xlu0 %v2268, %s2281
    %v2283 = vpop.permute.xlu0 %2282
    %s2285 = sor.u32 256, 32
    %2286 = vbcast.lane.b32.xlu0 %v2268, %s2285
    %v2287 = vpop.permute.xlu0 %2286
    %s2289 = sor.u32 256, 40
    %2290 = vbcast.lane.b32.xlu0 %v2268, %s2289
    %v2291 = vpop.permute.xlu0 %2290
    %s2293 = sor.u32 256, 48
    %2294 = vbcast.lane.b32.xlu0 %v2268, %s2293
    %v2295 = vpop.permute.xlu0 %2294
    %s2297 = sor.u32 256, 56
    %2298 = vbcast.lane.b32.xlu0 %v2268, %s2297
    %v2299 = vpop.permute.xlu0 %2298
    %s2301 = sor.u32 256, 64
    %2302 = vbcast.lane.b32.xlu0 %v2268, %s2301
    %v2303 = vpop.permute.xlu0 %2302
    %s2305 = sor.u32 256, 72
    %2306 = vbcast.lane.b32.xlu0 %v2268, %s2305
    %v2307 = vpop.permute.xlu0 %2306
    %s2309 = sor.u32 256, 80
    %2310 = vbcast.lane.b32.xlu0 %v2268, %s2309
    %v2311 = vpop.permute.xlu0 %2310
    %s2313 = sor.u32 256, 88
    %2314 = vbcast.lane.b32.xlu0 %v2268, %s2313
    %v2315 = vpop.permute.xlu0 %2314
    %s2317 = sor.u32 256, 96
    %2318 = vbcast.lane.b32.xlu0 %v2268, %s2317
    %v2319 = vpop.permute.xlu0 %2318
    %s2321 = sor.u32 256, 104
    %2322 = vbcast.lane.b32.xlu0 %v2268, %s2321
    %v2323 = vpop.permute.xlu0 %2322
    %s2325 = sor.u32 256, 112
    %2326 = vbcast.lane.b32.xlu0 %v2268, %s2325
    %v2327 = vpop.permute.xlu0 %2326
    %s2329 = sor.u32 256, 120
    %2330 = vbcast.lane.b32.xlu0 %v2268, %s2329
    %v2331 = vpop.permute.xlu0 %2330
    %v2332 = vlaneseq
    %v2333 = vshrl.u32 %v2332, 7
    %v2334 = vsub.s32 5, %v2333
    %v2335 = vrot.slane %v1588, %v2334
    %2337 = vbcast.lane.b32.xlu0 %v2335, 256
    %v2338 = vpop.permute.xlu0 %2337
    %s2340 = sor.u32 256, 8
    %2341 = vbcast.lane.b32.xlu0 %v2335, %s2340
    %v2342 = vpop.permute.xlu0 %2341
    %s2344 = sor.u32 256, 16
    %2345 = vbcast.lane.b32.xlu0 %v2335, %s2344
    %v2346 = vpop.permute.xlu0 %2345
    %s2348 = sor.u32 256, 24
    %2349 = vbcast.lane.b32.xlu0 %v2335, %s2348
    %v2350 = vpop.permute.xlu0 %2349
    %s2352 = sor.u32 256, 32
    %2353 = vbcast.lane.b32.xlu0 %v2335, %s2352
    %v2354 = vpop.permute.xlu0 %2353
    %s2356 = sor.u32 256, 40
    %2357 = vbcast.lane.b32.xlu0 %v2335, %s2356
    %v2358 = vpop.permute.xlu0 %2357
    %s2360 = sor.u32 256, 48
    %2361 = vbcast.lane.b32.xlu0 %v2335, %s2360
    %v2362 = vpop.permute.xlu0 %2361
    %s2364 = sor.u32 256, 56
    %2365 = vbcast.lane.b32.xlu0 %v2335, %s2364
    %v2366 = vpop.permute.xlu0 %2365
    %s2368 = sor.u32 256, 64
    %2369 = vbcast.lane.b32.xlu0 %v2335, %s2368
    %v2370 = vpop.permute.xlu0 %2369
    %s2372 = sor.u32 256, 72
    %2373 = vbcast.lane.b32.xlu0 %v2335, %s2372
    %v2374 = vpop.permute.xlu0 %2373
    %s2376 = sor.u32 256, 80
    %2377 = vbcast.lane.b32.xlu0 %v2335, %s2376
    %v2378 = vpop.permute.xlu0 %2377
    %s2380 = sor.u32 256, 88
    %2381 = vbcast.lane.b32.xlu0 %v2335, %s2380
    %v2382 = vpop.permute.xlu0 %2381
    %s2384 = sor.u32 256, 96
    %2385 = vbcast.lane.b32.xlu0 %v2335, %s2384
    %v2386 = vpop.permute.xlu0 %2385
    %s2388 = sor.u32 256, 104
    %2389 = vbcast.lane.b32.xlu0 %v2335, %s2388
    %v2390 = vpop.permute.xlu0 %2389
    %s2392 = sor.u32 256, 112
    %2393 = vbcast.lane.b32.xlu0 %v2335, %s2392
    %v2394 = vpop.permute.xlu0 %2393
    %s2396 = sor.u32 256, 120
    %2397 = vbcast.lane.b32.xlu0 %v2335, %s2396
    %v2398 = vpop.permute.xlu0 %2397
    %v2399 = vlaneseq
    %v2400 = vshrl.u32 %v2399, 7
    %v2401 = vsub.s32 6, %v2400
    %v2402 = vrot.slane %v1587, %v2401
    %2404 = vbcast.lane.b32.xlu0 %v2402, 256
    %v2405 = vpop.permute.xlu0 %2404
    %s2407 = sor.u32 256, 8
    %2408 = vbcast.lane.b32.xlu0 %v2402, %s2407
    %v2409 = vpop.permute.xlu0 %2408
    %s2411 = sor.u32 256, 16
    %2412 = vbcast.lane.b32.xlu0 %v2402, %s2411
    %v2413 = vpop.permute.xlu0 %2412
    %s2415 = sor.u32 256, 24
    %2416 = vbcast.lane.b32.xlu0 %v2402, %s2415
    %v2417 = vpop.permute.xlu0 %2416
    %s2419 = sor.u32 256, 32
    %2420 = vbcast.lane.b32.xlu0 %v2402, %s2419
    %v2421 = vpop.permute.xlu0 %2420
    %s2423 = sor.u32 256, 40
    %2424 = vbcast.lane.b32.xlu0 %v2402, %s2423
    %v2425 = vpop.permute.xlu0 %2424
    %s2427 = sor.u32 256, 48
    %2428 = vbcast.lane.b32.xlu0 %v2402, %s2427
    %v2429 = vpop.permute.xlu0 %2428
    %s2431 = sor.u32 256, 56
    %2432 = vbcast.lane.b32.xlu0 %v2402, %s2431
    %v2433 = vpop.permute.xlu0 %2432
    %s2435 = sor.u32 256, 64
    %2436 = vbcast.lane.b32.xlu0 %v2402, %s2435
    %v2437 = vpop.permute.xlu0 %2436
    %s2439 = sor.u32 256, 72
    %2440 = vbcast.lane.b32.xlu0 %v2402, %s2439
    %v2441 = vpop.permute.xlu0 %2440
    %s2443 = sor.u32 256, 80
    %2444 = vbcast.lane.b32.xlu0 %v2402, %s2443
    %v2445 = vpop.permute.xlu0 %2444
    %s2447 = sor.u32 256, 88
    %2448 = vbcast.lane.b32.xlu0 %v2402, %s2447
    %v2449 = vpop.permute.xlu0 %2448
    %s2451 = sor.u32 256, 96
    %2452 = vbcast.lane.b32.xlu0 %v2402, %s2451
    %v2453 = vpop.permute.xlu0 %2452
    %s2455 = sor.u32 256, 104
    %2456 = vbcast.lane.b32.xlu0 %v2402, %s2455
    %v2457 = vpop.permute.xlu0 %2456
    %s2459 = sor.u32 256, 112
    %2460 = vbcast.lane.b32.xlu0 %v2402, %s2459
    %v2461 = vpop.permute.xlu0 %2460
    %s2463 = sor.u32 256, 120
    %2464 = vbcast.lane.b32.xlu0 %v2402, %s2463
    %v2465 = vpop.permute.xlu0 %2464
    %v2466 = vlaneseq
    %v2467 = vshrl.u32 %v2466, 7
    %v2468 = vsub.s32 6, %v2467
    %v2469 = vrot.slane %v1588, %v2468
    %2471 = vbcast.lane.b32.xlu0 %v2469, 256
    %v2472 = vpop.permute.xlu0 %2471
    %s2474 = sor.u32 256, 8
    %2475 = vbcast.lane.b32.xlu0 %v2469, %s2474
    %v2476 = vpop.permute.xlu0 %2475
    %s2478 = sor.u32 256, 16
    %2479 = vbcast.lane.b32.xlu0 %v2469, %s2478
    %v2480 = vpop.permute.xlu0 %2479
    %s2482 = sor.u32 256, 24
    %2483 = vbcast.lane.b32.xlu0 %v2469, %s2482
    %v2484 = vpop.permute.xlu0 %2483
    %s2486 = sor.u32 256, 32
    %2487 = vbcast.lane.b32.xlu0 %v2469, %s2486
    %v2488 = vpop.permute.xlu0 %2487
    %s2490 = sor.u32 256, 40
    %2491 = vbcast.lane.b32.xlu0 %v2469, %s2490
    %v2492 = vpop.permute.xlu0 %2491
    %s2494 = sor.u32 256, 48
    %2495 = vbcast.lane.b32.xlu0 %v2469, %s2494
    %v2496 = vpop.permute.xlu0 %2495
    %s2498 = sor.u32 256, 56
    %2499 = vbcast.lane.b32.xlu0 %v2469, %s2498
    %v2500 = vpop.permute.xlu0 %2499
    %s2502 = sor.u32 256, 64
    %2503 = vbcast.lane.b32.xlu0 %v2469, %s2502
    %v2504 = vpop.permute.xlu0 %2503
    %s2506 = sor.u32 256, 72
    %2507 = vbcast.lane.b32.xlu0 %v2469, %s2506
    %v2508 = vpop.permute.xlu0 %2507
    %s2510 = sor.u32 256, 80
    %2511 = vbcast.lane.b32.xlu0 %v2469, %s2510
    %v2512 = vpop.permute.xlu0 %2511
    %s2514 = sor.u32 256, 88
    %2515 = vbcast.lane.b32.xlu0 %v2469, %s2514
    %v2516 = vpop.permute.xlu0 %2515
    %s2518 = sor.u32 256, 96
    %2519 = vbcast.lane.b32.xlu0 %v2469, %s2518
    %v2520 = vpop.permute.xlu0 %2519
    %s2522 = sor.u32 256, 104
    %2523 = vbcast.lane.b32.xlu0 %v2469, %s2522
    %v2524 = vpop.permute.xlu0 %2523
    %s2526 = sor.u32 256, 112
    %2527 = vbcast.lane.b32.xlu0 %v2469, %s2526
    %v2528 = vpop.permute.xlu0 %2527
    %s2530 = sor.u32 256, 120
    %2531 = vbcast.lane.b32.xlu0 %v2469, %s2530
    %v2532 = vpop.permute.xlu0 %2531
    %v2533 = vlaneseq
    %v2534 = vshrl.u32 %v2533, 7
    %v2535 = vsub.s32 7, %v2534
    %v2536 = vrot.slane %v1587, %v2535
    %2538 = vbcast.lane.b32.xlu0 %v2536, 256
    %v2539 = vpop.permute.xlu0 %2538
    %s2541 = sor.u32 256, 8
    %2542 = vbcast.lane.b32.xlu0 %v2536, %s2541
    %v2543 = vpop.permute.xlu0 %2542
    %s2545 = sor.u32 256, 16
    %2546 = vbcast.lane.b32.xlu0 %v2536, %s2545
    %v2547 = vpop.permute.xlu0 %2546
    %s2549 = sor.u32 256, 24
    %2550 = vbcast.lane.b32.xlu0 %v2536, %s2549
    %v2551 = vpop.permute.xlu0 %2550
    %s2553 = sor.u32 256, 32
    %2554 = vbcast.lane.b32.xlu0 %v2536, %s2553
    %v2555 = vpop.permute.xlu0 %2554
    %s2557 = sor.u32 256, 40
    %2558 = vbcast.lane.b32.xlu0 %v2536, %s2557
    %v2559 = vpop.permute.xlu0 %2558
    %s2561 = sor.u32 256, 48
    %2562 = vbcast.lane.b32.xlu0 %v2536, %s2561
    %v2563 = vpop.permute.xlu0 %2562
    %s2565 = sor.u32 256, 56
    %2566 = vbcast.lane.b32.xlu0 %v2536, %s2565
    %v2567 = vpop.permute.xlu0 %2566
    %s2569 = sor.u32 256, 64
    %2570 = vbcast.lane.b32.xlu0 %v2536, %s2569
    %v2571 = vpop.permute.xlu0 %2570
    %s2573 = sor.u32 256, 72
    %2574 = vbcast.lane.b32.xlu0 %v2536, %s2573
    %v2575 = vpop.permute.xlu0 %2574
    %s2577 = sor.u32 256, 80
    %2578 = vbcast.lane.b32.xlu0 %v2536, %s2577
    %v2579 = vpop.permute.xlu0 %2578
    %s2581 = sor.u32 256, 88
    %2582 = vbcast.lane.b32.xlu0 %v2536, %s2581
    %v2583 = vpop.permute.xlu0 %2582
    %s2585 = sor.u32 256, 96
    %2586 = vbcast.lane.b32.xlu0 %v2536, %s2585
    %v2587 = vpop.permute.xlu0 %2586
    %s2589 = sor.u32 256, 104
    %2590 = vbcast.lane.b32.xlu0 %v2536, %s2589
    %v2591 = vpop.permute.xlu0 %2590
    %s2593 = sor.u32 256, 112
    %2594 = vbcast.lane.b32.xlu0 %v2536, %s2593
    %v2595 = vpop.permute.xlu0 %2594
    %s2597 = sor.u32 256, 120
    %2598 = vbcast.lane.b32.xlu0 %v2536, %s2597
    %v2599 = vpop.permute.xlu0 %2598
    %v2600 = vlaneseq
    %v2601 = vshrl.u32 %v2600, 7
    %v2602 = vsub.s32 7, %v2601
    %v2603 = vrot.slane %v1588, %v2602
    %2605 = vbcast.lane.b32.xlu0 %v2603, 256
    %v2606 = vpop.permute.xlu0 %2605
    %s2608 = sor.u32 256, 8
    %2609 = vbcast.lane.b32.xlu0 %v2603, %s2608
    %v2610 = vpop.permute.xlu0 %2609
    %s2612 = sor.u32 256, 16
    %2613 = vbcast.lane.b32.xlu0 %v2603, %s2612
    %v2614 = vpop.permute.xlu0 %2613
    %s2616 = sor.u32 256, 24
    %2617 = vbcast.lane.b32.xlu0 %v2603, %s2616
    %v2618 = vpop.permute.xlu0 %2617
    %s2620 = sor.u32 256, 32
    %2621 = vbcast.lane.b32.xlu0 %v2603, %s2620
    %v2622 = vpop.permute.xlu0 %2621
    %s2624 = sor.u32 256, 40
    %2625 = vbcast.lane.b32.xlu0 %v2603, %s2624
    %v2626 = vpop.permute.xlu0 %2625
    %s2628 = sor.u32 256, 48
    %2629 = vbcast.lane.b32.xlu0 %v2603, %s2628
    %v2630 = vpop.permute.xlu0 %2629
    %s2632 = sor.u32 256, 56
    %2633 = vbcast.lane.b32.xlu0 %v2603, %s2632
    %v2634 = vpop.permute.xlu0 %2633
    %s2636 = sor.u32 256, 64
    %2637 = vbcast.lane.b32.xlu0 %v2603, %s2636
    %v2638 = vpop.permute.xlu0 %2637
    %s2640 = sor.u32 256, 72
    %2641 = vbcast.lane.b32.xlu0 %v2603, %s2640
    %v2642 = vpop.permute.xlu0 %2641
    %s2644 = sor.u32 256, 80
    %2645 = vbcast.lane.b32.xlu0 %v2603, %s2644
    %v2646 = vpop.permute.xlu0 %2645
    %s2648 = sor.u32 256, 88
    %2649 = vbcast.lane.b32.xlu0 %v2603, %s2648
    %v2650 = vpop.permute.xlu0 %2649
    %s2652 = sor.u32 256, 96
    %2653 = vbcast.lane.b32.xlu0 %v2603, %s2652
    %v2654 = vpop.permute.xlu0 %2653
    %s2656 = sor.u32 256, 104
    %2657 = vbcast.lane.b32.xlu0 %v2603, %s2656
    %v2658 = vpop.permute.xlu0 %2657
    %s2660 = sor.u32 256, 112
    %2661 = vbcast.lane.b32.xlu0 %v2603, %s2660
    %v2662 = vpop.permute.xlu0 %2661
    %s2664 = sor.u32 256, 120
    %2665 = vbcast.lane.b32.xlu0 %v2603, %s2664
    %v2666 = vpop.permute.xlu0 %2665
    %v2667 = vlaneseq
    %v2668 = vshrl.u32 %v2667, 7
    %v2669 = vsub.s32 0, %v2668
    %v2670 = vrot.slane %v1589, %v2669
    %2672 = vbcast.lane.b32.xlu0 %v2670, 256
    %v2673 = vpop.permute.xlu0 %2672
    %s2675 = sor.u32 256, 8
    %2676 = vbcast.lane.b32.xlu0 %v2670, %s2675
    %v2677 = vpop.permute.xlu0 %2676
    %s2679 = sor.u32 256, 16
    %2680 = vbcast.lane.b32.xlu0 %v2670, %s2679
    %v2681 = vpop.permute.xlu0 %2680
    %s2683 = sor.u32 256, 24
    %2684 = vbcast.lane.b32.xlu0 %v2670, %s2683
    %v2685 = vpop.permute.xlu0 %2684
    %s2687 = sor.u32 256, 32
    %2688 = vbcast.lane.b32.xlu0 %v2670, %s2687
    %v2689 = vpop.permute.xlu0 %2688
    %s2691 = sor.u32 256, 40
    %2692 = vbcast.lane.b32.xlu0 %v2670, %s2691
    %v2693 = vpop.permute.xlu0 %2692
    %s2695 = sor.u32 256, 48
    %2696 = vbcast.lane.b32.xlu0 %v2670, %s2695
    %v2697 = vpop.permute.xlu0 %2696
    %s2699 = sor.u32 256, 56
    %2700 = vbcast.lane.b32.xlu0 %v2670, %s2699
    %v2701 = vpop.permute.xlu0 %2700
    %s2703 = sor.u32 256, 64
    %2704 = vbcast.lane.b32.xlu0 %v2670, %s2703
    %v2705 = vpop.permute.xlu0 %2704
    %s2707 = sor.u32 256, 72
    %2708 = vbcast.lane.b32.xlu0 %v2670, %s2707
    %v2709 = vpop.permute.xlu0 %2708
    %s2711 = sor.u32 256, 80
    %2712 = vbcast.lane.b32.xlu0 %v2670, %s2711
    %v2713 = vpop.permute.xlu0 %2712
    %s2715 = sor.u32 256, 88
    %2716 = vbcast.lane.b32.xlu0 %v2670, %s2715
    %v2717 = vpop.permute.xlu0 %2716
    %s2719 = sor.u32 256, 96
    %2720 = vbcast.lane.b32.xlu0 %v2670, %s2719
    %v2721 = vpop.permute.xlu0 %2720
    %s2723 = sor.u32 256, 104
    %2724 = vbcast.lane.b32.xlu0 %v2670, %s2723
    %v2725 = vpop.permute.xlu0 %2724
    %s2727 = sor.u32 256, 112
    %2728 = vbcast.lane.b32.xlu0 %v2670, %s2727
    %v2729 = vpop.permute.xlu0 %2728
    %s2731 = sor.u32 256, 120
    %2732 = vbcast.lane.b32.xlu0 %v2670, %s2731
    %v2733 = vpop.permute.xlu0 %2732
    %v2734 = vlaneseq
    %v2735 = vshrl.u32 %v2734, 7
    %v2736 = vsub.s32 0, %v2735
    %v2737 = vrot.slane %v1590, %v2736
    %2739 = vbcast.lane.b32.xlu0 %v2737, 256
    %v2740 = vpop.permute.xlu0 %2739
    %s2742 = sor.u32 256, 8
    %2743 = vbcast.lane.b32.xlu0 %v2737, %s2742
    %v2744 = vpop.permute.xlu0 %2743
    %s2746 = sor.u32 256, 16
    %2747 = vbcast.lane.b32.xlu0 %v2737, %s2746
    %v2748 = vpop.permute.xlu0 %2747
    %s2750 = sor.u32 256, 24
    %2751 = vbcast.lane.b32.xlu0 %v2737, %s2750
    %v2752 = vpop.permute.xlu0 %2751
    %s2754 = sor.u32 256, 32
    %2755 = vbcast.lane.b32.xlu0 %v2737, %s2754
    %v2756 = vpop.permute.xlu0 %2755
    %s2758 = sor.u32 256, 40
    %2759 = vbcast.lane.b32.xlu0 %v2737, %s2758
    %v2760 = vpop.permute.xlu0 %2759
    %s2762 = sor.u32 256, 48
    %2763 = vbcast.lane.b32.xlu0 %v2737, %s2762
    %v2764 = vpop.permute.xlu0 %2763
    %s2766 = sor.u32 256, 56
    %2767 = vbcast.lane.b32.xlu0 %v2737, %s2766
    %v2768 = vpop.permute.xlu0 %2767
    %s2770 = sor.u32 256, 64
    %2771 = vbcast.lane.b32.xlu0 %v2737, %s2770
    %v2772 = vpop.permute.xlu0 %2771
    %s2774 = sor.u32 256, 72
    %2775 = vbcast.lane.b32.xlu0 %v2737, %s2774
    %v2776 = vpop.permute.xlu0 %2775
    %s2778 = sor.u32 256, 80
    %2779 = vbcast.lane.b32.xlu0 %v2737, %s2778
    %v2780 = vpop.permute.xlu0 %2779
    %s2782 = sor.u32 256, 88
    %2783 = vbcast.lane.b32.xlu0 %v2737, %s2782
    %v2784 = vpop.permute.xlu0 %2783
    %s2786 = sor.u32 256, 96
    %2787 = vbcast.lane.b32.xlu0 %v2737, %s2786
    %v2788 = vpop.permute.xlu0 %2787
    %s2790 = sor.u32 256, 104
    %2791 = vbcast.lane.b32.xlu0 %v2737, %s2790
    %v2792 = vpop.permute.xlu0 %2791
    %s2794 = sor.u32 256, 112
    %2795 = vbcast.lane.b32.xlu0 %v2737, %s2794
    %v2796 = vpop.permute.xlu0 %2795
    %s2798 = sor.u32 256, 120
    %2799 = vbcast.lane.b32.xlu0 %v2737, %s2798
    %v2800 = vpop.permute.xlu0 %2799
    %v2801 = vlaneseq
    %v2802 = vshrl.u32 %v2801, 7
    %v2803 = vsub.s32 1, %v2802
    %v2804 = vrot.slane %v1589, %v2803
    %2806 = vbcast.lane.b32.xlu0 %v2804, 256
    %v2807 = vpop.permute.xlu0 %2806
    %s2809 = sor.u32 256, 8
    %2810 = vbcast.lane.b32.xlu0 %v2804, %s2809
    %v2811 = vpop.permute.xlu0 %2810
    %s2813 = sor.u32 256, 16
    %2814 = vbcast.lane.b32.xlu0 %v2804, %s2813
    %v2815 = vpop.permute.xlu0 %2814
    %s2817 = sor.u32 256, 24
    %2818 = vbcast.lane.b32.xlu0 %v2804, %s2817
    %v2819 = vpop.permute.xlu0 %2818
    %s2821 = sor.u32 256, 32
    %2822 = vbcast.lane.b32.xlu0 %v2804, %s2821
    %v2823 = vpop.permute.xlu0 %2822
    %s2825 = sor.u32 256, 40
    %2826 = vbcast.lane.b32.xlu0 %v2804, %s2825
    %v2827 = vpop.permute.xlu0 %2826
    %s2829 = sor.u32 256, 48
    %2830 = vbcast.lane.b32.xlu0 %v2804, %s2829
    %v2831 = vpop.permute.xlu0 %2830
    %s2833 = sor.u32 256, 56
    %2834 = vbcast.lane.b32.xlu0 %v2804, %s2833
    %v2835 = vpop.permute.xlu0 %2834
    %s2837 = sor.u32 256, 64
    %2838 = vbcast.lane.b32.xlu0 %v2804, %s2837
    %v2839 = vpop.permute.xlu0 %2838
    %s2841 = sor.u32 256, 72
    %2842 = vbcast.lane.b32.xlu0 %v2804, %s2841
    %v2843 = vpop.permute.xlu0 %2842
    %s2845 = sor.u32 256, 80
    %2846 = vbcast.lane.b32.xlu0 %v2804, %s2845
    %v2847 = vpop.permute.xlu0 %2846
    %s2849 = sor.u32 256, 88
    %2850 = vbcast.lane.b32.xlu0 %v2804, %s2849
    %v2851 = vpop.permute.xlu0 %2850
    %s2853 = sor.u32 256, 96
    %2854 = vbcast.lane.b32.xlu0 %v2804, %s2853
    %v2855 = vpop.permute.xlu0 %2854
    %s2857 = sor.u32 256, 104
    %2858 = vbcast.lane.b32.xlu0 %v2804, %s2857
    %v2859 = vpop.permute.xlu0 %2858
    %s2861 = sor.u32 256, 112
    %2862 = vbcast.lane.b32.xlu0 %v2804, %s2861
    %v2863 = vpop.permute.xlu0 %2862
    %s2865 = sor.u32 256, 120
    %2866 = vbcast.lane.b32.xlu0 %v2804, %s2865
    %v2867 = vpop.permute.xlu0 %2866
    %v2868 = vlaneseq
    %v2869 = vshrl.u32 %v2868, 7
    %v2870 = vsub.s32 1, %v2869
    %v2871 = vrot.slane %v1590, %v2870
    %2873 = vbcast.lane.b32.xlu0 %v2871, 256
    %v2874 = vpop.permute.xlu0 %2873
    %s2876 = sor.u32 256, 8
    %2877 = vbcast.lane.b32.xlu0 %v2871, %s2876
    %v2878 = vpop.permute.xlu0 %2877
    %s2880 = sor.u32 256, 16
    %2881 = vbcast.lane.b32.xlu0 %v2871, %s2880
    %v2882 = vpop.permute.xlu0 %2881
    %s2884 = sor.u32 256, 24
    %2885 = vbcast.lane.b32.xlu0 %v2871, %s2884
    %v2886 = vpop.permute.xlu0 %2885
    %s2888 = sor.u32 256, 32
    %2889 = vbcast.lane.b32.xlu0 %v2871, %s2888
    %v2890 = vpop.permute.xlu0 %2889
    %s2892 = sor.u32 256, 40
    %2893 = vbcast.lane.b32.xlu0 %v2871, %s2892
    %v2894 = vpop.permute.xlu0 %2893
    %s2896 = sor.u32 256, 48
    %2897 = vbcast.lane.b32.xlu0 %v2871, %s2896
    %v2898 = vpop.permute.xlu0 %2897
    %s2900 = sor.u32 256, 56
    %2901 = vbcast.lane.b32.xlu0 %v2871, %s2900
    %v2902 = vpop.permute.xlu0 %2901
    %s2904 = sor.u32 256, 64
    %2905 = vbcast.lane.b32.xlu0 %v2871, %s2904
    %v2906 = vpop.permute.xlu0 %2905
    %s2908 = sor.u32 256, 72
    %2909 = vbcast.lane.b32.xlu0 %v2871, %s2908
    %v2910 = vpop.permute.xlu0 %2909
    %s2912 = sor.u32 256, 80
    %2913 = vbcast.lane.b32.xlu0 %v2871, %s2912
    %v2914 = vpop.permute.xlu0 %2913
    %s2916 = sor.u32 256, 88
    %2917 = vbcast.lane.b32.xlu0 %v2871, %s2916
    %v2918 = vpop.permute.xlu0 %2917
    %s2920 = sor.u32 256, 96
    %2921 = vbcast.lane.b32.xlu0 %v2871, %s2920
    %v2922 = vpop.permute.xlu0 %2921
    %s2924 = sor.u32 256, 104
    %2925 = vbcast.lane.b32.xlu0 %v2871, %s2924
    %v2926 = vpop.permute.xlu0 %2925
    %s2928 = sor.u32 256, 112
    %2929 = vbcast.lane.b32.xlu0 %v2871, %s2928
    %v2930 = vpop.permute.xlu0 %2929
    %s2932 = sor.u32 256, 120
    %2933 = vbcast.lane.b32.xlu0 %v2871, %s2932
    %v2934 = vpop.permute.xlu0 %2933
    %v2935 = vlaneseq
    %v2936 = vshrl.u32 %v2935, 7
    %v2937 = vsub.s32 2, %v2936
    %v2938 = vrot.slane %v1589, %v2937
    %2940 = vbcast.lane.b32.xlu0 %v2938, 256
    %v2941 = vpop.permute.xlu0 %2940
    %s2943 = sor.u32 256, 8
    %2944 = vbcast.lane.b32.xlu0 %v2938, %s2943
    %v2945 = vpop.permute.xlu0 %2944
    %s2947 = sor.u32 256, 16
    %2948 = vbcast.lane.b32.xlu0 %v2938, %s2947
    %v2949 = vpop.permute.xlu0 %2948
    %s2951 = sor.u32 256, 24
    %2952 = vbcast.lane.b32.xlu0 %v2938, %s2951
    %v2953 = vpop.permute.xlu0 %2952
    %s2955 = sor.u32 256, 32
    %2956 = vbcast.lane.b32.xlu0 %v2938, %s2955
    %v2957 = vpop.permute.xlu0 %2956
    %s2959 = sor.u32 256, 40
    %2960 = vbcast.lane.b32.xlu0 %v2938, %s2959
    %v2961 = vpop.permute.xlu0 %2960
    %s2963 = sor.u32 256, 48
    %2964 = vbcast.lane.b32.xlu0 %v2938, %s2963
    %v2965 = vpop.permute.xlu0 %2964
    %s2967 = sor.u32 256, 56
    %2968 = vbcast.lane.b32.xlu0 %v2938, %s2967
    %v2969 = vpop.permute.xlu0 %2968
    %s2971 = sor.u32 256, 64
    %2972 = vbcast.lane.b32.xlu0 %v2938, %s2971
    %v2973 = vpop.permute.xlu0 %2972
    %s2975 = sor.u32 256, 72
    %2976 = vbcast.lane.b32.xlu0 %v2938, %s2975
    %v2977 = vpop.permute.xlu0 %2976
    %s2979 = sor.u32 256, 80
    %2980 = vbcast.lane.b32.xlu0 %v2938, %s2979
    %v2981 = vpop.permute.xlu0 %2980
    %s2983 = sor.u32 256, 88
    %2984 = vbcast.lane.b32.xlu0 %v2938, %s2983
    %v2985 = vpop.permute.xlu0 %2984
    %s2987 = sor.u32 256, 96
    %2988 = vbcast.lane.b32.xlu0 %v2938, %s2987
    %v2989 = vpop.permute.xlu0 %2988
    %s2991 = sor.u32 256, 104
    %2992 = vbcast.lane.b32.xlu0 %v2938, %s2991
    %v2993 = vpop.permute.xlu0 %2992
    %s2995 = sor.u32 256, 112
    %2996 = vbcast.lane.b32.xlu0 %v2938, %s2995
    %v2997 = vpop.permute.xlu0 %2996
    %s2999 = sor.u32 256, 120
    %3000 = vbcast.lane.b32.xlu0 %v2938, %s2999
    %v3001 = vpop.permute.xlu0 %3000
    %v3002 = vlaneseq
    %v3003 = vshrl.u32 %v3002, 7
    %v3004 = vsub.s32 2, %v3003
    %v3005 = vrot.slane %v1590, %v3004
    %3007 = vbcast.lane.b32.xlu0 %v3005, 256
    %v3008 = vpop.permute.xlu0 %3007
    %s3010 = sor.u32 256, 8
    %3011 = vbcast.lane.b32.xlu0 %v3005, %s3010
    %v3012 = vpop.permute.xlu0 %3011
    %s3014 = sor.u32 256, 16
    %3015 = vbcast.lane.b32.xlu0 %v3005, %s3014
    %v3016 = vpop.permute.xlu0 %3015
    %s3018 = sor.u32 256, 24
    %3019 = vbcast.lane.b32.xlu0 %v3005, %s3018
    %v3020 = vpop.permute.xlu0 %3019
    %s3022 = sor.u32 256, 32
    %3023 = vbcast.lane.b32.xlu0 %v3005, %s3022
    %v3024 = vpop.permute.xlu0 %3023
    %s3026 = sor.u32 256, 40
    %3027 = vbcast.lane.b32.xlu0 %v3005, %s3026
    %v3028 = vpop.permute.xlu0 %3027
    %s3030 = sor.u32 256, 48
    %3031 = vbcast.lane.b32.xlu0 %v3005, %s3030
    %v3032 = vpop.permute.xlu0 %3031
    %s3034 = sor.u32 256, 56
    %3035 = vbcast.lane.b32.xlu0 %v3005, %s3034
    %v3036 = vpop.permute.xlu0 %3035
    %s3038 = sor.u32 256, 64
    %3039 = vbcast.lane.b32.xlu0 %v3005, %s3038
    %v3040 = vpop.permute.xlu0 %3039
    %s3042 = sor.u32 256, 72
    %3043 = vbcast.lane.b32.xlu0 %v3005, %s3042
    %v3044 = vpop.permute.xlu0 %3043
    %s3046 = sor.u32 256, 80
    %3047 = vbcast.lane.b32.xlu0 %v3005, %s3046
    %v3048 = vpop.permute.xlu0 %3047
    %s3050 = sor.u32 256, 88
    %3051 = vbcast.lane.b32.xlu0 %v3005, %s3050
    %v3052 = vpop.permute.xlu0 %3051
    %s3054 = sor.u32 256, 96
    %3055 = vbcast.lane.b32.xlu0 %v3005, %s3054
    %v3056 = vpop.permute.xlu0 %3055
    %s3058 = sor.u32 256, 104
    %3059 = vbcast.lane.b32.xlu0 %v3005, %s3058
    %v3060 = vpop.permute.xlu0 %3059
    %s3062 = sor.u32 256, 112
    %3063 = vbcast.lane.b32.xlu0 %v3005, %s3062
    %v3064 = vpop.permute.xlu0 %3063
    %s3066 = sor.u32 256, 120
    %3067 = vbcast.lane.b32.xlu0 %v3005, %s3066
    %v3068 = vpop.permute.xlu0 %3067
    %v3069 = vlaneseq
    %v3070 = vshrl.u32 %v3069, 7
    %v3071 = vsub.s32 3, %v3070
    %v3072 = vrot.slane %v1589, %v3071
    %3074 = vbcast.lane.b32.xlu0 %v3072, 256
    %v3075 = vpop.permute.xlu0 %3074
    %s3077 = sor.u32 256, 8
    %3078 = vbcast.lane.b32.xlu0 %v3072, %s3077
    %v3079 = vpop.permute.xlu0 %3078
    %s3081 = sor.u32 256, 16
    %3082 = vbcast.lane.b32.xlu0 %v3072, %s3081
    %v3083 = vpop.permute.xlu0 %3082
    %s3085 = sor.u32 256, 24
    %3086 = vbcast.lane.b32.xlu0 %v3072, %s3085
    %v3087 = vpop.permute.xlu0 %3086
    %s3089 = sor.u32 256, 32
    %3090 = vbcast.lane.b32.xlu0 %v3072, %s3089
    %v3091 = vpop.permute.xlu0 %3090
    %s3093 = sor.u32 256, 40
    %3094 = vbcast.lane.b32.xlu0 %v3072, %s3093
    %v3095 = vpop.permute.xlu0 %3094
    %s3097 = sor.u32 256, 48
    %3098 = vbcast.lane.b32.xlu0 %v3072, %s3097
    %v3099 = vpop.permute.xlu0 %3098
    %s3101 = sor.u32 256, 56
    %3102 = vbcast.lane.b32.xlu0 %v3072, %s3101
    %v3103 = vpop.permute.xlu0 %3102
    %s3105 = sor.u32 256, 64
    %3106 = vbcast.lane.b32.xlu0 %v3072, %s3105
    %v3107 = vpop.permute.xlu0 %3106
    %s3109 = sor.u32 256, 72
    %3110 = vbcast.lane.b32.xlu0 %v3072, %s3109
    %v3111 = vpop.permute.xlu0 %3110
    %s3113 = sor.u32 256, 80
    %3114 = vbcast.lane.b32.xlu0 %v3072, %s3113
    %v3115 = vpop.permute.xlu0 %3114
    %s3117 = sor.u32 256, 88
    %3118 = vbcast.lane.b32.xlu0 %v3072, %s3117
    %v3119 = vpop.permute.xlu0 %3118
    %s3121 = sor.u32 256, 96
    %3122 = vbcast.lane.b32.xlu0 %v3072, %s3121
    %v3123 = vpop.permute.xlu0 %3122
    %s3125 = sor.u32 256, 104
    %3126 = vbcast.lane.b32.xlu0 %v3072, %s3125
    %v3127 = vpop.permute.xlu0 %3126
    %s3129 = sor.u32 256, 112
    %3130 = vbcast.lane.b32.xlu0 %v3072, %s3129
    %v3131 = vpop.permute.xlu0 %3130
    %s3133 = sor.u32 256, 120
    %3134 = vbcast.lane.b32.xlu0 %v3072, %s3133
    %v3135 = vpop.permute.xlu0 %3134
    %v3136 = vlaneseq
    %v3137 = vshrl.u32 %v3136, 7
    %v3138 = vsub.s32 3, %v3137
    %v3139 = vrot.slane %v1590, %v3138
    %3141 = vbcast.lane.b32.xlu0 %v3139, 256
    %v3142 = vpop.permute.xlu0 %3141
    %s3144 = sor.u32 256, 8
    %3145 = vbcast.lane.b32.xlu0 %v3139, %s3144
    %v3146 = vpop.permute.xlu0 %3145
    %s3148 = sor.u32 256, 16
    %3149 = vbcast.lane.b32.xlu0 %v3139, %s3148
    %v3150 = vpop.permute.xlu0 %3149
    %s3152 = sor.u32 256, 24
    %3153 = vbcast.lane.b32.xlu0 %v3139, %s3152
    %v3154 = vpop.permute.xlu0 %3153
    %s3156 = sor.u32 256, 32
    %3157 = vbcast.lane.b32.xlu0 %v3139, %s3156
    %v3158 = vpop.permute.xlu0 %3157
    %s3160 = sor.u32 256, 40
    %3161 = vbcast.lane.b32.xlu0 %v3139, %s3160
    %v3162 = vpop.permute.xlu0 %3161
    %s3164 = sor.u32 256, 48
    %3165 = vbcast.lane.b32.xlu0 %v3139, %s3164
    %v3166 = vpop.permute.xlu0 %3165
    %s3168 = sor.u32 256, 56
    %3169 = vbcast.lane.b32.xlu0 %v3139, %s3168
    %v3170 = vpop.permute.xlu0 %3169
    %s3172 = sor.u32 256, 64
    %3173 = vbcast.lane.b32.xlu0 %v3139, %s3172
    %v3174 = vpop.permute.xlu0 %3173
    %s3176 = sor.u32 256, 72
    %3177 = vbcast.lane.b32.xlu0 %v3139, %s3176
    %v3178 = vpop.permute.xlu0 %3177
    %s3180 = sor.u32 256, 80
    %3181 = vbcast.lane.b32.xlu0 %v3139, %s3180
    %v3182 = vpop.permute.xlu0 %3181
    %s3184 = sor.u32 256, 88
    %3185 = vbcast.lane.b32.xlu0 %v3139, %s3184
    %v3186 = vpop.permute.xlu0 %3185
    %s3188 = sor.u32 256, 96
    %3189 = vbcast.lane.b32.xlu0 %v3139, %s3188
    %v3190 = vpop.permute.xlu0 %3189
    %s3192 = sor.u32 256, 104
    %3193 = vbcast.lane.b32.xlu0 %v3139, %s3192
    %v3194 = vpop.permute.xlu0 %3193
    %s3196 = sor.u32 256, 112
    %3197 = vbcast.lane.b32.xlu0 %v3139, %s3196
    %v3198 = vpop.permute.xlu0 %3197
    %s3200 = sor.u32 256, 120
    %3201 = vbcast.lane.b32.xlu0 %v3139, %s3200
    %v3202 = vpop.permute.xlu0 %3201
    %v3203 = vlaneseq
    %v3204 = vshrl.u32 %v3203, 7
    %v3205 = vsub.s32 4, %v3204
    %v3206 = vrot.slane %v1589, %v3205
    %3208 = vbcast.lane.b32.xlu0 %v3206, 256
    %v3209 = vpop.permute.xlu0 %3208
    %s3211 = sor.u32 256, 8
    %3212 = vbcast.lane.b32.xlu0 %v3206, %s3211
    %v3213 = vpop.permute.xlu0 %3212
    %s3215 = sor.u32 256, 16
    %3216 = vbcast.lane.b32.xlu0 %v3206, %s3215
    %v3217 = vpop.permute.xlu0 %3216
    %s3219 = sor.u32 256, 24
    %3220 = vbcast.lane.b32.xlu0 %v3206, %s3219
    %v3221 = vpop.permute.xlu0 %3220
    %s3223 = sor.u32 256, 32
    %3224 = vbcast.lane.b32.xlu0 %v3206, %s3223
    %v3225 = vpop.permute.xlu0 %3224
    %s3227 = sor.u32 256, 40
    %3228 = vbcast.lane.b32.xlu0 %v3206, %s3227
    %v3229 = vpop.permute.xlu0 %3228
    %s3231 = sor.u32 256, 48
    %3232 = vbcast.lane.b32.xlu0 %v3206, %s3231
    %v3233 = vpop.permute.xlu0 %3232
    %s3235 = sor.u32 256, 56
    %3236 = vbcast.lane.b32.xlu0 %v3206, %s3235
    %v3237 = vpop.permute.xlu0 %3236
    %s3239 = sor.u32 256, 64
    %3240 = vbcast.lane.b32.xlu0 %v3206, %s3239
    %v3241 = vpop.permute.xlu0 %3240
    %s3243 = sor.u32 256, 72
    %3244 = vbcast.lane.b32.xlu0 %v3206, %s3243
    %v3245 = vpop.permute.xlu0 %3244
    %s3247 = sor.u32 256, 80
    %3248 = vbcast.lane.b32.xlu0 %v3206, %s3247
    %v3249 = vpop.permute.xlu0 %3248
    %s3251 = sor.u32 256, 88
    %3252 = vbcast.lane.b32.xlu0 %v3206, %s3251
    %v3253 = vpop.permute.xlu0 %3252
    %s3255 = sor.u32 256, 96
    %3256 = vbcast.lane.b32.xlu0 %v3206, %s3255
    %v3257 = vpop.permute.xlu0 %3256
    %s3259 = sor.u32 256, 104
    %3260 = vbcast.lane.b32.xlu0 %v3206, %s3259
    %v3261 = vpop.permute.xlu0 %3260
    %s3263 = sor.u32 256, 112
    %3264 = vbcast.lane.b32.xlu0 %v3206, %s3263
    %v3265 = vpop.permute.xlu0 %3264
    %s3267 = sor.u32 256, 120
    %3268 = vbcast.lane.b32.xlu0 %v3206, %s3267
    %v3269 = vpop.permute.xlu0 %3268
    %v3270 = vlaneseq
    %v3271 = vshrl.u32 %v3270, 7
    %v3272 = vsub.s32 4, %v3271
    %v3273 = vrot.slane %v1590, %v3272
    %3275 = vbcast.lane.b32.xlu0 %v3273, 256
    %v3276 = vpop.permute.xlu0 %3275
    %s3278 = sor.u32 256, 8
    %3279 = vbcast.lane.b32.xlu0 %v3273, %s3278
    %v3280 = vpop.permute.xlu0 %3279
    %s3282 = sor.u32 256, 16
    %3283 = vbcast.lane.b32.xlu0 %v3273, %s3282
    %v3284 = vpop.permute.xlu0 %3283
    %s3286 = sor.u32 256, 24
    %3287 = vbcast.lane.b32.xlu0 %v3273, %s3286
    %v3288 = vpop.permute.xlu0 %3287
    %s3290 = sor.u32 256, 32
    %3291 = vbcast.lane.b32.xlu0 %v3273, %s3290
    %v3292 = vpop.permute.xlu0 %3291
    %s3294 = sor.u32 256, 40
    %3295 = vbcast.lane.b32.xlu0 %v3273, %s3294
    %v3296 = vpop.permute.xlu0 %3295
    %s3298 = sor.u32 256, 48
    %3299 = vbcast.lane.b32.xlu0 %v3273, %s3298
    %v3300 = vpop.permute.xlu0 %3299
    %s3302 = sor.u32 256, 56
    %3303 = vbcast.lane.b32.xlu0 %v3273, %s3302
    %v3304 = vpop.permute.xlu0 %3303
    %s3306 = sor.u32 256, 64
    %3307 = vbcast.lane.b32.xlu0 %v3273, %s3306
    %v3308 = vpop.permute.xlu0 %3307
    %s3310 = sor.u32 256, 72
    %3311 = vbcast.lane.b32.xlu0 %v3273, %s3310
    %v3312 = vpop.permute.xlu0 %3311
    %s3314 = sor.u32 256, 80
    %3315 = vbcast.lane.b32.xlu0 %v3273, %s3314
    %v3316 = vpop.permute.xlu0 %3315
    %s3318 = sor.u32 256, 88
    %3319 = vbcast.lane.b32.xlu0 %v3273, %s3318
    %v3320 = vpop.permute.xlu0 %3319
    %s3322 = sor.u32 256, 96
    %3323 = vbcast.lane.b32.xlu0 %v3273, %s3322
    %v3324 = vpop.permute.xlu0 %3323
    %s3326 = sor.u32 256, 104
    %3327 = vbcast.lane.b32.xlu0 %v3273, %s3326
    %v3328 = vpop.permute.xlu0 %3327
    %s3330 = sor.u32 256, 112
    %3331 = vbcast.lane.b32.xlu0 %v3273, %s3330
    %v3332 = vpop.permute.xlu0 %3331
    %s3334 = sor.u32 256, 120
    %3335 = vbcast.lane.b32.xlu0 %v3273, %s3334
    %v3336 = vpop.permute.xlu0 %3335
    %v3337 = vlaneseq
    %v3338 = vshrl.u32 %v3337, 7
    %v3339 = vsub.s32 5, %v3338
    %v3340 = vrot.slane %v1589, %v3339
    %3342 = vbcast.lane.b32.xlu0 %v3340, 256
    %v3343 = vpop.permute.xlu0 %3342
    %s3345 = sor.u32 256, 8
    %3346 = vbcast.lane.b32.xlu0 %v3340, %s3345
    %v3347 = vpop.permute.xlu0 %3346
    %s3349 = sor.u32 256, 16
    %3350 = vbcast.lane.b32.xlu0 %v3340, %s3349
    %v3351 = vpop.permute.xlu0 %3350
    %s3353 = sor.u32 256, 24
    %3354 = vbcast.lane.b32.xlu0 %v3340, %s3353
    %v3355 = vpop.permute.xlu0 %3354
    %s3357 = sor.u32 256, 32
    %3358 = vbcast.lane.b32.xlu0 %v3340, %s3357
    %v3359 = vpop.permute.xlu0 %3358
    %s3361 = sor.u32 256, 40
    %3362 = vbcast.lane.b32.xlu0 %v3340, %s3361
    %v3363 = vpop.permute.xlu0 %3362
    %s3365 = sor.u32 256, 48
    %3366 = vbcast.lane.b32.xlu0 %v3340, %s3365
    %v3367 = vpop.permute.xlu0 %3366
    %s3369 = sor.u32 256, 56
    %3370 = vbcast.lane.b32.xlu0 %v3340, %s3369
    %v3371 = vpop.permute.xlu0 %3370
    %s3373 = sor.u32 256, 64
    %3374 = vbcast.lane.b32.xlu0 %v3340, %s3373
    %v3375 = vpop.permute.xlu0 %3374
    %s3377 = sor.u32 256, 72
    %3378 = vbcast.lane.b32.xlu0 %v3340, %s3377
    %v3379 = vpop.permute.xlu0 %3378
    %s3381 = sor.u32 256, 80
    %3382 = vbcast.lane.b32.xlu0 %v3340, %s3381
    %v3383 = vpop.permute.xlu0 %3382
    %s3385 = sor.u32 256, 88
    %3386 = vbcast.lane.b32.xlu0 %v3340, %s3385
    %v3387 = vpop.permute.xlu0 %3386
    %s3389 = sor.u32 256, 96
    %3390 = vbcast.lane.b32.xlu0 %v3340, %s3389
    %v3391 = vpop.permute.xlu0 %3390
    %s3393 = sor.u32 256, 104
    %3394 = vbcast.lane.b32.xlu0 %v3340, %s3393
    %v3395 = vpop.permute.xlu0 %3394
    %s3397 = sor.u32 256, 112
    %3398 = vbcast.lane.b32.xlu0 %v3340, %s3397
    %v3399 = vpop.permute.xlu0 %3398
    %s3401 = sor.u32 256, 120
    %3402 = vbcast.lane.b32.xlu0 %v3340, %s3401
    %v3403 = vpop.permute.xlu0 %3402
    %v3404 = vlaneseq
    %v3405 = vshrl.u32 %v3404, 7
    %v3406 = vsub.s32 5, %v3405
    %v3407 = vrot.slane %v1590, %v3406
    %3409 = vbcast.lane.b32.xlu0 %v3407, 256
    %v3410 = vpop.permute.xlu0 %3409
    %s3412 = sor.u32 256, 8
    %3413 = vbcast.lane.b32.xlu0 %v3407, %s3412
    %v3414 = vpop.permute.xlu0 %3413
    %s3416 = sor.u32 256, 16
    %3417 = vbcast.lane.b32.xlu0 %v3407, %s3416
    %v3418 = vpop.permute.xlu0 %3417
    %s3420 = sor.u32 256, 24
    %3421 = vbcast.lane.b32.xlu0 %v3407, %s3420
    %v3422 = vpop.permute.xlu0 %3421
    %s3424 = sor.u32 256, 32
    %3425 = vbcast.lane.b32.xlu0 %v3407, %s3424
    %v3426 = vpop.permute.xlu0 %3425
    %s3428 = sor.u32 256, 40
    %3429 = vbcast.lane.b32.xlu0 %v3407, %s3428
    %v3430 = vpop.permute.xlu0 %3429
    %s3432 = sor.u32 256, 48
    %3433 = vbcast.lane.b32.xlu0 %v3407, %s3432
    %v3434 = vpop.permute.xlu0 %3433
    %s3436 = sor.u32 256, 56
    %3437 = vbcast.lane.b32.xlu0 %v3407, %s3436
    %v3438 = vpop.permute.xlu0 %3437
    %s3440 = sor.u32 256, 64
    %3441 = vbcast.lane.b32.xlu0 %v3407, %s3440
    %v3442 = vpop.permute.xlu0 %3441
    %s3444 = sor.u32 256, 72
    %3445 = vbcast.lane.b32.xlu0 %v3407, %s3444
    %v3446 = vpop.permute.xlu0 %3445
    %s3448 = sor.u32 256, 80
    %3449 = vbcast.lane.b32.xlu0 %v3407, %s3448
    %v3450 = vpop.permute.xlu0 %3449
    %s3452 = sor.u32 256, 88
    %3453 = vbcast.lane.b32.xlu0 %v3407, %s3452
    %v3454 = vpop.permute.xlu0 %3453
    %s3456 = sor.u32 256, 96
    %3457 = vbcast.lane.b32.xlu0 %v3407, %s3456
    %v3458 = vpop.permute.xlu0 %3457
    %s3460 = sor.u32 256, 104
    %3461 = vbcast.lane.b32.xlu0 %v3407, %s3460
    %v3462 = vpop.permute.xlu0 %3461
    %s3464 = sor.u32 256, 112
    %3465 = vbcast.lane.b32.xlu0 %v3407, %s3464
    %v3466 = vpop.permute.xlu0 %3465
    %s3468 = sor.u32 256, 120
    %3469 = vbcast.lane.b32.xlu0 %v3407, %s3468
    %v3470 = vpop.permute.xlu0 %3469
    %v3471 = vlaneseq
    %v3472 = vshrl.u32 %v3471, 7
    %v3473 = vsub.s32 6, %v3472
    %v3474 = vrot.slane %v1589, %v3473
    %3476 = vbcast.lane.b32.xlu0 %v3474, 256
    %v3477 = vpop.permute.xlu0 %3476
    %s3479 = sor.u32 256, 8
    %3480 = vbcast.lane.b32.xlu0 %v3474, %s3479
    %v3481 = vpop.permute.xlu0 %3480
    %s3483 = sor.u32 256, 16
    %3484 = vbcast.lane.b32.xlu0 %v3474, %s3483
    %v3485 = vpop.permute.xlu0 %3484
    %s3487 = sor.u32 256, 24
    %3488 = vbcast.lane.b32.xlu0 %v3474, %s3487
    %v3489 = vpop.permute.xlu0 %3488
    %s3491 = sor.u32 256, 32
    %3492 = vbcast.lane.b32.xlu0 %v3474, %s3491
    %v3493 = vpop.permute.xlu0 %3492
    %s3495 = sor.u32 256, 40
    %3496 = vbcast.lane.b32.xlu0 %v3474, %s3495
    %v3497 = vpop.permute.xlu0 %3496
    %s3499 = sor.u32 256, 48
    %3500 = vbcast.lane.b32.xlu0 %v3474, %s3499
    %v3501 = vpop.permute.xlu0 %3500
    %s3503 = sor.u32 256, 56
    %3504 = vbcast.lane.b32.xlu0 %v3474, %s3503
    %v3505 = vpop.permute.xlu0 %3504
    %s3507 = sor.u32 256, 64
    %3508 = vbcast.lane.b32.xlu0 %v3474, %s3507
    %v3509 = vpop.permute.xlu0 %3508
    %s3511 = sor.u32 256, 72
    %3512 = vbcast.lane.b32.xlu0 %v3474, %s3511
    %v3513 = vpop.permute.xlu0 %3512
    %s3515 = sor.u32 256, 80
    %3516 = vbcast.lane.b32.xlu0 %v3474, %s3515
    %v3517 = vpop.permute.xlu0 %3516
    %s3519 = sor.u32 256, 88
    %3520 = vbcast.lane.b32.xlu0 %v3474, %s3519
    %v3521 = vpop.permute.xlu0 %3520
    %s3523 = sor.u32 256, 96
    %3524 = vbcast.lane.b32.xlu0 %v3474, %s3523
    %v3525 = vpop.permute.xlu0 %3524
    %s3527 = sor.u32 256, 104
    %3528 = vbcast.lane.b32.xlu0 %v3474, %s3527
    %v3529 = vpop.permute.xlu0 %3528
    %s3531 = sor.u32 256, 112
    %3532 = vbcast.lane.b32.xlu0 %v3474, %s3531
    %v3533 = vpop.permute.xlu0 %3532
    %s3535 = sor.u32 256, 120
    %3536 = vbcast.lane.b32.xlu0 %v3474, %s3535
    %v3537 = vpop.permute.xlu0 %3536
    %v3538 = vlaneseq
    %v3539 = vshrl.u32 %v3538, 7
    %v3540 = vsub.s32 6, %v3539
    %v3541 = vrot.slane %v1590, %v3540
    %3543 = vbcast.lane.b32.xlu0 %v3541, 256
    %v3544 = vpop.permute.xlu0 %3543
    %s3546 = sor.u32 256, 8
    %3547 = vbcast.lane.b32.xlu0 %v3541, %s3546
    %v3548 = vpop.permute.xlu0 %3547
    %s3550 = sor.u32 256, 16
    %3551 = vbcast.lane.b32.xlu0 %v3541, %s3550
    %v3552 = vpop.permute.xlu0 %3551
    %s3554 = sor.u32 256, 24
    %3555 = vbcast.lane.b32.xlu0 %v3541, %s3554
    %v3556 = vpop.permute.xlu0 %3555
    %s3558 = sor.u32 256, 32
    %3559 = vbcast.lane.b32.xlu0 %v3541, %s3558
    %v3560 = vpop.permute.xlu0 %3559
    %s3562 = sor.u32 256, 40
    %3563 = vbcast.lane.b32.xlu0 %v3541, %s3562
    %v3564 = vpop.permute.xlu0 %3563
    %s3566 = sor.u32 256, 48
    %3567 = vbcast.lane.b32.xlu0 %v3541, %s3566
    %v3568 = vpop.permute.xlu0 %3567
    %s3570 = sor.u32 256, 56
    %3571 = vbcast.lane.b32.xlu0 %v3541, %s3570
    %v3572 = vpop.permute.xlu0 %3571
    %s3574 = sor.u32 256, 64
    %3575 = vbcast.lane.b32.xlu0 %v3541, %s3574
    %v3576 = vpop.permute.xlu0 %3575
    %s3578 = sor.u32 256, 72
    %3579 = vbcast.lane.b32.xlu0 %v3541, %s3578
    %v3580 = vpop.permute.xlu0 %3579
    %s3582 = sor.u32 256, 80
    %3583 = vbcast.lane.b32.xlu0 %v3541, %s3582
    %v3584 = vpop.permute.xlu0 %3583
    %s3586 = sor.u32 256, 88
    %3587 = vbcast.lane.b32.xlu0 %v3541, %s3586
    %v3588 = vpop.permute.xlu0 %3587
    %s3590 = sor.u32 256, 96
    %3591 = vbcast.lane.b32.xlu0 %v3541, %s3590
    %v3592 = vpop.permute.xlu0 %3591
    %s3594 = sor.u32 256, 104
    %3595 = vbcast.lane.b32.xlu0 %v3541, %s3594
    %v3596 = vpop.permute.xlu0 %3595
    %s3598 = sor.u32 256, 112
    %3599 = vbcast.lane.b32.xlu0 %v3541, %s3598
    %v3600 = vpop.permute.xlu0 %3599
    %s3602 = sor.u32 256, 120
    %3603 = vbcast.lane.b32.xlu0 %v3541, %s3602
    %v3604 = vpop.permute.xlu0 %3603
    %v3605 = vlaneseq
    %v3606 = vshrl.u32 %v3605, 7
    %v3607 = vsub.s32 7, %v3606
    %v3608 = vrot.slane %v1589, %v3607
    %3610 = vbcast.lane.b32.xlu0 %v3608, 256
    %v3611 = vpop.permute.xlu0 %3610
    %s3613 = sor.u32 256, 8
    %3614 = vbcast.lane.b32.xlu0 %v3608, %s3613
    %v3615 = vpop.permute.xlu0 %3614
    %s3617 = sor.u32 256, 16
    %3618 = vbcast.lane.b32.xlu0 %v3608, %s3617
    %v3619 = vpop.permute.xlu0 %3618
    %s3621 = sor.u32 256, 24
    %3622 = vbcast.lane.b32.xlu0 %v3608, %s3621
    %v3623 = vpop.permute.xlu0 %3622
    %s3625 = sor.u32 256, 32
    %3626 = vbcast.lane.b32.xlu0 %v3608, %s3625
    %v3627 = vpop.permute.xlu0 %3626
    %s3629 = sor.u32 256, 40
    %3630 = vbcast.lane.b32.xlu0 %v3608, %s3629
    %v3631 = vpop.permute.xlu0 %3630
    %s3633 = sor.u32 256, 48
    %3634 = vbcast.lane.b32.xlu0 %v3608, %s3633
    %v3635 = vpop.permute.xlu0 %3634
    %s3637 = sor.u32 256, 56
    %3638 = vbcast.lane.b32.xlu0 %v3608, %s3637
    %v3639 = vpop.permute.xlu0 %3638
    %s3641 = sor.u32 256, 64
    %3642 = vbcast.lane.b32.xlu0 %v3608, %s3641
    %v3643 = vpop.permute.xlu0 %3642
    %s3645 = sor.u32 256, 72
    %3646 = vbcast.lane.b32.xlu0 %v3608, %s3645
    %v3647 = vpop.permute.xlu0 %3646
    %s3649 = sor.u32 256, 80
    %3650 = vbcast.lane.b32.xlu0 %v3608, %s3649
    %v3651 = vpop.permute.xlu0 %3650
    %s3653 = sor.u32 256, 88
    %3654 = vbcast.lane.b32.xlu0 %v3608, %s3653
    %v3655 = vpop.permute.xlu0 %3654
    %s3657 = sor.u32 256, 96
    %3658 = vbcast.lane.b32.xlu0 %v3608, %s3657
    %v3659 = vpop.permute.xlu0 %3658
    %s3661 = sor.u32 256, 104
    %3662 = vbcast.lane.b32.xlu0 %v3608, %s3661
    %v3663 = vpop.permute.xlu0 %3662
    %s3665 = sor.u32 256, 112
    %3666 = vbcast.lane.b32.xlu0 %v3608, %s3665
    %v3667 = vpop.permute.xlu0 %3666
    %s3669 = sor.u32 256, 120
    %3670 = vbcast.lane.b32.xlu0 %v3608, %s3669
    %v3671 = vpop.permute.xlu0 %3670
    %v3672 = vlaneseq
    %v3673 = vshrl.u32 %v3672, 7
    %v3674 = vsub.s32 7, %v3673
    %v3675 = vrot.slane %v1590, %v3674
    %3677 = vbcast.lane.b32.xlu0 %v3675, 256
    %v3678 = vpop.permute.xlu0 %3677
    %s3680 = sor.u32 256, 8
    %3681 = vbcast.lane.b32.xlu0 %v3675, %s3680
    %v3682 = vpop.permute.xlu0 %3681
    %s3684 = sor.u32 256, 16
    %3685 = vbcast.lane.b32.xlu0 %v3675, %s3684
    %v3686 = vpop.permute.xlu0 %3685
    %s3688 = sor.u32 256, 24
    %3689 = vbcast.lane.b32.xlu0 %v3675, %s3688
    %v3690 = vpop.permute.xlu0 %3689
    %s3692 = sor.u32 256, 32
    %3693 = vbcast.lane.b32.xlu0 %v3675, %s3692
    %v3694 = vpop.permute.xlu0 %3693
    %s3696 = sor.u32 256, 40
    %3697 = vbcast.lane.b32.xlu0 %v3675, %s3696
    %v3698 = vpop.permute.xlu0 %3697
    %s3700 = sor.u32 256, 48
    %3701 = vbcast.lane.b32.xlu0 %v3675, %s3700
    %v3702 = vpop.permute.xlu0 %3701
    %s3704 = sor.u32 256, 56
    %3705 = vbcast.lane.b32.xlu0 %v3675, %s3704
    %v3706 = vpop.permute.xlu0 %3705
    %s3708 = sor.u32 256, 64
    %3709 = vbcast.lane.b32.xlu0 %v3675, %s3708
    %v3710 = vpop.permute.xlu0 %3709
    %s3712 = sor.u32 256, 72
    %3713 = vbcast.lane.b32.xlu0 %v3675, %s3712
    %v3714 = vpop.permute.xlu0 %3713
    %s3716 = sor.u32 256, 80
    %3717 = vbcast.lane.b32.xlu0 %v3675, %s3716
    %v3718 = vpop.permute.xlu0 %3717
    %s3720 = sor.u32 256, 88
    %3721 = vbcast.lane.b32.xlu0 %v3675, %s3720
    %v3722 = vpop.permute.xlu0 %3721
    %s3724 = sor.u32 256, 96
    %3725 = vbcast.lane.b32.xlu0 %v3675, %s3724
    %v3726 = vpop.permute.xlu0 %3725
    %s3728 = sor.u32 256, 104
    %3729 = vbcast.lane.b32.xlu0 %v3675, %s3728
    %v3730 = vpop.permute.xlu0 %3729
    %s3732 = sor.u32 256, 112
    %3733 = vbcast.lane.b32.xlu0 %v3675, %s3732
    %v3734 = vpop.permute.xlu0 %3733
    %s3736 = sor.u32 256, 120
    %3737 = vbcast.lane.b32.xlu0 %v3675, %s3736
    %v3738 = vpop.permute.xlu0 %3737
    %v3739 = vmul.f32 %v563, %v1601
    %v3740 = vmul.f32 %v564, %v1601
    %v3741 = vmul.f32 %v565, %v1605
    %v3742 = vmul.f32 %v566, %v1605
    %v3743 = vmul.f32 %v567, %v1609
    %v3744 = vmul.f32 %v568, %v1609
    %v3745 = vmul.f32 %v569, %v1613
    %v3746 = vmul.f32 %v570, %v1613
    %v3747 = vmul.f32 %v571, %v1617
    %v3748 = vmul.f32 %v572, %v1617
    %v3749 = vmul.f32 %v573, %v1621
    %v3750 = vmul.f32 %v574, %v1621
    %v3751 = vmul.f32 %v575, %v1625
    %v3752 = vmul.f32 %v576, %v1625
    %v3753 = vmul.f32 %v577, %v1629
    %v3754 = vmul.f32 %v578, %v1629
    %v3755 = vmul.f32 %v579, %v1633
    %v3756 = vmul.f32 %v580, %v1633
    %v3757 = vmul.f32 %v581, %v1637
    %v3758 = vmul.f32 %v582, %v1637
    %v3759 = vmul.f32 %v583, %v1641
    %v3760 = vmul.f32 %v584, %v1641
    %v3761 = vmul.f32 %v585, %v1645
    %v3762 = vmul.f32 %v586, %v1645
    %v3763 = vmul.f32 %v587, %v1649
    %v3764 = vmul.f32 %v588, %v1649
    %v3765 = vmul.f32 %v589, %v1653
    %v3766 = vmul.f32 %v590, %v1653
    %v3767 = vmul.f32 %v591, %v1657
    %v3768 = vmul.f32 %v592, %v1657
    %v3769 = vmul.f32 %v593, %v1661
    %v3770 = vmul.f32 %v594, %v1661
    %v3771 = vmul.f32 %v595, %v1668
    %v3772 = vmul.f32 %v596, %v1668
    %v3773 = vmul.f32 %v597, %v1672
    %v3774 = vmul.f32 %v598, %v1672
    %v3775 = vmul.f32 %v599, %v1676
    %v3776 = vmul.f32 %v600, %v1676
    %v3777 = vmul.f32 %v601, %v1680
    %v3778 = vmul.f32 %v602, %v1680
    %v3779 = vmul.f32 %v603, %v1684
    %v3780 = vmul.f32 %v604, %v1684
    %v3781 = vmul.f32 %v605, %v1688
    %v3782 = vmul.f32 %v606, %v1688
    %v3783 = vmul.f32 %v607, %v1692
    %v3784 = vmul.f32 %v608, %v1692
    %v3785 = vmul.f32 %v609, %v1696
    %v3786 = vmul.f32 %v610, %v1696
    %v3787 = vmul.f32 %v611, %v1700
    %v3788 = vmul.f32 %v612, %v1700
    %v3789 = vmul.f32 %v613, %v1704
    %v3790 = vmul.f32 %v614, %v1704
    %v3791 = vmul.f32 %v615, %v1708
    %v3792 = vmul.f32 %v616, %v1708
    %v3793 = vmul.f32 %v617, %v1712
    %v3794 = vmul.f32 %v618, %v1712
    %v3795 = vmul.f32 %v619, %v1716
    %v3796 = vmul.f32 %v620, %v1716
    %v3797 = vmul.f32 %v621, %v1720
    %v3798 = vmul.f32 %v622, %v1720
    %v3799 = vmul.f32 %v623, %v1724
    %v3800 = vmul.f32 %v624, %v1724
    %v3801 = vmul.f32 %v625, %v1728
    %v3802 = vmul.f32 %v626, %v1728
    %v3803 = vmul.f32 %v627, %v1735
    %v3804 = vmul.f32 %v628, %v1735
    %v3805 = vmul.f32 %v629, %v1739
    %v3806 = vmul.f32 %v630, %v1739
    %v3807 = vmul.f32 %v631, %v1743
    %v3808 = vmul.f32 %v632, %v1743
    %v3809 = vmul.f32 %v633, %v1747
    %v3810 = vmul.f32 %v634, %v1747
    %v3811 = vmul.f32 %v635, %v1751
    %v3812 = vmul.f32 %v636, %v1751
    %v3813 = vmul.f32 %v637, %v1755
    %v3814 = vmul.f32 %v638, %v1755
    %v3815 = vmul.f32 %v639, %v1759
    %v3816 = vmul.f32 %v640, %v1759
    %v3817 = vmul.f32 %v641, %v1763
    %v3818 = vmul.f32 %v642, %v1763
    %v3819 = vmul.f32 %v643, %v1767
    %v3820 = vmul.f32 %v644, %v1767
    %v3821 = vmul.f32 %v645, %v1771
    %v3822 = vmul.f32 %v646, %v1771
    %v3823 = vmul.f32 %v647, %v1775
    %v3824 = vmul.f32 %v648, %v1775
    %v3825 = vmul.f32 %v649, %v1779
    %v3826 = vmul.f32 %v650, %v1779
    %v3827 = vmul.f32 %v651, %v1783
    %v3828 = vmul.f32 %v652, %v1783
    %v3829 = vmul.f32 %v653, %v1787
    %v3830 = vmul.f32 %v654, %v1787
    %v3831 = vmul.f32 %v655, %v1791
    %v3832 = vmul.f32 %v656, %v1791
    %v3833 = vmul.f32 %v657, %v1795
    %v3834 = vmul.f32 %v658, %v1795
    %v3835 = vmul.f32 %v659, %v1802
    %v3836 = vmul.f32 %v660, %v1802
    %v3837 = vmul.f32 %v661, %v1806
    %v3838 = vmul.f32 %v662, %v1806
    %v3839 = vmul.f32 %v663, %v1810
    %v3840 = vmul.f32 %v664, %v1810
    %v3841 = vmul.f32 %v665, %v1814
    %v3842 = vmul.f32 %v666, %v1814
    %v3843 = vmul.f32 %v667, %v1818
    %v3844 = vmul.f32 %v668, %v1818
    %v3845 = vmul.f32 %v669, %v1822
    %v3846 = vmul.f32 %v670, %v1822
    %v3847 = vmul.f32 %v671, %v1826
    %v3848 = vmul.f32 %v672, %v1826
    %v3849 = vmul.f32 %v673, %v1830
    %v3850 = vmul.f32 %v674, %v1830
    %v3851 = vmul.f32 %v675, %v1834
    %v3852 = vmul.f32 %v676, %v1834
    %v3853 = vmul.f32 %v677, %v1838
    %v3854 = vmul.f32 %v678, %v1838
    %v3855 = vmul.f32 %v679, %v1842
    %v3856 = vmul.f32 %v680, %v1842
    %v3857 = vmul.f32 %v681, %v1846
    %v3858 = vmul.f32 %v682, %v1846
    %v3859 = vmul.f32 %v683, %v1850
    %v3860 = vmul.f32 %v684, %v1850
    %v3861 = vmul.f32 %v685, %v1854
    %v3862 = vmul.f32 %v686, %v1854
    %v3863 = vmul.f32 %v687, %v1858
    %v3864 = vmul.f32 %v688, %v1858
    %v3865 = vmul.f32 %v689, %v1862
    %v3866 = vmul.f32 %v690, %v1862
    %v3867 = vmul.f32 %v691, %v1869
    %v3868 = vmul.f32 %v692, %v1869
    %v3869 = vmul.f32 %v693, %v1873
    %v3870 = vmul.f32 %v694, %v1873
    %v3871 = vmul.f32 %v695, %v1877
    %v3872 = vmul.f32 %v696, %v1877
    %v3873 = vmul.f32 %v697, %v1881
    %v3874 = vmul.f32 %v698, %v1881
    %v3875 = vmul.f32 %v699, %v1885
    %v3876 = vmul.f32 %v700, %v1885
    %v3877 = vmul.f32 %v701, %v1889
    %v3878 = vmul.f32 %v702, %v1889
    %v3879 = vmul.f32 %v703, %v1893
    %v3880 = vmul.f32 %v704, %v1893
    %v3881 = vmul.f32 %v705, %v1897
    %v3882 = vmul.f32 %v706, %v1897
    %v3883 = vmul.f32 %v707, %v1901
    %v3884 = vmul.f32 %v708, %v1901
    %v3885 = vmul.f32 %v709, %v1905
    %v3886 = vmul.f32 %v710, %v1905
    %v3887 = vmul.f32 %v711, %v1909
    %v3888 = vmul.f32 %v712, %v1909
    %v3889 = vmul.f32 %v713, %v1913
    %v3890 = vmul.f32 %v714, %v1913
    %v3891 = vmul.f32 %v715, %v1917
    %v3892 = vmul.f32 %v716, %v1917
    %v3893 = vmul.f32 %v717, %v1921
    %v3894 = vmul.f32 %v718, %v1921
    %v3895 = vmul.f32 %v719, %v1925
    %v3896 = vmul.f32 %v720, %v1925
    %v3897 = vmul.f32 %v721, %v1929
    %v3898 = vmul.f32 %v722, %v1929
    %v3899 = vmul.f32 %v723, %v1936
    %v3900 = vmul.f32 %v724, %v1936
    %v3901 = vmul.f32 %v725, %v1940
    %v3902 = vmul.f32 %v726, %v1940
    %v3903 = vmul.f32 %v727, %v1944
    %v3904 = vmul.f32 %v728, %v1944
    %v3905 = vmul.f32 %v729, %v1948
    %v3906 = vmul.f32 %v730, %v1948
    %v3907 = vmul.f32 %v731, %v1952
    %v3908 = vmul.f32 %v732, %v1952
    %v3909 = vmul.f32 %v733, %v1956
    %v3910 = vmul.f32 %v734, %v1956
    %v3911 = vmul.f32 %v735, %v1960
    %v3912 = vmul.f32 %v736, %v1960
    %v3913 = vmul.f32 %v737, %v1964
    %v3914 = vmul.f32 %v738, %v1964
    %v3915 = vmul.f32 %v739, %v1968
    %v3916 = vmul.f32 %v740, %v1968
    %v3917 = vmul.f32 %v741, %v1972
    %v3918 = vmul.f32 %v742, %v1972
    %v3919 = vmul.f32 %v743, %v1976
    %v3920 = vmul.f32 %v744, %v1976
    %v3921 = vmul.f32 %v745, %v1980
    %v3922 = vmul.f32 %v746, %v1980
    %v3923 = vmul.f32 %v747, %v1984
    %v3924 = vmul.f32 %v748, %v1984
    %v3925 = vmul.f32 %v749, %v1988
    %v3926 = vmul.f32 %v750, %v1988
    %v3927 = vmul.f32 %v751, %v1992
    %v3928 = vmul.f32 %v752, %v1992
    %v3929 = vmul.f32 %v753, %v1996
    %v3930 = vmul.f32 %v754, %v1996
    %v3931 = vmul.f32 %v755, %v2003
    %v3932 = vmul.f32 %v756, %v2003
    %v3933 = vmul.f32 %v757, %v2007
    %v3934 = vmul.f32 %v758, %v2007
    %v3935 = vmul.f32 %v759, %v2011
    %v3936 = vmul.f32 %v760, %v2011
    %v3937 = vmul.f32 %v761, %v2015
    %v3938 = vmul.f32 %v762, %v2015
    %v3939 = vmul.f32 %v763, %v2019
    %v3940 = vmul.f32 %v764, %v2019
    %v3941 = vmul.f32 %v765, %v2023
    %v3942 = vmul.f32 %v766, %v2023
    %v3943 = vmul.f32 %v767, %v2027
    %v3944 = vmul.f32 %v768, %v2027
    %v3945 = vmul.f32 %v769, %v2031
    %v3946 = vmul.f32 %v770, %v2031
    %v3947 = vmul.f32 %v771, %v2035
    %v3948 = vmul.f32 %v772, %v2035
    %v3949 = vmul.f32 %v773, %v2039
    %v3950 = vmul.f32 %v774, %v2039
    %v3951 = vmul.f32 %v775, %v2043
    %v3952 = vmul.f32 %v776, %v2043
    %v3953 = vmul.f32 %v777, %v2047
    %v3954 = vmul.f32 %v778, %v2047
    %v3955 = vmul.f32 %v779, %v2051
    %v3956 = vmul.f32 %v780, %v2051
    %v3957 = vmul.f32 %v781, %v2055
    %v3958 = vmul.f32 %v782, %v2055
    %v3959 = vmul.f32 %v783, %v2059
    %v3960 = vmul.f32 %v784, %v2059
    %v3961 = vmul.f32 %v785, %v2063
    %v3962 = vmul.f32 %v786, %v2063
    %v3963 = vmul.f32 %v787, %v2070
    %v3964 = vmul.f32 %v788, %v2070
    %v3965 = vmul.f32 %v789, %v2074
    %v3966 = vmul.f32 %v790, %v2074
    %v3967 = vmul.f32 %v791, %v2078
    %v3968 = vmul.f32 %v792, %v2078
    %v3969 = vmul.f32 %v793, %v2082
    %v3970 = vmul.f32 %v794, %v2082
    %v3971 = vmul.f32 %v795, %v2086
    %v3972 = vmul.f32 %v796, %v2086
    %v3973 = vmul.f32 %v797, %v2090
    %v3974 = vmul.f32 %v798, %v2090
    %v3975 = vmul.f32 %v799, %v2094
    %v3976 = vmul.f32 %v800, %v2094
    %v3977 = vmul.f32 %v801, %v2098
    %v3978 = vmul.f32 %v802, %v2098
    %v3979 = vmul.f32 %v803, %v2102
    %v3980 = vmul.f32 %v804, %v2102
    %v3981 = vmul.f32 %v805, %v2106
    %v3982 = vmul.f32 %v806, %v2106
    %v3983 = vmul.f32 %v807, %v2110
    %v3984 = vmul.f32 %v808, %v2110
    %v3985 = vmul.f32 %v809, %v2114
    %v3986 = vmul.f32 %v810, %v2114
    %v3987 = vmul.f32 %v811, %v2118
    %v3988 = vmul.f32 %v812, %v2118
    %v3989 = vmul.f32 %v813, %v2122
    %v3990 = vmul.f32 %v814, %v2122
    %v3991 = vmul.f32 %v815, %v2126
    %v3992 = vmul.f32 %v816, %v2126
    %v3993 = vmul.f32 %v817, %v2130
    %v3994 = vmul.f32 %v818, %v2130
    %v3995 = vmul.f32 %v819, %v2137
    %v3996 = vmul.f32 %v820, %v2137
    %v3997 = vmul.f32 %v821, %v2141
    %v3998 = vmul.f32 %v822, %v2141
    %v3999 = vmul.f32 %v823, %v2145
    %v4000 = vmul.f32 %v824, %v2145
    %v4001 = vmul.f32 %v825, %v2149
    %v4002 = vmul.f32 %v826, %v2149
    %v4003 = vmul.f32 %v827, %v2153
    %v4004 = vmul.f32 %v828, %v2153
    %v4005 = vmul.f32 %v829, %v2157
    %v4006 = vmul.f32 %v830, %v2157
    %v4007 = vmul.f32 %v831, %v2161
    %v4008 = vmul.f32 %v832, %v2161
    %v4009 = vmul.f32 %v833, %v2165
    %v4010 = vmul.f32 %v834, %v2165
    %v4011 = vmul.f32 %v835, %v2169
    %v4012 = vmul.f32 %v836, %v2169
    %v4013 = vmul.f32 %v837, %v2173
    %v4014 = vmul.f32 %v838, %v2173
    %v4015 = vmul.f32 %v839, %v2177
    %v4016 = vmul.f32 %v840, %v2177
    %v4017 = vmul.f32 %v841, %v2181
    %v4018 = vmul.f32 %v842, %v2181
    %v4019 = vmul.f32 %v843, %v2185
    %v4020 = vmul.f32 %v844, %v2185
    %v4021 = vmul.f32 %v845, %v2189
    %v4022 = vmul.f32 %v846, %v2189
    %v4023 = vmul.f32 %v847, %v2193
    %v4024 = vmul.f32 %v848, %v2193
    %v4025 = vmul.f32 %v849, %v2197
    %v4026 = vmul.f32 %v850, %v2197
    %v4027 = vmul.f32 %v851, %v2204
    %v4028 = vmul.f32 %v852, %v2204
    %v4029 = vmul.f32 %v853, %v2208
    %v4030 = vmul.f32 %v854, %v2208
    %v4031 = vmul.f32 %v855, %v2212
    %v4032 = vmul.f32 %v856, %v2212
    %v4033 = vmul.f32 %v857, %v2216
    %v4034 = vmul.f32 %v858, %v2216
    %v4035 = vmul.f32 %v859, %v2220
    %v4036 = vmul.f32 %v860, %v2220
    %v4037 = vmul.f32 %v861, %v2224
    %v4038 = vmul.f32 %v862, %v2224
    %v4039 = vmul.f32 %v863, %v2228
    %v4040 = vmul.f32 %v864, %v2228
    %v4041 = vmul.f32 %v865, %v2232
    %v4042 = vmul.f32 %v866, %v2232
    %v4043 = vmul.f32 %v867, %v2236
    %v4044 = vmul.f32 %v868, %v2236
    %v4045 = vmul.f32 %v869, %v2240
    %v4046 = vmul.f32 %v870, %v2240
    %v4047 = vmul.f32 %v871, %v2244
    %v4048 = vmul.f32 %v872, %v2244
    %v4049 = vmul.f32 %v873, %v2248
    %v4050 = vmul.f32 %v874, %v2248
    %v4051 = vmul.f32 %v875, %v2252
    %v4052 = vmul.f32 %v876, %v2252
    %v4053 = vmul.f32 %v877, %v2256
    %v4054 = vmul.f32 %v878, %v2256
    %v4055 = vmul.f32 %v879, %v2260
    %v4056 = vmul.f32 %v880, %v2260
    %v4057 = vmul.f32 %v881, %v2264
    %v4058 = vmul.f32 %v882, %v2264
    %v4059 = vmul.f32 %v883, %v2271
    %v4060 = vmul.f32 %v884, %v2271
    %v4061 = vmul.f32 %v885, %v2275
    %v4062 = vmul.f32 %v886, %v2275
    %v4063 = vmul.f32 %v887, %v2279
    %v4064 = vmul.f32 %v888, %v2279
    %v4065 = vmul.f32 %v889, %v2283
    %v4066 = vmul.f32 %v890, %v2283
    %v4067 = vmul.f32 %v891, %v2287
    %v4068 = vmul.f32 %v892, %v2287
    %v4069 = vmul.f32 %v893, %v2291
    %v4070 = vmul.f32 %v894, %v2291
    %v4071 = vmul.f32 %v895, %v2295
    %v4072 = vmul.f32 %v896, %v2295
    %v4073 = vmul.f32 %v897, %v2299
    %v4074 = vmul.f32 %v898, %v2299
    %v4075 = vmul.f32 %v899, %v2303
    %v4076 = vmul.f32 %v900, %v2303
    %v4077 = vmul.f32 %v901, %v2307
    %v4078 = vmul.f32 %v902, %v2307
    %v4079 = vmul.f32 %v903, %v2311
    %v4080 = vmul.f32 %v904, %v2311
    %v4081 = vmul.f32 %v905, %v2315
    %v4082 = vmul.f32 %v906, %v2315
    %v4083 = vmul.f32 %v907, %v2319
    %v4084 = vmul.f32 %v908, %v2319
    %v4085 = vmul.f32 %v909, %v2323
    %v4086 = vmul.f32 %v910, %v2323
    %v4087 = vmul.f32 %v911, %v2327
    %v4088 = vmul.f32 %v912, %v2327
    %v4089 = vmul.f32 %v913, %v2331
    %v4090 = vmul.f32 %v914, %v2331
    %v4091 = vmul.f32 %v915, %v2338
    %v4092 = vmul.f32 %v916, %v2338
    %v4093 = vmul.f32 %v917, %v2342
    %v4094 = vmul.f32 %v918, %v2342
    %v4095 = vmul.f32 %v919, %v2346
    %v4096 = vmul.f32 %v920, %v2346
    %v4097 = vmul.f32 %v921, %v2350
    %v4098 = vmul.f32 %v922, %v2350
    %v4099 = vmul.f32 %v923, %v2354
    %v4100 = vmul.f32 %v924, %v2354
    %v4101 = vmul.f32 %v925, %v2358
    %v4102 = vmul.f32 %v926, %v2358
    %v4103 = vmul.f32 %v927, %v2362
    %v4104 = vmul.f32 %v928, %v2362
    %v4105 = vmul.f32 %v929, %v2366
    %v4106 = vmul.f32 %v930, %v2366
    %v4107 = vmul.f32 %v931, %v2370
    %v4108 = vmul.f32 %v932, %v2370
    %v4109 = vmul.f32 %v933, %v2374
    %v4110 = vmul.f32 %v934, %v2374
    %v4111 = vmul.f32 %v935, %v2378
    %v4112 = vmul.f32 %v936, %v2378
    %v4113 = vmul.f32 %v937, %v2382
    %v4114 = vmul.f32 %v938, %v2382
    %v4115 = vmul.f32 %v939, %v2386
    %v4116 = vmul.f32 %v940, %v2386
    %v4117 = vmul.f32 %v941, %v2390
    %v4118 = vmul.f32 %v942, %v2390
    %v4119 = vmul.f32 %v943, %v2394
    %v4120 = vmul.f32 %v944, %v2394
    %v4121 = vmul.f32 %v945, %v2398
    %v4122 = vmul.f32 %v946, %v2398
    %v4123 = vmul.f32 %v947, %v2405
    %v4124 = vmul.f32 %v948, %v2405
    %v4125 = vmul.f32 %v949, %v2409
    %v4126 = vmul.f32 %v950, %v2409
    %v4127 = vmul.f32 %v951, %v2413
    %v4128 = vmul.f32 %v952, %v2413
    %v4129 = vmul.f32 %v953, %v2417
    %v4130 = vmul.f32 %v954, %v2417
    %v4131 = vmul.f32 %v955, %v2421
    %v4132 = vmul.f32 %v956, %v2421
    %v4133 = vmul.f32 %v957, %v2425
    %v4134 = vmul.f32 %v958, %v2425
    %v4135 = vmul.f32 %v959, %v2429
    %v4136 = vmul.f32 %v960, %v2429
    %v4137 = vmul.f32 %v961, %v2433
    %v4138 = vmul.f32 %v962, %v2433
    %v4139 = vmul.f32 %v963, %v2437
    %v4140 = vmul.f32 %v964, %v2437
    %v4141 = vmul.f32 %v965, %v2441
    %v4142 = vmul.f32 %v966, %v2441
    %v4143 = vmul.f32 %v967, %v2445
    %v4144 = vmul.f32 %v968, %v2445
    %v4145 = vmul.f32 %v969, %v2449
    %v4146 = vmul.f32 %v970, %v2449
    %v4147 = vmul.f32 %v971, %v2453
    %v4148 = vmul.f32 %v972, %v2453
    %v4149 = vmul.f32 %v973, %v2457
    %v4150 = vmul.f32 %v974, %v2457
    %v4151 = vmul.f32 %v975, %v2461
    %v4152 = vmul.f32 %v976, %v2461
    %v4153 = vmul.f32 %v977, %v2465
    %v4154 = vmul.f32 %v978, %v2465
    %v4155 = vmul.f32 %v979, %v2472
    %v4156 = vmul.f32 %v980, %v2472
    %v4157 = vmul.f32 %v981, %v2476
    %v4158 = vmul.f32 %v982, %v2476
    %v4159 = vmul.f32 %v983, %v2480
    %v4160 = vmul.f32 %v984, %v2480
    %v4161 = vmul.f32 %v985, %v2484
    %v4162 = vmul.f32 %v986, %v2484
    %v4163 = vmul.f32 %v987, %v2488
    %v4164 = vmul.f32 %v988, %v2488
    %v4165 = vmul.f32 %v989, %v2492
    %v4166 = vmul.f32 %v990, %v2492
    %v4167 = vmul.f32 %v991, %v2496
    %v4168 = vmul.f32 %v992, %v2496
    %v4169 = vmul.f32 %v993, %v2500
    %v4170 = vmul.f32 %v994, %v2500
    %v4171 = vmul.f32 %v995, %v2504
    %v4172 = vmul.f32 %v996, %v2504
    %v4173 = vmul.f32 %v997, %v2508
    %v4174 = vmul.f32 %v998, %v2508
    %v4175 = vmul.f32 %v999, %v2512
    %v4176 = vmul.f32 %v1000, %v2512
    %v4177 = vmul.f32 %v1001, %v2516
    %v4178 = vmul.f32 %v1002, %v2516
    %v4179 = vmul.f32 %v1003, %v2520
    %v4180 = vmul.f32 %v1004, %v2520
    %v4181 = vmul.f32 %v1005, %v2524
    %v4182 = vmul.f32 %v1006, %v2524
    %v4183 = vmul.f32 %v1007, %v2528
    %v4184 = vmul.f32 %v1008, %v2528
    %v4185 = vmul.f32 %v1009, %v2532
    %v4186 = vmul.f32 %v1010, %v2532
    %v4187 = vmul.f32 %v1011, %v2539
    %v4188 = vmul.f32 %v1012, %v2539
    %v4189 = vmul.f32 %v1013, %v2543
    %v4190 = vmul.f32 %v1014, %v2543
    %v4191 = vmul.f32 %v1015, %v2547
    %v4192 = vmul.f32 %v1016, %v2547
    %v4193 = vmul.f32 %v1017, %v2551
    %v4194 = vmul.f32 %v1018, %v2551
    %v4195 = vmul.f32 %v1019, %v2555
    %v4196 = vmul.f32 %v1020, %v2555
    %v4197 = vmul.f32 %v1021, %v2559
    %v4198 = vmul.f32 %v1022, %v2559
    %v4199 = vmul.f32 %v1023, %v2563
    %v4200 = vmul.f32 %v1024, %v2563
    %v4201 = vmul.f32 %v1025, %v2567
    %v4202 = vmul.f32 %v1026, %v2567
    %v4203 = vmul.f32 %v1027, %v2571
    %v4204 = vmul.f32 %v1028, %v2571
    %v4205 = vmul.f32 %v1029, %v2575
    %v4206 = vmul.f32 %v1030, %v2575
    %v4207 = vmul.f32 %v1031, %v2579
    %v4208 = vmul.f32 %v1032, %v2579
    %v4209 = vmul.f32 %v1033, %v2583
    %v4210 = vmul.f32 %v1034, %v2583
    %v4211 = vmul.f32 %v1035, %v2587
    %v4212 = vmul.f32 %v1036, %v2587
    %v4213 = vmul.f32 %v1037, %v2591
    %v4214 = vmul.f32 %v1038, %v2591
    %v4215 = vmul.f32 %v1039, %v2595
    %v4216 = vmul.f32 %v1040, %v2595
    %v4217 = vmul.f32 %v1041, %v2599
    %v4218 = vmul.f32 %v1042, %v2599
    %v4219 = vmul.f32 %v1043, %v2606
    %v4220 = vmul.f32 %v1044, %v2606
    %v4221 = vmul.f32 %v1045, %v2610
    %v4222 = vmul.f32 %v1046, %v2610
    %v4223 = vmul.f32 %v1047, %v2614
    %v4224 = vmul.f32 %v1048, %v2614
    %v4225 = vmul.f32 %v1049, %v2618
    %v4226 = vmul.f32 %v1050, %v2618
    %v4227 = vmul.f32 %v1051, %v2622
    %v4228 = vmul.f32 %v1052, %v2622
    %v4229 = vmul.f32 %v1053, %v2626
    %v4230 = vmul.f32 %v1054, %v2626
    %v4231 = vmul.f32 %v1055, %v2630
    %v4232 = vmul.f32 %v1056, %v2630
    %v4233 = vmul.f32 %v1057, %v2634
    %v4234 = vmul.f32 %v1058, %v2634
    %v4235 = vmul.f32 %v1059, %v2638
    %v4236 = vmul.f32 %v1060, %v2638
    %v4237 = vmul.f32 %v1061, %v2642
    %v4238 = vmul.f32 %v1062, %v2642
    %v4239 = vmul.f32 %v1063, %v2646
    %v4240 = vmul.f32 %v1064, %v2646
    %v4241 = vmul.f32 %v1065, %v2650
    %v4242 = vmul.f32 %v1066, %v2650
    %v4243 = vmul.f32 %v1067, %v2654
    %v4244 = vmul.f32 %v1068, %v2654
    %v4245 = vmul.f32 %v1069, %v2658
    %v4246 = vmul.f32 %v1070, %v2658
    %v4247 = vmul.f32 %v1071, %v2662
    %v4248 = vmul.f32 %v1072, %v2662
    %v4249 = vmul.f32 %v1073, %v2666
    %v4250 = vmul.f32 %v1074, %v2666
    %v4251 = vmul.f32 %v1075, %v2673
    %v4252 = vmul.f32 %v1076, %v2673
    %v4253 = vmul.f32 %v1077, %v2677
    %v4254 = vmul.f32 %v1078, %v2677
    %v4255 = vmul.f32 %v1079, %v2681
    %v4256 = vmul.f32 %v1080, %v2681
    %v4257 = vmul.f32 %v1081, %v2685
    %v4258 = vmul.f32 %v1082, %v2685
    %v4259 = vmul.f32 %v1083, %v2689
    %v4260 = vmul.f32 %v1084, %v2689
    %v4261 = vmul.f32 %v1085, %v2693
    %v4262 = vmul.f32 %v1086, %v2693
    %v4263 = vmul.f32 %v1087, %v2697
    %v4264 = vmul.f32 %v1088, %v2697
    %v4265 = vmul.f32 %v1089, %v2701
    %v4266 = vmul.f32 %v1090, %v2701
    %v4267 = vmul.f32 %v1091, %v2705
    %v4268 = vmul.f32 %v1092, %v2705
    %v4269 = vmul.f32 %v1093, %v2709
    %v4270 = vmul.f32 %v1094, %v2709
    %v4271 = vmul.f32 %v1095, %v2713
    %v4272 = vmul.f32 %v1096, %v2713
    %v4273 = vmul.f32 %v1097, %v2717
    %v4274 = vmul.f32 %v1098, %v2717
    %v4275 = vmul.f32 %v1099, %v2721
    %v4276 = vmul.f32 %v1100, %v2721
    %v4277 = vmul.f32 %v1101, %v2725
    %v4278 = vmul.f32 %v1102, %v2725
    %v4279 = vmul.f32 %v1103, %v2729
    %v4280 = vmul.f32 %v1104, %v2729
    %v4281 = vmul.f32 %v1105, %v2733
    %v4282 = vmul.f32 %v1106, %v2733
    %v4283 = vmul.f32 %v1107, %v2740
    %v4284 = vmul.f32 %v1108, %v2740
    %v4285 = vmul.f32 %v1109, %v2744
    %v4286 = vmul.f32 %v1110, %v2744
    %v4287 = vmul.f32 %v1111, %v2748
    %v4288 = vmul.f32 %v1112, %v2748
    %v4289 = vmul.f32 %v1113, %v2752
    %v4290 = vmul.f32 %v1114, %v2752
    %v4291 = vmul.f32 %v1115, %v2756
    %v4292 = vmul.f32 %v1116, %v2756
    %v4293 = vmul.f32 %v1117, %v2760
    %v4294 = vmul.f32 %v1118, %v2760
    %v4295 = vmul.f32 %v1119, %v2764
    %v4296 = vmul.f32 %v1120, %v2764
    %v4297 = vmul.f32 %v1121, %v2768
    %v4298 = vmul.f32 %v1122, %v2768
    %v4299 = vmul.f32 %v1123, %v2772
    %v4300 = vmul.f32 %v1124, %v2772
    %v4301 = vmul.f32 %v1125, %v2776
    %v4302 = vmul.f32 %v1126, %v2776
    %v4303 = vmul.f32 %v1127, %v2780
    %v4304 = vmul.f32 %v1128, %v2780
    %v4305 = vmul.f32 %v1129, %v2784
    %v4306 = vmul.f32 %v1130, %v2784
    %v4307 = vmul.f32 %v1131, %v2788
    %v4308 = vmul.f32 %v1132, %v2788
    %v4309 = vmul.f32 %v1133, %v2792
    %v4310 = vmul.f32 %v1134, %v2792
    %v4311 = vmul.f32 %v1135, %v2796
    %v4312 = vmul.f32 %v1136, %v2796
    %v4313 = vmul.f32 %v1137, %v2800
    %v4314 = vmul.f32 %v1138, %v2800
    %v4315 = vmul.f32 %v1139, %v2807
    %v4316 = vmul.f32 %v1140, %v2807
    %v4317 = vmul.f32 %v1141, %v2811
    %v4318 = vmul.f32 %v1142, %v2811
    %v4319 = vmul.f32 %v1143, %v2815
    %v4320 = vmul.f32 %v1144, %v2815
    %v4321 = vmul.f32 %v1145, %v2819
    %v4322 = vmul.f32 %v1146, %v2819
    %v4323 = vmul.f32 %v1147, %v2823
    %v4324 = vmul.f32 %v1148, %v2823
    %v4325 = vmul.f32 %v1149, %v2827
    %v4326 = vmul.f32 %v1150, %v2827
    %v4327 = vmul.f32 %v1151, %v2831
    %v4328 = vmul.f32 %v1152, %v2831
    %v4329 = vmul.f32 %v1153, %v2835
    %v4330 = vmul.f32 %v1154, %v2835
    %v4331 = vmul.f32 %v1155, %v2839
    %v4332 = vmul.f32 %v1156, %v2839
    %v4333 = vmul.f32 %v1157, %v2843
    %v4334 = vmul.f32 %v1158, %v2843
    %v4335 = vmul.f32 %v1159, %v2847
    %v4336 = vmul.f32 %v1160, %v2847
    %v4337 = vmul.f32 %v1161, %v2851
    %v4338 = vmul.f32 %v1162, %v2851
    %v4339 = vmul.f32 %v1163, %v2855
    %v4340 = vmul.f32 %v1164, %v2855
    %v4341 = vmul.f32 %v1165, %v2859
    %v4342 = vmul.f32 %v1166, %v2859
    %v4343 = vmul.f32 %v1167, %v2863
    %v4344 = vmul.f32 %v1168, %v2863
    %v4345 = vmul.f32 %v1169, %v2867
    %v4346 = vmul.f32 %v1170, %v2867
    %v4347 = vmul.f32 %v1171, %v2874
    %v4348 = vmul.f32 %v1172, %v2874
    %v4349 = vmul.f32 %v1173, %v2878
    %v4350 = vmul.f32 %v1174, %v2878
    %v4351 = vmul.f32 %v1175, %v2882
    %v4352 = vmul.f32 %v1176, %v2882
    %v4353 = vmul.f32 %v1177, %v2886
    %v4354 = vmul.f32 %v1178, %v2886
    %v4355 = vmul.f32 %v1179, %v2890
    %v4356 = vmul.f32 %v1180, %v2890
    %v4357 = vmul.f32 %v1181, %v2894
    %v4358 = vmul.f32 %v1182, %v2894
    %v4359 = vmul.f32 %v1183, %v2898
    %v4360 = vmul.f32 %v1184, %v2898
    %v4361 = vmul.f32 %v1185, %v2902
    %v4362 = vmul.f32 %v1186, %v2902
    %v4363 = vmul.f32 %v1187, %v2906
    %v4364 = vmul.f32 %v1188, %v2906
    %v4365 = vmul.f32 %v1189, %v2910
    %v4366 = vmul.f32 %v1190, %v2910
    %v4367 = vmul.f32 %v1191, %v2914
    %v4368 = vmul.f32 %v1192, %v2914
    %v4369 = vmul.f32 %v1193, %v2918
    %v4370 = vmul.f32 %v1194, %v2918
    %v4371 = vmul.f32 %v1195, %v2922
    %v4372 = vmul.f32 %v1196, %v2922
    %v4373 = vmul.f32 %v1197, %v2926
    %v4374 = vmul.f32 %v1198, %v2926
    %v4375 = vmul.f32 %v1199, %v2930
    %v4376 = vmul.f32 %v1200, %v2930
    %v4377 = vmul.f32 %v1201, %v2934
    %v4378 = vmul.f32 %v1202, %v2934
    %v4379 = vmul.f32 %v1203, %v2941
    %v4380 = vmul.f32 %v1204, %v2941
    %v4381 = vmul.f32 %v1205, %v2945
    %v4382 = vmul.f32 %v1206, %v2945
    %v4383 = vmul.f32 %v1207, %v2949
    %v4384 = vmul.f32 %v1208, %v2949
    %v4385 = vmul.f32 %v1209, %v2953
    %v4386 = vmul.f32 %v1210, %v2953
    %v4387 = vmul.f32 %v1211, %v2957
    %v4388 = vmul.f32 %v1212, %v2957
    %v4389 = vmul.f32 %v1213, %v2961
    %v4390 = vmul.f32 %v1214, %v2961
    %v4391 = vmul.f32 %v1215, %v2965
    %v4392 = vmul.f32 %v1216, %v2965
    %v4393 = vmul.f32 %v1217, %v2969
    %v4394 = vmul.f32 %v1218, %v2969
    %v4395 = vmul.f32 %v1219, %v2973
    %v4396 = vmul.f32 %v1220, %v2973
    %v4397 = vmul.f32 %v1221, %v2977
    %v4398 = vmul.f32 %v1222, %v2977
    %v4399 = vmul.f32 %v1223, %v2981
    %v4400 = vmul.f32 %v1224, %v2981
    %v4401 = vmul.f32 %v1225, %v2985
    %v4402 = vmul.f32 %v1226, %v2985
    %v4403 = vmul.f32 %v1227, %v2989
    %v4404 = vmul.f32 %v1228, %v2989
    %v4405 = vmul.f32 %v1229, %v2993
    %v4406 = vmul.f32 %v1230, %v2993
    %v4407 = vmul.f32 %v1231, %v2997
    %v4408 = vmul.f32 %v1232, %v2997
    %v4409 = vmul.f32 %v1233, %v3001
    %v4410 = vmul.f32 %v1234, %v3001
    %v4411 = vmul.f32 %v1235, %v3008
    %v4412 = vmul.f32 %v1236, %v3008
    %v4413 = vmul.f32 %v1237, %v3012
    %v4414 = vmul.f32 %v1238, %v3012
    %v4415 = vmul.f32 %v1239, %v3016
    %v4416 = vmul.f32 %v1240, %v3016
    %v4417 = vmul.f32 %v1241, %v3020
    %v4418 = vmul.f32 %v1242, %v3020
    %v4419 = vmul.f32 %v1243, %v3024
    %v4420 = vmul.f32 %v1244, %v3024
    %v4421 = vmul.f32 %v1245, %v3028
    %v4422 = vmul.f32 %v1246, %v3028
    %v4423 = vmul.f32 %v1247, %v3032
    %v4424 = vmul.f32 %v1248, %v3032
    %v4425 = vmul.f32 %v1249, %v3036
    %v4426 = vmul.f32 %v1250, %v3036
    %v4427 = vmul.f32 %v1251, %v3040
    %v4428 = vmul.f32 %v1252, %v3040
    %v4429 = vmul.f32 %v1253, %v3044
    %v4430 = vmul.f32 %v1254, %v3044
    %v4431 = vmul.f32 %v1255, %v3048
    %v4432 = vmul.f32 %v1256, %v3048
    %v4433 = vmul.f32 %v1257, %v3052
    %v4434 = vmul.f32 %v1258, %v3052
    %v4435 = vmul.f32 %v1259, %v3056
    %v4436 = vmul.f32 %v1260, %v3056
    %v4437 = vmul.f32 %v1261, %v3060
    %v4438 = vmul.f32 %v1262, %v3060
    %v4439 = vmul.f32 %v1263, %v3064
    %v4440 = vmul.f32 %v1264, %v3064
    %v4441 = vmul.f32 %v1265, %v3068
    %v4442 = vmul.f32 %v1266, %v3068
    %v4443 = vmul.f32 %v1267, %v3075
    %v4444 = vmul.f32 %v1268, %v3075
    %v4445 = vmul.f32 %v1269, %v3079
    %v4446 = vmul.f32 %v1270, %v3079
    %v4447 = vmul.f32 %v1271, %v3083
    %v4448 = vmul.f32 %v1272, %v3083
    %v4449 = vmul.f32 %v1273, %v3087
    %v4450 = vmul.f32 %v1274, %v3087
    %v4451 = vmul.f32 %v1275, %v3091
    %v4452 = vmul.f32 %v1276, %v3091
    %v4453 = vmul.f32 %v1277, %v3095
    %v4454 = vmul.f32 %v1278, %v3095
    %v4455 = vmul.f32 %v1279, %v3099
    %v4456 = vmul.f32 %v1280, %v3099
    %v4457 = vmul.f32 %v1281, %v3103
    %v4458 = vmul.f32 %v1282, %v3103
    %v4459 = vmul.f32 %v1283, %v3107
    %v4460 = vmul.f32 %v1284, %v3107
    %v4461 = vmul.f32 %v1285, %v3111
    %v4462 = vmul.f32 %v1286, %v3111
    %v4463 = vmul.f32 %v1287, %v3115
    %v4464 = vmul.f32 %v1288, %v3115
    %v4465 = vmul.f32 %v1289, %v3119
    %v4466 = vmul.f32 %v1290, %v3119
    %v4467 = vmul.f32 %v1291, %v3123
    %v4468 = vmul.f32 %v1292, %v3123
    %v4469 = vmul.f32 %v1293, %v3127
    %v4470 = vmul.f32 %v1294, %v3127
    %v4471 = vmul.f32 %v1295, %v3131
    %v4472 = vmul.f32 %v1296, %v3131
    %v4473 = vmul.f32 %v1297, %v3135
    %v4474 = vmul.f32 %v1298, %v3135
    %v4475 = vmul.f32 %v1299, %v3142
    %v4476 = vmul.f32 %v1300, %v3142
    %v4477 = vmul.f32 %v1301, %v3146
    %v4478 = vmul.f32 %v1302, %v3146
    %v4479 = vmul.f32 %v1303, %v3150
    %v4480 = vmul.f32 %v1304, %v3150
    %v4481 = vmul.f32 %v1305, %v3154
    %v4482 = vmul.f32 %v1306, %v3154
    %v4483 = vmul.f32 %v1307, %v3158
    %v4484 = vmul.f32 %v1308, %v3158
    %v4485 = vmul.f32 %v1309, %v3162
    %v4486 = vmul.f32 %v1310, %v3162
    %v4487 = vmul.f32 %v1311, %v3166
    %v4488 = vmul.f32 %v1312, %v3166
    %v4489 = vmul.f32 %v1313, %v3170
    %v4490 = vmul.f32 %v1314, %v3170
    %v4491 = vmul.f32 %v1315, %v3174
    %v4492 = vmul.f32 %v1316, %v3174
    %v4493 = vmul.f32 %v1317, %v3178
    %v4494 = vmul.f32 %v1318, %v3178
    %v4495 = vmul.f32 %v1319, %v3182
    %v4496 = vmul.f32 %v1320, %v3182
    %v4497 = vmul.f32 %v1321, %v3186
    %v4498 = vmul.f32 %v1322, %v3186
    %v4499 = vmul.f32 %v1323, %v3190
    %v4500 = vmul.f32 %v1324, %v3190
    %v4501 = vmul.f32 %v1325, %v3194
    %v4502 = vmul.f32 %v1326, %v3194
    %v4503 = vmul.f32 %v1327, %v3198
    %v4504 = vmul.f32 %v1328, %v3198
    %v4505 = vmul.f32 %v1329, %v3202
    %v4506 = vmul.f32 %v1330, %v3202
    %v4507 = vmul.f32 %v1331, %v3209
    %v4508 = vmul.f32 %v1332, %v3209
    %v4509 = vmul.f32 %v1333, %v3213
    %v4510 = vmul.f32 %v1334, %v3213
    %v4511 = vmul.f32 %v1335, %v3217
    %v4512 = vmul.f32 %v1336, %v3217
    %v4513 = vmul.f32 %v1337, %v3221
    %v4514 = vmul.f32 %v1338, %v3221
    %v4515 = vmul.f32 %v1339, %v3225
    %v4516 = vmul.f32 %v1340, %v3225
    %v4517 = vmul.f32 %v1341, %v3229
    %v4518 = vmul.f32 %v1342, %v3229
    %v4519 = vmul.f32 %v1343, %v3233
    %v4520 = vmul.f32 %v1344, %v3233
    %v4521 = vmul.f32 %v1345, %v3237
    %v4522 = vmul.f32 %v1346, %v3237
    %v4523 = vmul.f32 %v1347, %v3241
    %v4524 = vmul.f32 %v1348, %v3241
    %v4525 = vmul.f32 %v1349, %v3245
    %v4526 = vmul.f32 %v1350, %v3245
    %v4527 = vmul.f32 %v1351, %v3249
    %v4528 = vmul.f32 %v1352, %v3249
    %v4529 = vmul.f32 %v1353, %v3253
    %v4530 = vmul.f32 %v1354, %v3253
    %v4531 = vmul.f32 %v1355, %v3257
    %v4532 = vmul.f32 %v1356, %v3257
    %v4533 = vmul.f32 %v1357, %v3261
    %v4534 = vmul.f32 %v1358, %v3261
    %v4535 = vmul.f32 %v1359, %v3265
    %v4536 = vmul.f32 %v1360, %v3265
    %v4537 = vmul.f32 %v1361, %v3269
    %v4538 = vmul.f32 %v1362, %v3269
    %v4539 = vmul.f32 %v1363, %v3276
    %v4540 = vmul.f32 %v1364, %v3276
    %v4541 = vmul.f32 %v1365, %v3280
    %v4542 = vmul.f32 %v1366, %v3280
    %v4543 = vmul.f32 %v1367, %v3284
    %v4544 = vmul.f32 %v1368, %v3284
    %v4545 = vmul.f32 %v1369, %v3288
    %v4546 = vmul.f32 %v1370, %v3288
    %v4547 = vmul.f32 %v1371, %v3292
    %v4548 = vmul.f32 %v1372, %v3292
    %v4549 = vmul.f32 %v1373, %v3296
    %v4550 = vmul.f32 %v1374, %v3296
    %v4551 = vmul.f32 %v1375, %v3300
    %v4552 = vmul.f32 %v1376, %v3300
    %v4553 = vmul.f32 %v1377, %v3304
    %v4554 = vmul.f32 %v1378, %v3304
    %v4555 = vmul.f32 %v1379, %v3308
    %v4556 = vmul.f32 %v1380, %v3308
    %v4557 = vmul.f32 %v1381, %v3312
    %v4558 = vmul.f32 %v1382, %v3312
    %v4559 = vmul.f32 %v1383, %v3316
    %v4560 = vmul.f32 %v1384, %v3316
    %v4561 = vmul.f32 %v1385, %v3320
    %v4562 = vmul.f32 %v1386, %v3320
    %v4563 = vmul.f32 %v1387, %v3324
    %v4564 = vmul.f32 %v1388, %v3324
    %v4565 = vmul.f32 %v1389, %v3328
    %v4566 = vmul.f32 %v1390, %v3328
    %v4567 = vmul.f32 %v1391, %v3332
    %v4568 = vmul.f32 %v1392, %v3332
    %v4569 = vmul.f32 %v1393, %v3336
    %v4570 = vmul.f32 %v1394, %v3336
    %v4571 = vmul.f32 %v1395, %v3343
    %v4572 = vmul.f32 %v1396, %v3343
    %v4573 = vmul.f32 %v1397, %v3347
    %v4574 = vmul.f32 %v1398, %v3347
    %v4575 = vmul.f32 %v1399, %v3351
    %v4576 = vmul.f32 %v1400, %v3351
    %v4577 = vmul.f32 %v1401, %v3355
    %v4578 = vmul.f32 %v1402, %v3355
    %v4579 = vmul.f32 %v1403, %v3359
    %v4580 = vmul.f32 %v1404, %v3359
    %v4581 = vmul.f32 %v1405, %v3363
    %v4582 = vmul.f32 %v1406, %v3363
    %v4583 = vmul.f32 %v1407, %v3367
    %v4584 = vmul.f32 %v1408, %v3367
    %v4585 = vmul.f32 %v1409, %v3371
    %v4586 = vmul.f32 %v1410, %v3371
    %v4587 = vmul.f32 %v1411, %v3375
    %v4588 = vmul.f32 %v1412, %v3375
    %v4589 = vmul.f32 %v1413, %v3379
    %v4590 = vmul.f32 %v1414, %v3379
    %v4591 = vmul.f32 %v1415, %v3383
    %v4592 = vmul.f32 %v1416, %v3383
    %v4593 = vmul.f32 %v1417, %v3387
    %v4594 = vmul.f32 %v1418, %v3387
    %v4595 = vmul.f32 %v1419, %v3391
    %v4596 = vmul.f32 %v1420, %v3391
    %v4597 = vmul.f32 %v1421, %v3395
    %v4598 = vmul.f32 %v1422, %v3395
    %v4599 = vmul.f32 %v1423, %v3399
    %v4600 = vmul.f32 %v1424, %v3399
    %v4601 = vmul.f32 %v1425, %v3403
    %v4602 = vmul.f32 %v1426, %v3403
    %v4603 = vmul.f32 %v1427, %v3410
    %v4604 = vmul.f32 %v1428, %v3410
    %v4605 = vmul.f32 %v1429, %v3414
    %v4606 = vmul.f32 %v1430, %v3414
    %v4607 = vmul.f32 %v1431, %v3418
    %v4608 = vmul.f32 %v1432, %v3418
    %v4609 = vmul.f32 %v1433, %v3422
    %v4610 = vmul.f32 %v1434, %v3422
    %v4611 = vmul.f32 %v1435, %v3426
    %v4612 = vmul.f32 %v1436, %v3426
    %v4613 = vmul.f32 %v1437, %v3430
    %v4614 = vmul.f32 %v1438, %v3430
    %v4615 = vmul.f32 %v1439, %v3434
    %v4616 = vmul.f32 %v1440, %v3434
    %v4617 = vmul.f32 %v1441, %v3438
    %v4618 = vmul.f32 %v1442, %v3438
    %v4619 = vmul.f32 %v1443, %v3442
    %v4620 = vmul.f32 %v1444, %v3442
    %v4621 = vmul.f32 %v1445, %v3446
    %v4622 = vmul.f32 %v1446, %v3446
    %v4623 = vmul.f32 %v1447, %v3450
    %v4624 = vmul.f32 %v1448, %v3450
    %v4625 = vmul.f32 %v1449, %v3454
    %v4626 = vmul.f32 %v1450, %v3454
    %v4627 = vmul.f32 %v1451, %v3458
    %v4628 = vmul.f32 %v1452, %v3458
    %v4629 = vmul.f32 %v1453, %v3462
    %v4630 = vmul.f32 %v1454, %v3462
    %v4631 = vmul.f32 %v1455, %v3466
    %v4632 = vmul.f32 %v1456, %v3466
    %v4633 = vmul.f32 %v1457, %v3470
    %v4634 = vmul.f32 %v1458, %v3470
    %v4635 = vmul.f32 %v1459, %v3477
    %v4636 = vmul.f32 %v1460, %v3477
    %v4637 = vmul.f32 %v1461, %v3481
    %v4638 = vmul.f32 %v1462, %v3481
    %v4639 = vmul.f32 %v1463, %v3485
    %v4640 = vmul.f32 %v1464, %v3485
    %v4641 = vmul.f32 %v1465, %v3489
    %v4642 = vmul.f32 %v1466, %v3489
    %v4643 = vmul.f32 %v1467, %v3493
    %v4644 = vmul.f32 %v1468, %v3493
    %v4645 = vmul.f32 %v1469, %v3497
    %v4646 = vmul.f32 %v1470, %v3497
    %v4647 = vmul.f32 %v1471, %v3501
    %v4648 = vmul.f32 %v1472, %v3501
    %v4649 = vmul.f32 %v1473, %v3505
    %v4650 = vmul.f32 %v1474, %v3505
    %v4651 = vmul.f32 %v1475, %v3509
    %v4652 = vmul.f32 %v1476, %v3509
    %v4653 = vmul.f32 %v1477, %v3513
    %v4654 = vmul.f32 %v1478, %v3513
    %v4655 = vmul.f32 %v1479, %v3517
    %v4656 = vmul.f32 %v1480, %v3517
    %v4657 = vmul.f32 %v1481, %v3521
    %v4658 = vmul.f32 %v1482, %v3521
    %v4659 = vmul.f32 %v1483, %v3525
    %v4660 = vmul.f32 %v1484, %v3525
    %v4661 = vmul.f32 %v1485, %v3529
    %v4662 = vmul.f32 %v1486, %v3529
    %v4663 = vmul.f32 %v1487, %v3533
    %v4664 = vmul.f32 %v1488, %v3533
    %v4665 = vmul.f32 %v1489, %v3537
    %v4666 = vmul.f32 %v1490, %v3537
    %v4667 = vmul.f32 %v1491, %v3544
    %v4668 = vmul.f32 %v1492, %v3544
    %v4669 = vmul.f32 %v1493, %v3548
    %v4670 = vmul.f32 %v1494, %v3548
    %v4671 = vmul.f32 %v1495, %v3552
    %v4672 = vmul.f32 %v1496, %v3552
    %v4673 = vmul.f32 %v1497, %v3556
    %v4674 = vmul.f32 %v1498, %v3556
    %v4675 = vmul.f32 %v1499, %v3560
    %v4676 = vmul.f32 %v1500, %v3560
    %v4677 = vmul.f32 %v1501, %v3564
    %v4678 = vmul.f32 %v1502, %v3564
    %v4679 = vmul.f32 %v1503, %v3568
    %v4680 = vmul.f32 %v1504, %v3568
    %v4681 = vmul.f32 %v1505, %v3572
    %v4682 = vmul.f32 %v1506, %v3572
    %v4683 = vmul.f32 %v1507, %v3576
    %v4684 = vmul.f32 %v1508, %v3576
    %v4685 = vmul.f32 %v1509, %v3580
    %v4686 = vmul.f32 %v1510, %v3580
    %v4687 = vmul.f32 %v1511, %v3584
    %v4688 = vmul.f32 %v1512, %v3584
    %v4689 = vmul.f32 %v1513, %v3588
    %v4690 = vmul.f32 %v1514, %v3588
    %v4691 = vmul.f32 %v1515, %v3592
    %v4692 = vmul.f32 %v1516, %v3592
    %v4693 = vmul.f32 %v1517, %v3596
    %v4694 = vmul.f32 %v1518, %v3596
    %v4695 = vmul.f32 %v1519, %v3600
    %v4696 = vmul.f32 %v1520, %v3600
    %v4697 = vmul.f32 %v1521, %v3604
    %v4698 = vmul.f32 %v1522, %v3604
    %v4699 = vmul.f32 %v1523, %v3611
    %v4700 = vmul.f32 %v1524, %v3611
    %v4701 = vmul.f32 %v1525, %v3615
    %v4702 = vmul.f32 %v1526, %v3615
    %v4703 = vmul.f32 %v1527, %v3619
    %v4704 = vmul.f32 %v1528, %v3619
    %v4705 = vmul.f32 %v1529, %v3623
    %v4706 = vmul.f32 %v1530, %v3623
    %v4707 = vmul.f32 %v1531, %v3627
    %v4708 = vmul.f32 %v1532, %v3627
    %v4709 = vmul.f32 %v1533, %v3631
    %v4710 = vmul.f32 %v1534, %v3631
    %v4711 = vmul.f32 %v1535, %v3635
    %v4712 = vmul.f32 %v1536, %v3635
    %v4713 = vmul.f32 %v1537, %v3639
    %v4714 = vmul.f32 %v1538, %v3639
    %v4715 = vmul.f32 %v1539, %v3643
    %v4716 = vmul.f32 %v1540, %v3643
    %v4717 = vmul.f32 %v1541, %v3647
    %v4718 = vmul.f32 %v1542, %v3647
    %v4719 = vmul.f32 %v1543, %v3651
    %v4720 = vmul.f32 %v1544, %v3651
    %v4721 = vmul.f32 %v1545, %v3655
    %v4722 = vmul.f32 %v1546, %v3655
    %v4723 = vmul.f32 %v1547, %v3659
    %v4724 = vmul.f32 %v1548, %v3659
    %v4725 = vmul.f32 %v1549, %v3663
    %v4726 = vmul.f32 %v1550, %v3663
    %v4727 = vmul.f32 %v1551, %v3667
    %v4728 = vmul.f32 %v1552, %v3667
    %v4729 = vmul.f32 %v1553, %v3671
    %v4730 = vmul.f32 %v1554, %v3671
    %v4731 = vmul.f32 %v1555, %v3678
    %v4732 = vmul.f32 %v1556, %v3678
    %v4733 = vmul.f32 %v1557, %v3682
    %v4734 = vmul.f32 %v1558, %v3682
    %v4735 = vmul.f32 %v1559, %v3686
    %v4736 = vmul.f32 %v1560, %v3686
    %v4737 = vmul.f32 %v1561, %v3690
    %v4738 = vmul.f32 %v1562, %v3690
    %v4739 = vmul.f32 %v1563, %v3694
    %v4740 = vmul.f32 %v1564, %v3694
    %v4741 = vmul.f32 %v1565, %v3698
    %v4742 = vmul.f32 %v1566, %v3698
    %v4743 = vmul.f32 %v1567, %v3702
    %v4744 = vmul.f32 %v1568, %v3702
    %v4745 = vmul.f32 %v1569, %v3706
    %v4746 = vmul.f32 %v1570, %v3706
    %v4747 = vmul.f32 %v1571, %v3710
    %v4748 = vmul.f32 %v1572, %v3710
    %v4749 = vmul.f32 %v1573, %v3714
    %v4750 = vmul.f32 %v1574, %v3714
    %v4751 = vmul.f32 %v1575, %v3718
    %v4752 = vmul.f32 %v1576, %v3718
    %v4753 = vmul.f32 %v1577, %v3722
    %v4754 = vmul.f32 %v1578, %v3722
    %v4755 = vmul.f32 %v1579, %v3726
    %v4756 = vmul.f32 %v1580, %v3726
    %v4757 = vmul.f32 %v1581, %v3730
    %v4758 = vmul.f32 %v1582, %v3730
    %v4759 = vmul.f32 %v1583, %v3734
    %v4760 = vmul.f32 %v1584, %v3734
    %v4761 = vmul.f32 %v1585, %v3738
    %v4762 = vmul.f32 %v1586, %v3738
    %v4763 = vadd.f32 %v3739, %v3741
    %v4764 = vadd.f32 %v4763, %v3743
    %v4765 = vadd.f32 %v4764, %v3745
    %v4766 = vadd.f32 %v4765, %v3747
    %v4767 = vadd.f32 %v4766, %v3749
    %v4768 = vadd.f32 %v4767, %v3751
    %v4769 = vadd.f32 %v4768, %v3753
    %v4770 = vadd.f32 %v4769, %v3755
    %v4771 = vadd.f32 %v4770, %v3757
    %v4772 = vadd.f32 %v4771, %v3759
    %v4773 = vadd.f32 %v4772, %v3761
    %v4774 = vadd.f32 %v4773, %v3763
    %v4775 = vadd.f32 %v4774, %v3765
    %v4776 = vadd.f32 %v4775, %v3767
    %v4777 = vadd.f32 %v4776, %v3769
    %v4778 = vadd.f32 %v4777, %v3771
    %v4779 = vadd.f32 %v4778, %v3773
    %v4780 = vadd.f32 %v4779, %v3775
    %v4781 = vadd.f32 %v4780, %v3777
    %v4782 = vadd.f32 %v4781, %v3779
    %v4783 = vadd.f32 %v4782, %v3781
    %v4784 = vadd.f32 %v4783, %v3783
    %v4785 = vadd.f32 %v4784, %v3785
    %v4786 = vadd.f32 %v4785, %v3787
    %v4787 = vadd.f32 %v4786, %v3789
    %v4788 = vadd.f32 %v4787, %v3791
    %v4789 = vadd.f32 %v4788, %v3793
    %v4790 = vadd.f32 %v4789, %v3795
    %v4791 = vadd.f32 %v4790, %v3797
    %v4792 = vadd.f32 %v4791, %v3799
    %v4793 = vadd.f32 %v4792, %v3801
    %v4794 = vrot.slane %v4793, 4
    %v4795 = vadd.f32 %v4793, %v4794
    %v4796 = vrot.slane %v4795, 2
    %v4797 = vadd.f32 %v4795, %v4796
    %v4798 = vrot.slane %v4797, 1
    %v4799 = vadd.f32 %v4797, %v4798
    %v4800 = vadd.f32 %v3740, %v3742
    %v4801 = vadd.f32 %v4800, %v3744
    %v4802 = vadd.f32 %v4801, %v3746
    %v4803 = vadd.f32 %v4802, %v3748
    %v4804 = vadd.f32 %v4803, %v3750
    %v4805 = vadd.f32 %v4804, %v3752
    %v4806 = vadd.f32 %v4805, %v3754
    %v4807 = vadd.f32 %v4806, %v3756
    %v4808 = vadd.f32 %v4807, %v3758
    %v4809 = vadd.f32 %v4808, %v3760
    %v4810 = vadd.f32 %v4809, %v3762
    %v4811 = vadd.f32 %v4810, %v3764
    %v4812 = vadd.f32 %v4811, %v3766
    %v4813 = vadd.f32 %v4812, %v3768
    %v4814 = vadd.f32 %v4813, %v3770
    %v4815 = vadd.f32 %v4814, %v3772
    %v4816 = vadd.f32 %v4815, %v3774
    %v4817 = vadd.f32 %v4816, %v3776
    %v4818 = vadd.f32 %v4817, %v3778
    %v4819 = vadd.f32 %v4818, %v3780
    %v4820 = vadd.f32 %v4819, %v3782
    %v4821 = vadd.f32 %v4820, %v3784
    %v4822 = vadd.f32 %v4821, %v3786
    %v4823 = vadd.f32 %v4822, %v3788
    %v4824 = vadd.f32 %v4823, %v3790
    %v4825 = vadd.f32 %v4824, %v3792
    %v4826 = vadd.f32 %v4825, %v3794
    %v4827 = vadd.f32 %v4826, %v3796
    %v4828 = vadd.f32 %v4827, %v3798
    %v4829 = vadd.f32 %v4828, %v3800
    %v4830 = vadd.f32 %v4829, %v3802
    %v4831 = vrot.slane %v4830, 4
    %v4832 = vadd.f32 %v4830, %v4831
    %v4833 = vrot.slane %v4832, 2
    %v4834 = vadd.f32 %v4832, %v4833
    %v4835 = vrot.slane %v4834, 1
    %v4836 = vadd.f32 %v4834, %v4835
    %v4837 = vadd.f32 %v3803, %v3805
    %v4838 = vadd.f32 %v4837, %v3807
    %v4839 = vadd.f32 %v4838, %v3809
    %v4840 = vadd.f32 %v4839, %v3811
    %v4841 = vadd.f32 %v4840, %v3813
    %v4842 = vadd.f32 %v4841, %v3815
    %v4843 = vadd.f32 %v4842, %v3817
    %v4844 = vadd.f32 %v4843, %v3819
    %v4845 = vadd.f32 %v4844, %v3821
    %v4846 = vadd.f32 %v4845, %v3823
    %v4847 = vadd.f32 %v4846, %v3825
    %v4848 = vadd.f32 %v4847, %v3827
    %v4849 = vadd.f32 %v4848, %v3829
    %v4850 = vadd.f32 %v4849, %v3831
    %v4851 = vadd.f32 %v4850, %v3833
    %v4852 = vadd.f32 %v4851, %v3835
    %v4853 = vadd.f32 %v4852, %v3837
    %v4854 = vadd.f32 %v4853, %v3839
    %v4855 = vadd.f32 %v4854, %v3841
    %v4856 = vadd.f32 %v4855, %v3843
    %v4857 = vadd.f32 %v4856, %v3845
    %v4858 = vadd.f32 %v4857, %v3847
    %v4859 = vadd.f32 %v4858, %v3849
    %v4860 = vadd.f32 %v4859, %v3851
    %v4861 = vadd.f32 %v4860, %v3853
    %v4862 = vadd.f32 %v4861, %v3855
    %v4863 = vadd.f32 %v4862, %v3857
    %v4864 = vadd.f32 %v4863, %v3859
    %v4865 = vadd.f32 %v4864, %v3861
    %v4866 = vadd.f32 %v4865, %v3863
    %v4867 = vadd.f32 %v4866, %v3865
    %v4868 = vrot.slane %v4867, 4
    %v4869 = vadd.f32 %v4867, %v4868
    %v4870 = vrot.slane %v4869, 2
    %v4871 = vadd.f32 %v4869, %v4870
    %v4872 = vrot.slane %v4871, 1
    %v4873 = vadd.f32 %v4871, %v4872
    %v4874 = vadd.f32 %v3804, %v3806
    %v4875 = vadd.f32 %v4874, %v3808
    %v4876 = vadd.f32 %v4875, %v3810
    %v4877 = vadd.f32 %v4876, %v3812
    %v4878 = vadd.f32 %v4877, %v3814
    %v4879 = vadd.f32 %v4878, %v3816
    %v4880 = vadd.f32 %v4879, %v3818
    %v4881 = vadd.f32 %v4880, %v3820
    %v4882 = vadd.f32 %v4881, %v3822
    %v4883 = vadd.f32 %v4882, %v3824
    %v4884 = vadd.f32 %v4883, %v3826
    %v4885 = vadd.f32 %v4884, %v3828
    %v4886 = vadd.f32 %v4885, %v3830
    %v4887 = vadd.f32 %v4886, %v3832
    %v4888 = vadd.f32 %v4887, %v3834
    %v4889 = vadd.f32 %v4888, %v3836
    %v4890 = vadd.f32 %v4889, %v3838
    %v4891 = vadd.f32 %v4890, %v3840
    %v4892 = vadd.f32 %v4891, %v3842
    %v4893 = vadd.f32 %v4892, %v3844
    %v4894 = vadd.f32 %v4893, %v3846
    %v4895 = vadd.f32 %v4894, %v3848
    %v4896 = vadd.f32 %v4895, %v3850
    %v4897 = vadd.f32 %v4896, %v3852
    %v4898 = vadd.f32 %v4897, %v3854
    %v4899 = vadd.f32 %v4898, %v3856
    %v4900 = vadd.f32 %v4899, %v3858
    %v4901 = vadd.f32 %v4900, %v3860
    %v4902 = vadd.f32 %v4901, %v3862
    %v4903 = vadd.f32 %v4902, %v3864
    %v4904 = vadd.f32 %v4903, %v3866
    %v4905 = vrot.slane %v4904, 4
    %v4906 = vadd.f32 %v4904, %v4905
    %v4907 = vrot.slane %v4906, 2
    %v4908 = vadd.f32 %v4906, %v4907
    %v4909 = vrot.slane %v4908, 1
    %v4910 = vadd.f32 %v4908, %v4909
    %v4911 = vadd.f32 %v3867, %v3869
    %v4912 = vadd.f32 %v4911, %v3871
    %v4913 = vadd.f32 %v4912, %v3873
    %v4914 = vadd.f32 %v4913, %v3875
    %v4915 = vadd.f32 %v4914, %v3877
    %v4916 = vadd.f32 %v4915, %v3879
    %v4917 = vadd.f32 %v4916, %v3881
    %v4918 = vadd.f32 %v4917, %v3883
    %v4919 = vadd.f32 %v4918, %v3885
    %v4920 = vadd.f32 %v4919, %v3887
    %v4921 = vadd.f32 %v4920, %v3889
    %v4922 = vadd.f32 %v4921, %v3891
    %v4923 = vadd.f32 %v4922, %v3893
    %v4924 = vadd.f32 %v4923, %v3895
    %v4925 = vadd.f32 %v4924, %v3897
    %v4926 = vadd.f32 %v4925, %v3899
    %v4927 = vadd.f32 %v4926, %v3901
    %v4928 = vadd.f32 %v4927, %v3903
    %v4929 = vadd.f32 %v4928, %v3905
    %v4930 = vadd.f32 %v4929, %v3907
    %v4931 = vadd.f32 %v4930, %v3909
    %v4932 = vadd.f32 %v4931, %v3911
    %v4933 = vadd.f32 %v4932, %v3913
    %v4934 = vadd.f32 %v4933, %v3915
    %v4935 = vadd.f32 %v4934, %v3917
    %v4936 = vadd.f32 %v4935, %v3919
    %v4937 = vadd.f32 %v4936, %v3921
    %v4938 = vadd.f32 %v4937, %v3923
    %v4939 = vadd.f32 %v4938, %v3925
    %v4940 = vadd.f32 %v4939, %v3927
    %v4941 = vadd.f32 %v4940, %v3929
    %v4942 = vrot.slane %v4941, 4
    %v4943 = vadd.f32 %v4941, %v4942
    %v4944 = vrot.slane %v4943, 2
    %v4945 = vadd.f32 %v4943, %v4944
    %v4946 = vrot.slane %v4945, 1
    %v4947 = vadd.f32 %v4945, %v4946
    %v4948 = vadd.f32 %v3868, %v3870
    %v4949 = vadd.f32 %v4948, %v3872
    %v4950 = vadd.f32 %v4949, %v3874
    %v4951 = vadd.f32 %v4950, %v3876
    %v4952 = vadd.f32 %v4951, %v3878
    %v4953 = vadd.f32 %v4952, %v3880
    %v4954 = vadd.f32 %v4953, %v3882
    %v4955 = vadd.f32 %v4954, %v3884
    %v4956 = vadd.f32 %v4955, %v3886
    %v4957 = vadd.f32 %v4956, %v3888
    %v4958 = vadd.f32 %v4957, %v3890
    %v4959 = vadd.f32 %v4958, %v3892
    %v4960 = vadd.f32 %v4959, %v3894
    %v4961 = vadd.f32 %v4960, %v3896
    %v4962 = vadd.f32 %v4961, %v3898
    %v4963 = vadd.f32 %v4962, %v3900
    %v4964 = vadd.f32 %v4963, %v3902
    %v4965 = vadd.f32 %v4964, %v3904
    %v4966 = vadd.f32 %v4965, %v3906
    %v4967 = vadd.f32 %v4966, %v3908
    %v4968 = vadd.f32 %v4967, %v3910
    %v4969 = vadd.f32 %v4968, %v3912
    %v4970 = vadd.f32 %v4969, %v3914
    %v4971 = vadd.f32 %v4970, %v3916
    %v4972 = vadd.f32 %v4971, %v3918
    %v4973 = vadd.f32 %v4972, %v3920
    %v4974 = vadd.f32 %v4973, %v3922
    %v4975 = vadd.f32 %v4974, %v3924
    %v4976 = vadd.f32 %v4975, %v3926
    %v4977 = vadd.f32 %v4976, %v3928
    %v4978 = vadd.f32 %v4977, %v3930
    %v4979 = vrot.slane %v4978, 4
    %v4980 = vadd.f32 %v4978, %v4979
    %v4981 = vrot.slane %v4980, 2
    %v4982 = vadd.f32 %v4980, %v4981
    %v4983 = vrot.slane %v4982, 1
    %v4984 = vadd.f32 %v4982, %v4983
    %v4985 = vadd.f32 %v3931, %v3933
    %v4986 = vadd.f32 %v4985, %v3935
    %v4987 = vadd.f32 %v4986, %v3937
    %v4988 = vadd.f32 %v4987, %v3939
    %v4989 = vadd.f32 %v4988, %v3941
    %v4990 = vadd.f32 %v4989, %v3943
    %v4991 = vadd.f32 %v4990, %v3945
    %v4992 = vadd.f32 %v4991, %v3947
    %v4993 = vadd.f32 %v4992, %v3949
    %v4994 = vadd.f32 %v4993, %v3951
    %v4995 = vadd.f32 %v4994, %v3953
    %v4996 = vadd.f32 %v4995, %v3955
    %v4997 = vadd.f32 %v4996, %v3957
    %v4998 = vadd.f32 %v4997, %v3959
    %v4999 = vadd.f32 %v4998, %v3961
    %v5000 = vadd.f32 %v4999, %v3963
    %v5001 = vadd.f32 %v5000, %v3965
    %v5002 = vadd.f32 %v5001, %v3967
    %v5003 = vadd.f32 %v5002, %v3969
    %v5004 = vadd.f32 %v5003, %v3971
    %v5005 = vadd.f32 %v5004, %v3973
    %v5006 = vadd.f32 %v5005, %v3975
    %v5007 = vadd.f32 %v5006, %v3977
    %v5008 = vadd.f32 %v5007, %v3979
    %v5009 = vadd.f32 %v5008, %v3981
    %v5010 = vadd.f32 %v5009, %v3983
    %v5011 = vadd.f32 %v5010, %v3985
    %v5012 = vadd.f32 %v5011, %v3987
    %v5013 = vadd.f32 %v5012, %v3989
    %v5014 = vadd.f32 %v5013, %v3991
    %v5015 = vadd.f32 %v5014, %v3993
    %v5016 = vrot.slane %v5015, 4
    %v5017 = vadd.f32 %v5015, %v5016
    %v5018 = vrot.slane %v5017, 2
    %v5019 = vadd.f32 %v5017, %v5018
    %v5020 = vrot.slane %v5019, 1
    %v5021 = vadd.f32 %v5019, %v5020
    %v5022 = vadd.f32 %v3932, %v3934
    %v5023 = vadd.f32 %v5022, %v3936
    %v5024 = vadd.f32 %v5023, %v3938
    %v5025 = vadd.f32 %v5024, %v3940
    %v5026 = vadd.f32 %v5025, %v3942
    %v5027 = vadd.f32 %v5026, %v3944
    %v5028 = vadd.f32 %v5027, %v3946
    %v5029 = vadd.f32 %v5028, %v3948
    %v5030 = vadd.f32 %v5029, %v3950
    %v5031 = vadd.f32 %v5030, %v3952
    %v5032 = vadd.f32 %v5031, %v3954
    %v5033 = vadd.f32 %v5032, %v3956
    %v5034 = vadd.f32 %v5033, %v3958
    %v5035 = vadd.f32 %v5034, %v3960
    %v5036 = vadd.f32 %v5035, %v3962
    %v5037 = vadd.f32 %v5036, %v3964
    %v5038 = vadd.f32 %v5037, %v3966
    %v5039 = vadd.f32 %v5038, %v3968
    %v5040 = vadd.f32 %v5039, %v3970
    %v5041 = vadd.f32 %v5040, %v3972
    %v5042 = vadd.f32 %v5041, %v3974
    %v5043 = vadd.f32 %v5042, %v3976
    %v5044 = vadd.f32 %v5043, %v3978
    %v5045 = vadd.f32 %v5044, %v3980
    %v5046 = vadd.f32 %v5045, %v3982
    %v5047 = vadd.f32 %v5046, %v3984
    %v5048 = vadd.f32 %v5047, %v3986
    %v5049 = vadd.f32 %v5048, %v3988
    %v5050 = vadd.f32 %v5049, %v3990
    %v5051 = vadd.f32 %v5050, %v3992
    %v5052 = vadd.f32 %v5051, %v3994
    %v5053 = vrot.slane %v5052, 4
    %v5054 = vadd.f32 %v5052, %v5053
    %v5055 = vrot.slane %v5054, 2
    %v5056 = vadd.f32 %v5054, %v5055
    %v5057 = vrot.slane %v5056, 1
    %v5058 = vadd.f32 %v5056, %v5057
    %v5059 = vadd.f32 %v3995, %v3997
    %v5060 = vadd.f32 %v5059, %v3999
    %v5061 = vadd.f32 %v5060, %v4001
    %v5062 = vadd.f32 %v5061, %v4003
    %v5063 = vadd.f32 %v5062, %v4005
    %v5064 = vadd.f32 %v5063, %v4007
    %v5065 = vadd.f32 %v5064, %v4009
    %v5066 = vadd.f32 %v5065, %v4011
    %v5067 = vadd.f32 %v5066, %v4013
    %v5068 = vadd.f32 %v5067, %v4015
    %v5069 = vadd.f32 %v5068, %v4017
    %v5070 = vadd.f32 %v5069, %v4019
    %v5071 = vadd.f32 %v5070, %v4021
    %v5072 = vadd.f32 %v5071, %v4023
    %v5073 = vadd.f32 %v5072, %v4025
    %v5074 = vadd.f32 %v5073, %v4027
    %v5075 = vadd.f32 %v5074, %v4029
    %v5076 = vadd.f32 %v5075, %v4031
    %v5077 = vadd.f32 %v5076, %v4033
    %v5078 = vadd.f32 %v5077, %v4035
    %v5079 = vadd.f32 %v5078, %v4037
    %v5080 = vadd.f32 %v5079, %v4039
    %v5081 = vadd.f32 %v5080, %v4041
    %v5082 = vadd.f32 %v5081, %v4043
    %v5083 = vadd.f32 %v5082, %v4045
    %v5084 = vadd.f32 %v5083, %v4047
    %v5085 = vadd.f32 %v5084, %v4049
    %v5086 = vadd.f32 %v5085, %v4051
    %v5087 = vadd.f32 %v5086, %v4053
    %v5088 = vadd.f32 %v5087, %v4055
    %v5089 = vadd.f32 %v5088, %v4057
    %v5090 = vrot.slane %v5089, 4
    %v5091 = vadd.f32 %v5089, %v5090
    %v5092 = vrot.slane %v5091, 2
    %v5093 = vadd.f32 %v5091, %v5092
    %v5094 = vrot.slane %v5093, 1
    %v5095 = vadd.f32 %v5093, %v5094
    %v5096 = vadd.f32 %v3996, %v3998
    %v5097 = vadd.f32 %v5096, %v4000
    %v5098 = vadd.f32 %v5097, %v4002
    %v5099 = vadd.f32 %v5098, %v4004
    %v5100 = vadd.f32 %v5099, %v4006
    %v5101 = vadd.f32 %v5100, %v4008
    %v5102 = vadd.f32 %v5101, %v4010
    %v5103 = vadd.f32 %v5102, %v4012
    %v5104 = vadd.f32 %v5103, %v4014
    %v5105 = vadd.f32 %v5104, %v4016
    %v5106 = vadd.f32 %v5105, %v4018
    %v5107 = vadd.f32 %v5106, %v4020
    %v5108 = vadd.f32 %v5107, %v4022
    %v5109 = vadd.f32 %v5108, %v4024
    %v5110 = vadd.f32 %v5109, %v4026
    %v5111 = vadd.f32 %v5110, %v4028
    %v5112 = vadd.f32 %v5111, %v4030
    %v5113 = vadd.f32 %v5112, %v4032
    %v5114 = vadd.f32 %v5113, %v4034
    %v5115 = vadd.f32 %v5114, %v4036
    %v5116 = vadd.f32 %v5115, %v4038
    %v5117 = vadd.f32 %v5116, %v4040
    %v5118 = vadd.f32 %v5117, %v4042
    %v5119 = vadd.f32 %v5118, %v4044
    %v5120 = vadd.f32 %v5119, %v4046
    %v5121 = vadd.f32 %v5120, %v4048
    %v5122 = vadd.f32 %v5121, %v4050
    %v5123 = vadd.f32 %v5122, %v4052
    %v5124 = vadd.f32 %v5123, %v4054
    %v5125 = vadd.f32 %v5124, %v4056
    %v5126 = vadd.f32 %v5125, %v4058
    %v5127 = vrot.slane %v5126, 4
    %v5128 = vadd.f32 %v5126, %v5127
    %v5129 = vrot.slane %v5128, 2
    %v5130 = vadd.f32 %v5128, %v5129
    %v5131 = vrot.slane %v5130, 1
    %v5132 = vadd.f32 %v5130, %v5131
    %v5133 = vadd.f32 %v4059, %v4061
    %v5134 = vadd.f32 %v5133, %v4063
    %v5135 = vadd.f32 %v5134, %v4065
    %v5136 = vadd.f32 %v5135, %v4067
    %v5137 = vadd.f32 %v5136, %v4069
    %v5138 = vadd.f32 %v5137, %v4071
    %v5139 = vadd.f32 %v5138, %v4073
    %v5140 = vadd.f32 %v5139, %v4075
    %v5141 = vadd.f32 %v5140, %v4077
    %v5142 = vadd.f32 %v5141, %v4079
    %v5143 = vadd.f32 %v5142, %v4081
    %v5144 = vadd.f32 %v5143, %v4083
    %v5145 = vadd.f32 %v5144, %v4085
    %v5146 = vadd.f32 %v5145, %v4087
    %v5147 = vadd.f32 %v5146, %v4089
    %v5148 = vadd.f32 %v5147, %v4091
    %v5149 = vadd.f32 %v5148, %v4093
    %v5150 = vadd.f32 %v5149, %v4095
    %v5151 = vadd.f32 %v5150, %v4097
    %v5152 = vadd.f32 %v5151, %v4099
    %v5153 = vadd.f32 %v5152, %v4101
    %v5154 = vadd.f32 %v5153, %v4103
    %v5155 = vadd.f32 %v5154, %v4105
    %v5156 = vadd.f32 %v5155, %v4107
    %v5157 = vadd.f32 %v5156, %v4109
    %v5158 = vadd.f32 %v5157, %v4111
    %v5159 = vadd.f32 %v5158, %v4113
    %v5160 = vadd.f32 %v5159, %v4115
    %v5161 = vadd.f32 %v5160, %v4117
    %v5162 = vadd.f32 %v5161, %v4119
    %v5163 = vadd.f32 %v5162, %v4121
    %v5164 = vrot.slane %v5163, 4
    %v5165 = vadd.f32 %v5163, %v5164
    %v5166 = vrot.slane %v5165, 2
    %v5167 = vadd.f32 %v5165, %v5166
    %v5168 = vrot.slane %v5167, 1
    %v5169 = vadd.f32 %v5167, %v5168
    %v5170 = vadd.f32 %v4060, %v4062
    %v5171 = vadd.f32 %v5170, %v4064
    %v5172 = vadd.f32 %v5171, %v4066
    %v5173 = vadd.f32 %v5172, %v4068
    %v5174 = vadd.f32 %v5173, %v4070
    %v5175 = vadd.f32 %v5174, %v4072
    %v5176 = vadd.f32 %v5175, %v4074
    %v5177 = vadd.f32 %v5176, %v4076
    %v5178 = vadd.f32 %v5177, %v4078
    %v5179 = vadd.f32 %v5178, %v4080
    %v5180 = vadd.f32 %v5179, %v4082
    %v5181 = vadd.f32 %v5180, %v4084
    %v5182 = vadd.f32 %v5181, %v4086
    %v5183 = vadd.f32 %v5182, %v4088
    %v5184 = vadd.f32 %v5183, %v4090
    %v5185 = vadd.f32 %v5184, %v4092
    %v5186 = vadd.f32 %v5185, %v4094
    %v5187 = vadd.f32 %v5186, %v4096
    %v5188 = vadd.f32 %v5187, %v4098
    %v5189 = vadd.f32 %v5188, %v4100
    %v5190 = vadd.f32 %v5189, %v4102
    %v5191 = vadd.f32 %v5190, %v4104
    %v5192 = vadd.f32 %v5191, %v4106
    %v5193 = vadd.f32 %v5192, %v4108
    %v5194 = vadd.f32 %v5193, %v4110
    %v5195 = vadd.f32 %v5194, %v4112
    %v5196 = vadd.f32 %v5195, %v4114
    %v5197 = vadd.f32 %v5196, %v4116
    %v5198 = vadd.f32 %v5197, %v4118
    %v5199 = vadd.f32 %v5198, %v4120
    %v5200 = vadd.f32 %v5199, %v4122
    %v5201 = vrot.slane %v5200, 4
    %v5202 = vadd.f32 %v5200, %v5201
    %v5203 = vrot.slane %v5202, 2
    %v5204 = vadd.f32 %v5202, %v5203
    %v5205 = vrot.slane %v5204, 1
    %v5206 = vadd.f32 %v5204, %v5205
    %v5207 = vadd.f32 %v4123, %v4125
    %v5208 = vadd.f32 %v5207, %v4127
    %v5209 = vadd.f32 %v5208, %v4129
    %v5210 = vadd.f32 %v5209, %v4131
    %v5211 = vadd.f32 %v5210, %v4133
    %v5212 = vadd.f32 %v5211, %v4135
    %v5213 = vadd.f32 %v5212, %v4137
    %v5214 = vadd.f32 %v5213, %v4139
    %v5215 = vadd.f32 %v5214, %v4141
    %v5216 = vadd.f32 %v5215, %v4143
    %v5217 = vadd.f32 %v5216, %v4145
    %v5218 = vadd.f32 %v5217, %v4147
    %v5219 = vadd.f32 %v5218, %v4149
    %v5220 = vadd.f32 %v5219, %v4151
    %v5221 = vadd.f32 %v5220, %v4153
    %v5222 = vadd.f32 %v5221, %v4155
    %v5223 = vadd.f32 %v5222, %v4157
    %v5224 = vadd.f32 %v5223, %v4159
    %v5225 = vadd.f32 %v5224, %v4161
    %v5226 = vadd.f32 %v5225, %v4163
    %v5227 = vadd.f32 %v5226, %v4165
    %v5228 = vadd.f32 %v5227, %v4167
    %v5229 = vadd.f32 %v5228, %v4169
    %v5230 = vadd.f32 %v5229, %v4171
    %v5231 = vadd.f32 %v5230, %v4173
    %v5232 = vadd.f32 %v5231, %v4175
    %v5233 = vadd.f32 %v5232, %v4177
    %v5234 = vadd.f32 %v5233, %v4179
    %v5235 = vadd.f32 %v5234, %v4181
    %v5236 = vadd.f32 %v5235, %v4183
    %v5237 = vadd.f32 %v5236, %v4185
    %v5238 = vrot.slane %v5237, 4
    %v5239 = vadd.f32 %v5237, %v5238
    %v5240 = vrot.slane %v5239, 2
    %v5241 = vadd.f32 %v5239, %v5240
    %v5242 = vrot.slane %v5241, 1
    %v5243 = vadd.f32 %v5241, %v5242
    %v5244 = vadd.f32 %v4124, %v4126
    %v5245 = vadd.f32 %v5244, %v4128
    %v5246 = vadd.f32 %v5245, %v4130
    %v5247 = vadd.f32 %v5246, %v4132
    %v5248 = vadd.f32 %v5247, %v4134
    %v5249 = vadd.f32 %v5248, %v4136
    %v5250 = vadd.f32 %v5249, %v4138
    %v5251 = vadd.f32 %v5250, %v4140
    %v5252 = vadd.f32 %v5251, %v4142
    %v5253 = vadd.f32 %v5252, %v4144
    %v5254 = vadd.f32 %v5253, %v4146
    %v5255 = vadd.f32 %v5254, %v4148
    %v5256 = vadd.f32 %v5255, %v4150
    %v5257 = vadd.f32 %v5256, %v4152
    %v5258 = vadd.f32 %v5257, %v4154
    %v5259 = vadd.f32 %v5258, %v4156
    %v5260 = vadd.f32 %v5259, %v4158
    %v5261 = vadd.f32 %v5260, %v4160
    %v5262 = vadd.f32 %v5261, %v4162
    %v5263 = vadd.f32 %v5262, %v4164
    %v5264 = vadd.f32 %v5263, %v4166
    %v5265 = vadd.f32 %v5264, %v4168
    %v5266 = vadd.f32 %v5265, %v4170
    %v5267 = vadd.f32 %v5266, %v4172
    %v5268 = vadd.f32 %v5267, %v4174
    %v5269 = vadd.f32 %v5268, %v4176
    %v5270 = vadd.f32 %v5269, %v4178
    %v5271 = vadd.f32 %v5270, %v4180
    %v5272 = vadd.f32 %v5271, %v4182
    %v5273 = vadd.f32 %v5272, %v4184
    %v5274 = vadd.f32 %v5273, %v4186
    %v5275 = vrot.slane %v5274, 4
    %v5276 = vadd.f32 %v5274, %v5275
    %v5277 = vrot.slane %v5276, 2
    %v5278 = vadd.f32 %v5276, %v5277
    %v5279 = vrot.slane %v5278, 1
    %v5280 = vadd.f32 %v5278, %v5279
    %v5281 = vadd.f32 %v4187, %v4189
    %v5282 = vadd.f32 %v5281, %v4191
    %v5283 = vadd.f32 %v5282, %v4193
    %v5284 = vadd.f32 %v5283, %v4195
    %v5285 = vadd.f32 %v5284, %v4197
    %v5286 = vadd.f32 %v5285, %v4199
    %v5287 = vadd.f32 %v5286, %v4201
    %v5288 = vadd.f32 %v5287, %v4203
    %v5289 = vadd.f32 %v5288, %v4205
    %v5290 = vadd.f32 %v5289, %v4207
    %v5291 = vadd.f32 %v5290, %v4209
    %v5292 = vadd.f32 %v5291, %v4211
    %v5293 = vadd.f32 %v5292, %v4213
    %v5294 = vadd.f32 %v5293, %v4215
    %v5295 = vadd.f32 %v5294, %v4217
    %v5296 = vadd.f32 %v5295, %v4219
    %v5297 = vadd.f32 %v5296, %v4221
    %v5298 = vadd.f32 %v5297, %v4223
    %v5299 = vadd.f32 %v5298, %v4225
    %v5300 = vadd.f32 %v5299, %v4227
    %v5301 = vadd.f32 %v5300, %v4229
    %v5302 = vadd.f32 %v5301, %v4231
    %v5303 = vadd.f32 %v5302, %v4233
    %v5304 = vadd.f32 %v5303, %v4235
    %v5305 = vadd.f32 %v5304, %v4237
    %v5306 = vadd.f32 %v5305, %v4239
    %v5307 = vadd.f32 %v5306, %v4241
    %v5308 = vadd.f32 %v5307, %v4243
    %v5309 = vadd.f32 %v5308, %v4245
    %v5310 = vadd.f32 %v5309, %v4247
    %v5311 = vadd.f32 %v5310, %v4249
    %v5312 = vrot.slane %v5311, 4
    %v5313 = vadd.f32 %v5311, %v5312
    %v5314 = vrot.slane %v5313, 2
    %v5315 = vadd.f32 %v5313, %v5314
    %v5316 = vrot.slane %v5315, 1
    %v5317 = vadd.f32 %v5315, %v5316
    %v5318 = vadd.f32 %v4188, %v4190
    %v5319 = vadd.f32 %v5318, %v4192
    %v5320 = vadd.f32 %v5319, %v4194
    %v5321 = vadd.f32 %v5320, %v4196
    %v5322 = vadd.f32 %v5321, %v4198
    %v5323 = vadd.f32 %v5322, %v4200
    %v5324 = vadd.f32 %v5323, %v4202
    %v5325 = vadd.f32 %v5324, %v4204
    %v5326 = vadd.f32 %v5325, %v4206
    %v5327 = vadd.f32 %v5326, %v4208
    %v5328 = vadd.f32 %v5327, %v4210
    %v5329 = vadd.f32 %v5328, %v4212
    %v5330 = vadd.f32 %v5329, %v4214
    %v5331 = vadd.f32 %v5330, %v4216
    %v5332 = vadd.f32 %v5331, %v4218
    %v5333 = vadd.f32 %v5332, %v4220
    %v5334 = vadd.f32 %v5333, %v4222
    %v5335 = vadd.f32 %v5334, %v4224
    %v5336 = vadd.f32 %v5335, %v4226
    %v5337 = vadd.f32 %v5336, %v4228
    %v5338 = vadd.f32 %v5337, %v4230
    %v5339 = vadd.f32 %v5338, %v4232
    %v5340 = vadd.f32 %v5339, %v4234
    %v5341 = vadd.f32 %v5340, %v4236
    %v5342 = vadd.f32 %v5341, %v4238
    %v5343 = vadd.f32 %v5342, %v4240
    %v5344 = vadd.f32 %v5343, %v4242
    %v5345 = vadd.f32 %v5344, %v4244
    %v5346 = vadd.f32 %v5345, %v4246
    %v5347 = vadd.f32 %v5346, %v4248
    %v5348 = vadd.f32 %v5347, %v4250
    %v5349 = vrot.slane %v5348, 4
    %v5350 = vadd.f32 %v5348, %v5349
    %v5351 = vrot.slane %v5350, 2
    %v5352 = vadd.f32 %v5350, %v5351
    %v5353 = vrot.slane %v5352, 1
    %v5354 = vadd.f32 %v5352, %v5353
    %v5355 = vadd.f32 %v4251, %v4253
    %v5356 = vadd.f32 %v5355, %v4255
    %v5357 = vadd.f32 %v5356, %v4257
    %v5358 = vadd.f32 %v5357, %v4259
    %v5359 = vadd.f32 %v5358, %v4261
    %v5360 = vadd.f32 %v5359, %v4263
    %v5361 = vadd.f32 %v5360, %v4265
    %v5362 = vadd.f32 %v5361, %v4267
    %v5363 = vadd.f32 %v5362, %v4269
    %v5364 = vadd.f32 %v5363, %v4271
    %v5365 = vadd.f32 %v5364, %v4273
    %v5366 = vadd.f32 %v5365, %v4275
    %v5367 = vadd.f32 %v5366, %v4277
    %v5368 = vadd.f32 %v5367, %v4279
    %v5369 = vadd.f32 %v5368, %v4281
    %v5370 = vadd.f32 %v5369, %v4283
    %v5371 = vadd.f32 %v5370, %v4285
    %v5372 = vadd.f32 %v5371, %v4287
    %v5373 = vadd.f32 %v5372, %v4289
    %v5374 = vadd.f32 %v5373, %v4291
    %v5375 = vadd.f32 %v5374, %v4293
    %v5376 = vadd.f32 %v5375, %v4295
    %v5377 = vadd.f32 %v5376, %v4297
    %v5378 = vadd.f32 %v5377, %v4299
    %v5379 = vadd.f32 %v5378, %v4301
    %v5380 = vadd.f32 %v5379, %v4303
    %v5381 = vadd.f32 %v5380, %v4305
    %v5382 = vadd.f32 %v5381, %v4307
    %v5383 = vadd.f32 %v5382, %v4309
    %v5384 = vadd.f32 %v5383, %v4311
    %v5385 = vadd.f32 %v5384, %v4313
    %v5386 = vrot.slane %v5385, 4
    %v5387 = vadd.f32 %v5385, %v5386
    %v5388 = vrot.slane %v5387, 2
    %v5389 = vadd.f32 %v5387, %v5388
    %v5390 = vrot.slane %v5389, 1
    %v5391 = vadd.f32 %v5389, %v5390
    %v5392 = vadd.f32 %v4252, %v4254
    %v5393 = vadd.f32 %v5392, %v4256
    %v5394 = vadd.f32 %v5393, %v4258
    %v5395 = vadd.f32 %v5394, %v4260
    %v5396 = vadd.f32 %v5395, %v4262
    %v5397 = vadd.f32 %v5396, %v4264
    %v5398 = vadd.f32 %v5397, %v4266
    %v5399 = vadd.f32 %v5398, %v4268
    %v5400 = vadd.f32 %v5399, %v4270
    %v5401 = vadd.f32 %v5400, %v4272
    %v5402 = vadd.f32 %v5401, %v4274
    %v5403 = vadd.f32 %v5402, %v4276
    %v5404 = vadd.f32 %v5403, %v4278
    %v5405 = vadd.f32 %v5404, %v4280
    %v5406 = vadd.f32 %v5405, %v4282
    %v5407 = vadd.f32 %v5406, %v4284
    %v5408 = vadd.f32 %v5407, %v4286
    %v5409 = vadd.f32 %v5408, %v4288
    %v5410 = vadd.f32 %v5409, %v4290
    %v5411 = vadd.f32 %v5410, %v4292
    %v5412 = vadd.f32 %v5411, %v4294
    %v5413 = vadd.f32 %v5412, %v4296
    %v5414 = vadd.f32 %v5413, %v4298
    %v5415 = vadd.f32 %v5414, %v4300
    %v5416 = vadd.f32 %v5415, %v4302
    %v5417 = vadd.f32 %v5416, %v4304
    %v5418 = vadd.f32 %v5417, %v4306
    %v5419 = vadd.f32 %v5418, %v4308
    %v5420 = vadd.f32 %v5419, %v4310
    %v5421 = vadd.f32 %v5420, %v4312
    %v5422 = vadd.f32 %v5421, %v4314
    %v5423 = vrot.slane %v5422, 4
    %v5424 = vadd.f32 %v5422, %v5423
    %v5425 = vrot.slane %v5424, 2
    %v5426 = vadd.f32 %v5424, %v5425
    %v5427 = vrot.slane %v5426, 1
    %v5428 = vadd.f32 %v5426, %v5427
    %v5429 = vadd.f32 %v4315, %v4317
    %v5430 = vadd.f32 %v5429, %v4319
    %v5431 = vadd.f32 %v5430, %v4321
    %v5432 = vadd.f32 %v5431, %v4323
    %v5433 = vadd.f32 %v5432, %v4325
    %v5434 = vadd.f32 %v5433, %v4327
    %v5435 = vadd.f32 %v5434, %v4329
    %v5436 = vadd.f32 %v5435, %v4331
    %v5437 = vadd.f32 %v5436, %v4333
    %v5438 = vadd.f32 %v5437, %v4335
    %v5439 = vadd.f32 %v5438, %v4337
    %v5440 = vadd.f32 %v5439, %v4339
    %v5441 = vadd.f32 %v5440, %v4341
    %v5442 = vadd.f32 %v5441, %v4343
    %v5443 = vadd.f32 %v5442, %v4345
    %v5444 = vadd.f32 %v5443, %v4347
    %v5445 = vadd.f32 %v5444, %v4349
    %v5446 = vadd.f32 %v5445, %v4351
    %v5447 = vadd.f32 %v5446, %v4353
    %v5448 = vadd.f32 %v5447, %v4355
    %v5449 = vadd.f32 %v5448, %v4357
    %v5450 = vadd.f32 %v5449, %v4359
    %v5451 = vadd.f32 %v5450, %v4361
    %v5452 = vadd.f32 %v5451, %v4363
    %v5453 = vadd.f32 %v5452, %v4365
    %v5454 = vadd.f32 %v5453, %v4367
    %v5455 = vadd.f32 %v5454, %v4369
    %v5456 = vadd.f32 %v5455, %v4371
    %v5457 = vadd.f32 %v5456, %v4373
    %v5458 = vadd.f32 %v5457, %v4375
    %v5459 = vadd.f32 %v5458, %v4377
    %v5460 = vrot.slane %v5459, 4
    %v5461 = vadd.f32 %v5459, %v5460
    %v5462 = vrot.slane %v5461, 2
    %v5463 = vadd.f32 %v5461, %v5462
    %v5464 = vrot.slane %v5463, 1
    %v5465 = vadd.f32 %v5463, %v5464
    %v5466 = vadd.f32 %v4316, %v4318
    %v5467 = vadd.f32 %v5466, %v4320
    %v5468 = vadd.f32 %v5467, %v4322
    %v5469 = vadd.f32 %v5468, %v4324
    %v5470 = vadd.f32 %v5469, %v4326
    %v5471 = vadd.f32 %v5470, %v4328
    %v5472 = vadd.f32 %v5471, %v4330
    %v5473 = vadd.f32 %v5472, %v4332
    %v5474 = vadd.f32 %v5473, %v4334
    %v5475 = vadd.f32 %v5474, %v4336
    %v5476 = vadd.f32 %v5475, %v4338
    %v5477 = vadd.f32 %v5476, %v4340
    %v5478 = vadd.f32 %v5477, %v4342
    %v5479 = vadd.f32 %v5478, %v4344
    %v5480 = vadd.f32 %v5479, %v4346
    %v5481 = vadd.f32 %v5480, %v4348
    %v5482 = vadd.f32 %v5481, %v4350
    %v5483 = vadd.f32 %v5482, %v4352
    %v5484 = vadd.f32 %v5483, %v4354
    %v5485 = vadd.f32 %v5484, %v4356
    %v5486 = vadd.f32 %v5485, %v4358
    %v5487 = vadd.f32 %v5486, %v4360
    %v5488 = vadd.f32 %v5487, %v4362
    %v5489 = vadd.f32 %v5488, %v4364
    %v5490 = vadd.f32 %v5489, %v4366
    %v5491 = vadd.f32 %v5490, %v4368
    %v5492 = vadd.f32 %v5491, %v4370
    %v5493 = vadd.f32 %v5492, %v4372
    %v5494 = vadd.f32 %v5493, %v4374
    %v5495 = vadd.f32 %v5494, %v4376
    %v5496 = vadd.f32 %v5495, %v4378
    %v5497 = vrot.slane %v5496, 4
    %v5498 = vadd.f32 %v5496, %v5497
    %v5499 = vrot.slane %v5498, 2
    %v5500 = vadd.f32 %v5498, %v5499
    %v5501 = vrot.slane %v5500, 1
    %v5502 = vadd.f32 %v5500, %v5501
    %v5503 = vadd.f32 %v4379, %v4381
    %v5504 = vadd.f32 %v5503, %v4383
    %v5505 = vadd.f32 %v5504, %v4385
    %v5506 = vadd.f32 %v5505, %v4387
    %v5507 = vadd.f32 %v5506, %v4389
    %v5508 = vadd.f32 %v5507, %v4391
    %v5509 = vadd.f32 %v5508, %v4393
    %v5510 = vadd.f32 %v5509, %v4395
    %v5511 = vadd.f32 %v5510, %v4397
    %v5512 = vadd.f32 %v5511, %v4399
    %v5513 = vadd.f32 %v5512, %v4401
    %v5514 = vadd.f32 %v5513, %v4403
    %v5515 = vadd.f32 %v5514, %v4405
    %v5516 = vadd.f32 %v5515, %v4407
    %v5517 = vadd.f32 %v5516, %v4409
    %v5518 = vadd.f32 %v5517, %v4411
    %v5519 = vadd.f32 %v5518, %v4413
    %v5520 = vadd.f32 %v5519, %v4415
    %v5521 = vadd.f32 %v5520, %v4417
    %v5522 = vadd.f32 %v5521, %v4419
    %v5523 = vadd.f32 %v5522, %v4421
    %v5524 = vadd.f32 %v5523, %v4423
    %v5525 = vadd.f32 %v5524, %v4425
    %v5526 = vadd.f32 %v5525, %v4427
    %v5527 = vadd.f32 %v5526, %v4429
    %v5528 = vadd.f32 %v5527, %v4431
    %v5529 = vadd.f32 %v5528, %v4433
    %v5530 = vadd.f32 %v5529, %v4435
    %v5531 = vadd.f32 %v5530, %v4437
    %v5532 = vadd.f32 %v5531, %v4439
    %v5533 = vadd.f32 %v5532, %v4441
    %v5534 = vrot.slane %v5533, 4
    %v5535 = vadd.f32 %v5533, %v5534
    %v5536 = vrot.slane %v5535, 2
    %v5537 = vadd.f32 %v5535, %v5536
    %v5538 = vrot.slane %v5537, 1
    %v5539 = vadd.f32 %v5537, %v5538
    %v5540 = vadd.f32 %v4380, %v4382
    %v5541 = vadd.f32 %v5540, %v4384
    %v5542 = vadd.f32 %v5541, %v4386
    %v5543 = vadd.f32 %v5542, %v4388
    %v5544 = vadd.f32 %v5543, %v4390
    %v5545 = vadd.f32 %v5544, %v4392
    %v5546 = vadd.f32 %v5545, %v4394
    %v5547 = vadd.f32 %v5546, %v4396
    %v5548 = vadd.f32 %v5547, %v4398
    %v5549 = vadd.f32 %v5548, %v4400
    %v5550 = vadd.f32 %v5549, %v4402
    %v5551 = vadd.f32 %v5550, %v4404
    %v5552 = vadd.f32 %v5551, %v4406
    %v5553 = vadd.f32 %v5552, %v4408
    %v5554 = vadd.f32 %v5553, %v4410
    %v5555 = vadd.f32 %v5554, %v4412
    %v5556 = vadd.f32 %v5555, %v4414
    %v5557 = vadd.f32 %v5556, %v4416
    %v5558 = vadd.f32 %v5557, %v4418
    %v5559 = vadd.f32 %v5558, %v4420
    %v5560 = vadd.f32 %v5559, %v4422
    %v5561 = vadd.f32 %v5560, %v4424
    %v5562 = vadd.f32 %v5561, %v4426
    %v5563 = vadd.f32 %v5562, %v4428
    %v5564 = vadd.f32 %v5563, %v4430
    %v5565 = vadd.f32 %v5564, %v4432
    %v5566 = vadd.f32 %v5565, %v4434
    %v5567 = vadd.f32 %v5566, %v4436
    %v5568 = vadd.f32 %v5567, %v4438
    %v5569 = vadd.f32 %v5568, %v4440
    %v5570 = vadd.f32 %v5569, %v4442
    %v5571 = vrot.slane %v5570, 4
    %v5572 = vadd.f32 %v5570, %v5571
    %v5573 = vrot.slane %v5572, 2
    %v5574 = vadd.f32 %v5572, %v5573
    %v5575 = vrot.slane %v5574, 1
    %v5576 = vadd.f32 %v5574, %v5575
    %v5577 = vadd.f32 %v4443, %v4445
    %v5578 = vadd.f32 %v5577, %v4447
    %v5579 = vadd.f32 %v5578, %v4449
    %v5580 = vadd.f32 %v5579, %v4451
    %v5581 = vadd.f32 %v5580, %v4453
    %v5582 = vadd.f32 %v5581, %v4455
    %v5583 = vadd.f32 %v5582, %v4457
    %v5584 = vadd.f32 %v5583, %v4459
    %v5585 = vadd.f32 %v5584, %v4461
    %v5586 = vadd.f32 %v5585, %v4463
    %v5587 = vadd.f32 %v5586, %v4465
    %v5588 = vadd.f32 %v5587, %v4467
    %v5589 = vadd.f32 %v5588, %v4469
    %v5590 = vadd.f32 %v5589, %v4471
    %v5591 = vadd.f32 %v5590, %v4473
    %v5592 = vadd.f32 %v5591, %v4475
    %v5593 = vadd.f32 %v5592, %v4477
    %v5594 = vadd.f32 %v5593, %v4479
    %v5595 = vadd.f32 %v5594, %v4481
    %v5596 = vadd.f32 %v5595, %v4483
    %v5597 = vadd.f32 %v5596, %v4485
    %v5598 = vadd.f32 %v5597, %v4487
    %v5599 = vadd.f32 %v5598, %v4489
    %v5600 = vadd.f32 %v5599, %v4491
    %v5601 = vadd.f32 %v5600, %v4493
    %v5602 = vadd.f32 %v5601, %v4495
    %v5603 = vadd.f32 %v5602, %v4497
    %v5604 = vadd.f32 %v5603, %v4499
    %v5605 = vadd.f32 %v5604, %v4501
    %v5606 = vadd.f32 %v5605, %v4503
    %v5607 = vadd.f32 %v5606, %v4505
    %v5608 = vrot.slane %v5607, 4
    %v5609 = vadd.f32 %v5607, %v5608
    %v5610 = vrot.slane %v5609, 2
    %v5611 = vadd.f32 %v5609, %v5610
    %v5612 = vrot.slane %v5611, 1
    %v5613 = vadd.f32 %v5611, %v5612
    %v5614 = vadd.f32 %v4444, %v4446
    %v5615 = vadd.f32 %v5614, %v4448
    %v5616 = vadd.f32 %v5615, %v4450
    %v5617 = vadd.f32 %v5616, %v4452
    %v5618 = vadd.f32 %v5617, %v4454
    %v5619 = vadd.f32 %v5618, %v4456
    %v5620 = vadd.f32 %v5619, %v4458
    %v5621 = vadd.f32 %v5620, %v4460
    %v5622 = vadd.f32 %v5621, %v4462
    %v5623 = vadd.f32 %v5622, %v4464
    %v5624 = vadd.f32 %v5623, %v4466
    %v5625 = vadd.f32 %v5624, %v4468
    %v5626 = vadd.f32 %v5625, %v4470
    %v5627 = vadd.f32 %v5626, %v4472
    %v5628 = vadd.f32 %v5627, %v4474
    %v5629 = vadd.f32 %v5628, %v4476
    %v5630 = vadd.f32 %v5629, %v4478
    %v5631 = vadd.f32 %v5630, %v4480
    %v5632 = vadd.f32 %v5631, %v4482
    %v5633 = vadd.f32 %v5632, %v4484
    %v5634 = vadd.f32 %v5633, %v4486
    %v5635 = vadd.f32 %v5634, %v4488
    %v5636 = vadd.f32 %v5635, %v4490
    %v5637 = vadd.f32 %v5636, %v4492
    %v5638 = vadd.f32 %v5637, %v4494
    %v5639 = vadd.f32 %v5638, %v4496
    %v5640 = vadd.f32 %v5639, %v4498
    %v5641 = vadd.f32 %v5640, %v4500
    %v5642 = vadd.f32 %v5641, %v4502
    %v5643 = vadd.f32 %v5642, %v4504
    %v5644 = vadd.f32 %v5643, %v4506
    %v5645 = vrot.slane %v5644, 4
    %v5646 = vadd.f32 %v5644, %v5645
    %v5647 = vrot.slane %v5646, 2
    %v5648 = vadd.f32 %v5646, %v5647
    %v5649 = vrot.slane %v5648, 1
    %v5650 = vadd.f32 %v5648, %v5649
    %v5651 = vadd.f32 %v4507, %v4509
    %v5652 = vadd.f32 %v5651, %v4511
    %v5653 = vadd.f32 %v5652, %v4513
    %v5654 = vadd.f32 %v5653, %v4515
    %v5655 = vadd.f32 %v5654, %v4517
    %v5656 = vadd.f32 %v5655, %v4519
    %v5657 = vadd.f32 %v5656, %v4521
    %v5658 = vadd.f32 %v5657, %v4523
    %v5659 = vadd.f32 %v5658, %v4525
    %v5660 = vadd.f32 %v5659, %v4527
    %v5661 = vadd.f32 %v5660, %v4529
    %v5662 = vadd.f32 %v5661, %v4531
    %v5663 = vadd.f32 %v5662, %v4533
    %v5664 = vadd.f32 %v5663, %v4535
    %v5665 = vadd.f32 %v5664, %v4537
    %v5666 = vadd.f32 %v5665, %v4539
    %v5667 = vadd.f32 %v5666, %v4541
    %v5668 = vadd.f32 %v5667, %v4543
    %v5669 = vadd.f32 %v5668, %v4545
    %v5670 = vadd.f32 %v5669, %v4547
    %v5671 = vadd.f32 %v5670, %v4549
    %v5672 = vadd.f32 %v5671, %v4551
    %v5673 = vadd.f32 %v5672, %v4553
    %v5674 = vadd.f32 %v5673, %v4555
    %v5675 = vadd.f32 %v5674, %v4557
    %v5676 = vadd.f32 %v5675, %v4559
    %v5677 = vadd.f32 %v5676, %v4561
    %v5678 = vadd.f32 %v5677, %v4563
    %v5679 = vadd.f32 %v5678, %v4565
    %v5680 = vadd.f32 %v5679, %v4567
    %v5681 = vadd.f32 %v5680, %v4569
    %v5682 = vrot.slane %v5681, 4
    %v5683 = vadd.f32 %v5681, %v5682
    %v5684 = vrot.slane %v5683, 2
    %v5685 = vadd.f32 %v5683, %v5684
    %v5686 = vrot.slane %v5685, 1
    %v5687 = vadd.f32 %v5685, %v5686
    %v5688 = vadd.f32 %v4508, %v4510
    %v5689 = vadd.f32 %v5688, %v4512
    %v5690 = vadd.f32 %v5689, %v4514
    %v5691 = vadd.f32 %v5690, %v4516
    %v5692 = vadd.f32 %v5691, %v4518
    %v5693 = vadd.f32 %v5692, %v4520
    %v5694 = vadd.f32 %v5693, %v4522
    %v5695 = vadd.f32 %v5694, %v4524
    %v5696 = vadd.f32 %v5695, %v4526
    %v5697 = vadd.f32 %v5696, %v4528
    %v5698 = vadd.f32 %v5697, %v4530
    %v5699 = vadd.f32 %v5698, %v4532
    %v5700 = vadd.f32 %v5699, %v4534
    %v5701 = vadd.f32 %v5700, %v4536
    %v5702 = vadd.f32 %v5701, %v4538
    %v5703 = vadd.f32 %v5702, %v4540
    %v5704 = vadd.f32 %v5703, %v4542
    %v5705 = vadd.f32 %v5704, %v4544
    %v5706 = vadd.f32 %v5705, %v4546
    %v5707 = vadd.f32 %v5706, %v4548
    %v5708 = vadd.f32 %v5707, %v4550
    %v5709 = vadd.f32 %v5708, %v4552
    %v5710 = vadd.f32 %v5709, %v4554
    %v5711 = vadd.f32 %v5710, %v4556
    %v5712 = vadd.f32 %v5711, %v4558
    %v5713 = vadd.f32 %v5712, %v4560
    %v5714 = vadd.f32 %v5713, %v4562
    %v5715 = vadd.f32 %v5714, %v4564
    %v5716 = vadd.f32 %v5715, %v4566
    %v5717 = vadd.f32 %v5716, %v4568
    %v5718 = vadd.f32 %v5717, %v4570
    %v5719 = vrot.slane %v5718, 4
    %v5720 = vadd.f32 %v5718, %v5719
    %v5721 = vrot.slane %v5720, 2
    %v5722 = vadd.f32 %v5720, %v5721
    %v5723 = vrot.slane %v5722, 1
    %v5724 = vadd.f32 %v5722, %v5723
    %v5725 = vadd.f32 %v4571, %v4573
    %v5726 = vadd.f32 %v5725, %v4575
    %v5727 = vadd.f32 %v5726, %v4577
    %v5728 = vadd.f32 %v5727, %v4579
    %v5729 = vadd.f32 %v5728, %v4581
    %v5730 = vadd.f32 %v5729, %v4583
    %v5731 = vadd.f32 %v5730, %v4585
    %v5732 = vadd.f32 %v5731, %v4587
    %v5733 = vadd.f32 %v5732, %v4589
    %v5734 = vadd.f32 %v5733, %v4591
    %v5735 = vadd.f32 %v5734, %v4593
    %v5736 = vadd.f32 %v5735, %v4595
    %v5737 = vadd.f32 %v5736, %v4597
    %v5738 = vadd.f32 %v5737, %v4599
    %v5739 = vadd.f32 %v5738, %v4601
    %v5740 = vadd.f32 %v5739, %v4603
    %v5741 = vadd.f32 %v5740, %v4605
    %v5742 = vadd.f32 %v5741, %v4607
    %v5743 = vadd.f32 %v5742, %v4609
    %v5744 = vadd.f32 %v5743, %v4611
    %v5745 = vadd.f32 %v5744, %v4613
    %v5746 = vadd.f32 %v5745, %v4615
    %v5747 = vadd.f32 %v5746, %v4617
    %v5748 = vadd.f32 %v5747, %v4619
    %v5749 = vadd.f32 %v5748, %v4621
    %v5750 = vadd.f32 %v5749, %v4623
    %v5751 = vadd.f32 %v5750, %v4625
    %v5752 = vadd.f32 %v5751, %v4627
    %v5753 = vadd.f32 %v5752, %v4629
    %v5754 = vadd.f32 %v5753, %v4631
    %v5755 = vadd.f32 %v5754, %v4633
    %v5756 = vrot.slane %v5755, 4
    %v5757 = vadd.f32 %v5755, %v5756
    %v5758 = vrot.slane %v5757, 2
    %v5759 = vadd.f32 %v5757, %v5758
    %v5760 = vrot.slane %v5759, 1
    %v5761 = vadd.f32 %v5759, %v5760
    %v5762 = vadd.f32 %v4572, %v4574
    %v5763 = vadd.f32 %v5762, %v4576
    %v5764 = vadd.f32 %v5763, %v4578
    %v5765 = vadd.f32 %v5764, %v4580
    %v5766 = vadd.f32 %v5765, %v4582
    %v5767 = vadd.f32 %v5766, %v4584
    %v5768 = vadd.f32 %v5767, %v4586
    %v5769 = vadd.f32 %v5768, %v4588
    %v5770 = vadd.f32 %v5769, %v4590
    %v5771 = vadd.f32 %v5770, %v4592
    %v5772 = vadd.f32 %v5771, %v4594
    %v5773 = vadd.f32 %v5772, %v4596
    %v5774 = vadd.f32 %v5773, %v4598
    %v5775 = vadd.f32 %v5774, %v4600
    %v5776 = vadd.f32 %v5775, %v4602
    %v5777 = vadd.f32 %v5776, %v4604
    %v5778 = vadd.f32 %v5777, %v4606
    %v5779 = vadd.f32 %v5778, %v4608
    %v5780 = vadd.f32 %v5779, %v4610
    %v5781 = vadd.f32 %v5780, %v4612
    %v5782 = vadd.f32 %v5781, %v4614
    %v5783 = vadd.f32 %v5782, %v4616
    %v5784 = vadd.f32 %v5783, %v4618
    %v5785 = vadd.f32 %v5784, %v4620
    %v5786 = vadd.f32 %v5785, %v4622
    %v5787 = vadd.f32 %v5786, %v4624
    %v5788 = vadd.f32 %v5787, %v4626
    %v5789 = vadd.f32 %v5788, %v4628
    %v5790 = vadd.f32 %v5789, %v4630
    %v5791 = vadd.f32 %v5790, %v4632
    %v5792 = vadd.f32 %v5791, %v4634
    %v5793 = vrot.slane %v5792, 4
    %v5794 = vadd.f32 %v5792, %v5793
    %v5795 = vrot.slane %v5794, 2
    %v5796 = vadd.f32 %v5794, %v5795
    %v5797 = vrot.slane %v5796, 1
    %v5798 = vadd.f32 %v5796, %v5797
    %v5799 = vadd.f32 %v4635, %v4637
    %v5800 = vadd.f32 %v5799, %v4639
    %v5801 = vadd.f32 %v5800, %v4641
    %v5802 = vadd.f32 %v5801, %v4643
    %v5803 = vadd.f32 %v5802, %v4645
    %v5804 = vadd.f32 %v5803, %v4647
    %v5805 = vadd.f32 %v5804, %v4649
    %v5806 = vadd.f32 %v5805, %v4651
    %v5807 = vadd.f32 %v5806, %v4653
    %v5808 = vadd.f32 %v5807, %v4655
    %v5809 = vadd.f32 %v5808, %v4657
    %v5810 = vadd.f32 %v5809, %v4659
    %v5811 = vadd.f32 %v5810, %v4661
    %v5812 = vadd.f32 %v5811, %v4663
    %v5813 = vadd.f32 %v5812, %v4665
    %v5814 = vadd.f32 %v5813, %v4667
    %v5815 = vadd.f32 %v5814, %v4669
    %v5816 = vadd.f32 %v5815, %v4671
    %v5817 = vadd.f32 %v5816, %v4673
    %v5818 = vadd.f32 %v5817, %v4675
    %v5819 = vadd.f32 %v5818, %v4677
    %v5820 = vadd.f32 %v5819, %v4679
    %v5821 = vadd.f32 %v5820, %v4681
    %v5822 = vadd.f32 %v5821, %v4683
    %v5823 = vadd.f32 %v5822, %v4685
    %v5824 = vadd.f32 %v5823, %v4687
    %v5825 = vadd.f32 %v5824, %v4689
    %v5826 = vadd.f32 %v5825, %v4691
    %v5827 = vadd.f32 %v5826, %v4693
    %v5828 = vadd.f32 %v5827, %v4695
    %v5829 = vadd.f32 %v5828, %v4697
    %v5830 = vrot.slane %v5829, 4
    %v5831 = vadd.f32 %v5829, %v5830
    %v5832 = vrot.slane %v5831, 2
    %v5833 = vadd.f32 %v5831, %v5832
    %v5834 = vrot.slane %v5833, 1
    %v5835 = vadd.f32 %v5833, %v5834
    %v5836 = vadd.f32 %v4636, %v4638
    %v5837 = vadd.f32 %v5836, %v4640
    %v5838 = vadd.f32 %v5837, %v4642
    %v5839 = vadd.f32 %v5838, %v4644
    %v5840 = vadd.f32 %v5839, %v4646
    %v5841 = vadd.f32 %v5840, %v4648
    %v5842 = vadd.f32 %v5841, %v4650
    %v5843 = vadd.f32 %v5842, %v4652
    %v5844 = vadd.f32 %v5843, %v4654
    %v5845 = vadd.f32 %v5844, %v4656
    %v5846 = vadd.f32 %v5845, %v4658
    %v5847 = vadd.f32 %v5846, %v4660
    %v5848 = vadd.f32 %v5847, %v4662
    %v5849 = vadd.f32 %v5848, %v4664
    %v5850 = vadd.f32 %v5849, %v4666
    %v5851 = vadd.f32 %v5850, %v4668
    %v5852 = vadd.f32 %v5851, %v4670
    %v5853 = vadd.f32 %v5852, %v4672
    %v5854 = vadd.f32 %v5853, %v4674
    %v5855 = vadd.f32 %v5854, %v4676
    %v5856 = vadd.f32 %v5855, %v4678
    %v5857 = vadd.f32 %v5856, %v4680
    %v5858 = vadd.f32 %v5857, %v4682
    %v5859 = vadd.f32 %v5858, %v4684
    %v5860 = vadd.f32 %v5859, %v4686
    %v5861 = vadd.f32 %v5860, %v4688
    %v5862 = vadd.f32 %v5861, %v4690
    %v5863 = vadd.f32 %v5862, %v4692
    %v5864 = vadd.f32 %v5863, %v4694
    %v5865 = vadd.f32 %v5864, %v4696
    %v5866 = vadd.f32 %v5865, %v4698
    %v5867 = vrot.slane %v5866, 4
    %v5868 = vadd.f32 %v5866, %v5867
    %v5869 = vrot.slane %v5868, 2
    %v5870 = vadd.f32 %v5868, %v5869
    %v5871 = vrot.slane %v5870, 1
    %v5872 = vadd.f32 %v5870, %v5871
    %v5873 = vadd.f32 %v4699, %v4701
    %v5874 = vadd.f32 %v5873, %v4703
    %v5875 = vadd.f32 %v5874, %v4705
    %v5876 = vadd.f32 %v5875, %v4707
    %v5877 = vadd.f32 %v5876, %v4709
    %v5878 = vadd.f32 %v5877, %v4711
    %v5879 = vadd.f32 %v5878, %v4713
    %v5880 = vadd.f32 %v5879, %v4715
    %v5881 = vadd.f32 %v5880, %v4717
    %v5882 = vadd.f32 %v5881, %v4719
    %v5883 = vadd.f32 %v5882, %v4721
    %v5884 = vadd.f32 %v5883, %v4723
    %v5885 = vadd.f32 %v5884, %v4725
    %v5886 = vadd.f32 %v5885, %v4727
    %v5887 = vadd.f32 %v5886, %v4729
    %v5888 = vadd.f32 %v5887, %v4731
    %v5889 = vadd.f32 %v5888, %v4733
    %v5890 = vadd.f32 %v5889, %v4735
    %v5891 = vadd.f32 %v5890, %v4737
    %v5892 = vadd.f32 %v5891, %v4739
    %v5893 = vadd.f32 %v5892, %v4741
    %v5894 = vadd.f32 %v5893, %v4743
    %v5895 = vadd.f32 %v5894, %v4745
    %v5896 = vadd.f32 %v5895, %v4747
    %v5897 = vadd.f32 %v5896, %v4749
    %v5898 = vadd.f32 %v5897, %v4751
    %v5899 = vadd.f32 %v5898, %v4753
    %v5900 = vadd.f32 %v5899, %v4755
    %v5901 = vadd.f32 %v5900, %v4757
    %v5902 = vadd.f32 %v5901, %v4759
    %v5903 = vadd.f32 %v5902, %v4761
    %v5904 = vrot.slane %v5903, 4
    %v5905 = vadd.f32 %v5903, %v5904
    %v5906 = vrot.slane %v5905, 2
    %v5907 = vadd.f32 %v5905, %v5906
    %v5908 = vrot.slane %v5907, 1
    %v5909 = vadd.f32 %v5907, %v5908
    %v5910 = vadd.f32 %v4700, %v4702
    %v5911 = vadd.f32 %v5910, %v4704
    %v5912 = vadd.f32 %v5911, %v4706
    %v5913 = vadd.f32 %v5912, %v4708
    %v5914 = vadd.f32 %v5913, %v4710
    %v5915 = vadd.f32 %v5914, %v4712
    %v5916 = vadd.f32 %v5915, %v4714
    %v5917 = vadd.f32 %v5916, %v4716
    %v5918 = vadd.f32 %v5917, %v4718
    %v5919 = vadd.f32 %v5918, %v4720
    %v5920 = vadd.f32 %v5919, %v4722
    %v5921 = vadd.f32 %v5920, %v4724
    %v5922 = vadd.f32 %v5921, %v4726
    %v5923 = vadd.f32 %v5922, %v4728
    %v5924 = vadd.f32 %v5923, %v4730
    %v5925 = vadd.f32 %v5924, %v4732
    %v5926 = vadd.f32 %v5925, %v4734
    %v5927 = vadd.f32 %v5926, %v4736
    %v5928 = vadd.f32 %v5927, %v4738
    %v5929 = vadd.f32 %v5928, %v4740
    %v5930 = vadd.f32 %v5929, %v4742
    %v5931 = vadd.f32 %v5930, %v4744
    %v5932 = vadd.f32 %v5931, %v4746
    %v5933 = vadd.f32 %v5932, %v4748
    %v5934 = vadd.f32 %v5933, %v4750
    %v5935 = vadd.f32 %v5934, %v4752
    %v5936 = vadd.f32 %v5935, %v4754
    %v5937 = vadd.f32 %v5936, %v4756
    %v5938 = vadd.f32 %v5937, %v4758
    %v5939 = vadd.f32 %v5938, %v4760
    %v5940 = vadd.f32 %v5939, %v4762
    %v5941 = vrot.slane %v5940, 4
    %v5942 = vadd.f32 %v5940, %v5941
    %v5943 = vrot.slane %v5942, 2
    %v5944 = vadd.f32 %v5942, %v5943
    %v5945 = vrot.slane %v5944, 1
    %v5946 = vadd.f32 %v5944, %v5945
    %vm5979 = vcmask 1041409
    %v5980 = vsel %vm5979, %v4873, %v4799
    %vm5981 = vcmask 1042434
    %v5982 = vsel %vm5981, %v4947, %v5980
    %vm5983 = vcmask 1043459
    %v5984 = vsel %vm5983, %v5021, %v5982
    %vm5985 = vcmask 1044484
    %v5986 = vsel %vm5985, %v5095, %v5984
    %vm5987 = vcmask 1045509
    %v5988 = vsel %vm5987, %v5169, %v5986
    %vm5989 = vcmask 1046534
    %v5990 = vsel %vm5989, %v5243, %v5988
    %vm5991 = vcmask 1047559
    %v5992 = vsel %vm5991, %v5317, %v5990
    %v5993 = vsel %vm5979, %v4910, %v4836
    %v5994 = vsel %vm5981, %v4984, %v5993
    %v5995 = vsel %vm5983, %v5058, %v5994
    %v5996 = vsel %vm5985, %v5132, %v5995
    %v5997 = vsel %vm5987, %v5206, %v5996
    %v5998 = vsel %vm5989, %v5280, %v5997
    %v5999 = vsel %vm5991, %v5354, %v5998
    %v6000 = vsel %vm5979, %v5465, %v5391
    %v6001 = vsel %vm5981, %v5539, %v6000
    %v6002 = vsel %vm5983, %v5613, %v6001
    %v6003 = vsel %vm5985, %v5687, %v6002
    %v6004 = vsel %vm5987, %v5761, %v6003
    %v6005 = vsel %vm5989, %v5835, %v6004
    %v6006 = vsel %vm5991, %v5909, %v6005
    %v6007 = vsel %vm5979, %v5502, %v5428
    %v6008 = vsel %vm5981, %v5576, %v6007
    %v6009 = vsel %vm5983, %v5650, %v6008
    %v6010 = vsel %vm5985, %v5724, %v6009
    %v6011 = vsel %vm5987, %v5798, %v6010
    %v6012 = vsel %vm5989, %v5872, %v6011
    %v6013 = vsel %vm5991, %v5946, %v6012
    %v6018 = vadd.f32 %v1591, %v5992
    %v6019 = vadd.f32 %v1592, %v5999
    %v6020 = vadd.f32 %v1593, %v6006
    %v6021 = vadd.f32 %v1594, %v6013
    %6022 = vst [vmem:[#allocation2] sm:$0xff] %v6018
    %6023 = vst [vmem:[#allocation2 + $0x8] sm:$0xff] %v6019
    %6024 = vst [vmem:[#allocation2 + $0x10] sm:$0xff] %v6020
    %6025 = vst [vmem:[#allocation2 + $0x18] sm:$0xff] %v6021
    %v6026 = vld [vmem:[#allocation3] sm:$0xff]
    %v6027 = vld [vmem:[#allocation3 + $0x8] sm:$0xff]
    %v6028 = vadd.f32 %v1587, %v1588
    %6029 = vadd.xlane.f32.xlu0 %v6028
    %v6030 = vpop.xlane.xlu0 %6029
    %v6031 = vadd.f32 %v1589, %v1590
    %6032 = vadd.xlane.f32.xlu0 %v6031
    %v6033 = vpop.xlane.xlu0 %6032
    %v6034 = vadd.f32 %v6026, %v6030
    %v6035 = vadd.f32 %v6027, %v6033
    %vm6036 = vcmask 7168
    %6037 = vst.msk [vmem:[#allocation3] sm:$0xff] %vm6036, %v6034
    %6038 = vst.msk [vmem:[#allocation3 + $0x8] sm:$0xff] %vm6036, %v6035
    // Predicated region
    $region22: #{tpu_custom_call.1} parent=1 // pred_check
      %p6039 = pneg %p40
    $region23: #{tpu_custom_call.1} parent=1 // pred_check_branch
      %6041 = sbr.rel (%p6039) target = $region25
    $region24: #{tpu_custom_call.1} parent=1 // pred_region
      %v6042 = vld [vmem:[#allocation3] sm:$0xff]
      %v6043 = vld [vmem:[#allocation3 + $0x8] sm:$0xff]
      %v6044 = vmax.f32 %v6042, 1e-09
      %v6045 = vmax.f32 %v6043, 1e-09
      %v6046 = vrcp.pop %v6044
      %v6047 = vrcp.pop %v6045
      %v6048 = vld [vmem:[#allocation2] sm:$0xff]
      %v6049 = vld [vmem:[#allocation2 + $0x8] sm:$0xff]
      %v6050 = vld [vmem:[#allocation2 + $0x10] sm:$0xff]
      %v6051 = vld [vmem:[#allocation2 + $0x18] sm:$0xff]
      %6053 = vset.pattern.permute.xlu0 0
      %6054 = vperm.xlu0 %6053, %v6046
      %v6055 = vpop.permute.xlu0 %6054
      %6058 = vset.pattern.permute.xlu0 0
      %6059 = vperm.xlu0 %6058, %v6047
      %v6060 = vpop.permute.xlu0 %6059
      %v6062 = vmul.f32 %v6048, %v6055
      %v6063 = vmul.f32 %v6049, %v6055
      %v6064 = vmul.f32 %v6050, %v6060
      %v6065 = vmul.f32 %v6051, %v6060
      %v6066 = vmul.f32 %v6062, %v6062
      %v6067 = vmul.f32 %v6063, %v6063
      %v6068 = vmul.f32 %v6064, %v6064
      %v6069 = vmul.f32 %v6065, %v6065
      %v6070 = vadd.f32 %v6066, %v6067
      %6071 = vadd.xlane.f32.xlu0 %v6070
      %v6072 = vpop.xlane.xlu0 %6071
      %v6073 = vadd.f32 %v6068, %v6069
      %6074 = vadd.xlane.f32.xlu0 %v6073
      %v6075 = vpop.xlane.xlu0 %6074
      %v6076 = vmax.f32 %v6072, 1e-24
      %v6077 = vmax.f32 %v6075, 1e-24
      %v6078 = vrsqrt.pop %v6076
      %v6079 = vrsqrt.pop %v6077
      %v6080 = vmul.f32 %v6062, %v6078
      %v6081 = vmul.f32 %v6063, %v6078
      %v6082 = vmul.f32 %v6064, %v6079
      %v6083 = vmul.f32 %v6065, %v6079
      %v6084 = vpack.c.bf16 %v6082, %v6080
      %v6085 = vpack.c.bf16 %v6083, %v6081
      %v6088 = vunpack.c.l.b16 %v6084
      %v6089 = vunpack.c.l.b16 %v6085
      %v6090 = vunpack.c.h.b16 %v6084
      %v6091 = vunpack.c.h.b16 %v6085
      %v6092 = vpack.c.b16 %v6089, %v6088
      %v6093 = vpack.c.b16 %v6091, %v6090
      %6096 = vst [vmem:[#allocation9] sm:$0xff] %v6092
      %6097 = vst [vmem:[#allocation9 + $0x8] sm:$0xff] %v6093
    $region25: #{tpu_custom_call.1} parent=1 // pred_fallthru
      _
    // Predicated region
    $region26: #{tpu_custom_call.1} parent=1 // pred_check
      _
    $region27: #{tpu_custom_call.1} parent=1 // pred_check_branch
      %6099 = sbr.rel (0) target = $region29
    $region28: #{tpu_custom_call.1} parent=1 // pred_region
      %s6101 = ssub.s32 256, 256
      %6102 = vsyncadd [#allocation6], %s6101
      %s6103 = sshll.u32 [#allocation9], 4
      %s6104 = int_to_ptr.vmem [resolvable:$true] %s6103
      %6109 = dma.vmem_to_hbm [thread:$0]  %s6104, 256, %s2, [#allocation6], 128, 128, 8
    $region29: #{tpu_custom_call.1} parent=1 // pred_fallthru
      _
    // Predicated region
    $region30: #{tpu_custom_call.1} parent=1 // pred_check
      _
    $region31: #{tpu_custom_call.1} parent=1 // pred_check_branch
      %6111 = sbr.rel (0) target = $region33
    $region32: #{tpu_custom_call.1} parent=1 // pred_region
      %6112 = dma.done [#allocation6], 256
    $region33: #{tpu_custom_call.1} parent=1 // pred_fallthru
      _
    %6113 = vsyncpa [#allocation5], 1
    %6114 = vsyncpa [#allocation8], 1
    %6115 = vsyncpa [#allocation6], 1

</llo_original>
